<compile_context>
chip_gen: v7x
topology: tpu7x:2x2x1
jax: 0.10.0
libtpu: 0.0.40
codegen_flags: <defaults>
</compile_context>

<pallas_src>
import jax
import jax.numpy as jnp
from jax import lax
from jax.experimental import pallas as pl
from jax.experimental.pallas import tpu as pltpu

# ---- model hyperparameters (small, consistent with the module's __init__) ----
N_DIM = 16          # physical output dimension  (abundances)
P_DIM = 4           # physical input dimension
Z_DIM = 8           # latent dimension
HIDDEN = 32         # hidden width of encoder/decoder (nb_hidden = 1)
T_STEPS = 8         # number of time evaluation points (len(tstep))
N_SUB = 4           # fixed RK4 substeps per t_eval interval
IN_DIM = N_DIM + P_DIM
FEAT_DIM = Z_DIM + Z_DIM * Z_DIM   # [z, outer(z,z) flattened]


def _mace_kernel(x0_ref, tstep_ref,
                 we1_ref, be1_ref, we2_ref, be2_ref,
                 wg_ref, c_ref,
                 wd1_ref, bd1_ref, wd2_ref, bd2_ref,
                 z_out_ref, n_out_ref):
    f32 = jnp.float32

    # ---- hoist all parameter loads once (no re-loads inside the 112 g() calls)
    we1 = we1_ref[...]; be1 = be1_ref[...]
    we2 = we2_ref[...]; be2 = be2_ref[...]
    wg = wg_ref[...]                       # (Z + Z*Z, Z)  = [A^T ; B.reshape(Z*Z, Z)]
    c = c_ref[...]                         # (1, Z)
    wd1 = wd1_ref[...]; bd1 = bd1_ref[...]
    wd2 = wd2_ref[...]; bd2 = bd2_ref[...]

    def g(z):
        # dz/dt = A z + z^T B z + C  for a (1, Z) latent row-vector z.
        # feat[0, :Z] = z ; feat[0, Z + j*Z + k] = z_j * z_k   (pure lane ops)
        feat = jnp.concatenate(
            [z] + [z[:, j:j + 1] * z for j in range(Z_DIM)], axis=-1)
        return jnp.dot(feat, wg, preferred_element_type=f32) + c

    # ---------------- Encoder: tanh MLP (IN_DIM -> HIDDEN -> Z_DIM) ----------
    x0 = x0_ref[...]
    h = jnp.tanh(jnp.dot(x0, we1, preferred_element_type=f32) + be1)
    z0 = jnp.tanh(jnp.dot(h, we2, preferred_element_type=f32) + be2)

    # z(t_eval[0]) is the initial condition; rows 1..T-1 get overwritten below.
    row_ids = lax.broadcasted_iota(jnp.int32, (T_STEPS, Z_DIM), 0)
    zs0 = jnp.broadcast_to(z0, (T_STEPS, Z_DIM))

    # ---------------- Latent ODE: fixed-step RK4 between t_eval points -------
    def outer(i, carry):
        z, zs = carry
        t0 = tstep_ref[i - 1]
        t1 = tstep_ref[i]
        dt = (t1 - t0) / N_SUB
        half_dt = 0.5 * dt
        sixth_dt = dt / 6.0

        # statically unrolled RK4 substeps (N_SUB fixed, short trip count)
        for _ in range(N_SUB):
            k1 = g(z)
            k2 = g(z + half_dt * k1)
            k3 = g(z + half_dt * k2)
            k4 = g(z + dt * k3)
            z = z + sixth_dt * (k1 + 2.0 * (k2 + k3) + k4)

        # keep z_s in registers: masked row update instead of a VMEM store
        zs = jnp.where(row_ids == i, jnp.broadcast_to(z, (T_STEPS, Z_DIM)), zs)
        return (z, zs)

    _, zs = lax.fori_loop(1, T_STEPS, outer, (z0, zs0))

    # single lane-dense store of the latent trajectory
    z_out_ref[...] = zs

    # ---------------- Decoder: MLP (Z_DIM -> HIDDEN -> N_DIM) on all T rows --
    hd = jnp.tanh(jnp.dot(zs, wd1, preferred_element_type=f32) + bd1)
    n_out_ref[...] = jnp.dot(hd, wd2, preferred_element_type=f32) + bd2


def mace_forward(n_0, p, tstep, params):
    """Pallas-backed forward pass; returns (n_s, z_s, status) like Solver.forward."""
    # glue: concatenation x_0 = cat(p, n_0) along the feature axis (g_nn=False)
    x0 = jnp.concatenate([p, n_0], axis=-1).astype(jnp.float32)

    # fuse A^T and B into a single ODE weight:  feat @ wg  ==  z A^T + outer(z) B_flat
    # (b.reshape(Z*Z, Z) preserves the [j, k, i] index order: row = j*Z + k, col = i)
    wg = jnp.concatenate(
        [params["a_t"], params["b"].reshape(Z_DIM * Z_DIM, Z_DIM)], axis=0)

    vmem = pl.BlockSpec(memory_space=pltpu.MemorySpace.VMEM)
    smem = pl.BlockSpec(memory_space=pltpu.MemorySpace.SMEM)

    # rough advisory cost: ~112 fused g() evaluations + encoder/decoder MLPs
    cost = pl.CostEstimate(flops=170_000, transcendentals=300,
                           bytes_accessed=11_000)

    z_s, n_s_ravel = pl.pallas_call(
        _mace_kernel,
        out_shape=(jax.ShapeDtypeStruct((T_STEPS, Z_DIM), jnp.float32),
                   jax.ShapeDtypeStruct((T_STEPS, N_DIM), jnp.float32)),
        in_specs=[vmem, smem] + [vmem] * 10,
        out_specs=(vmem, vmem),
        cost_estimate=cost,
    )(x0, tstep.astype(jnp.float32),
      params["we1"], params["be1"], params["we2"], params["be2"],
      wg, params["c"],
      params["wd1"], params["bd1"], params["wd2"], params["bd2"])

    n_s = n_s_ravel.reshape(1, tstep.shape[-1], N_DIM)
    status = jnp.zeros((1,), jnp.int32)   # fixed-step integrator: always "success"
    return n_s, z_s, status


def init_params(key):
    """Deterministic synthetic parameters (shapes implied by the module)."""
    ks = jax.random.split(key, 13)

    def lin(k, fan_in, fan_out):
        return (jax.random.normal(k, (fan_in, fan_out), jnp.float32)
                / jnp.sqrt(jnp.float32(fan_in)))

    return dict(
        # encoder
        we1=lin(ks[0], IN_DIM, HIDDEN),
        be1=0.01 * jax.random.normal(ks[1], (1, HIDDEN), jnp.float32),
        we2=lin(ks[2], HIDDEN, Z_DIM),
        be2=0.01 * jax.random.normal(ks[3], (1, Z_DIM), jnp.float32),
        # latent ODE G:  A^T, B (indexed [j, k, i]), C  — small scale for stability
        a_t=0.05 * jax.random.normal(ks[4], (Z_DIM, Z_DIM), jnp.float32),
        b=0.05 * jax.random.normal(ks[5], (Z_DIM, Z_DIM, Z_DIM), jnp.float32),
        c=0.05 * jax.random.normal(ks[6], (1, Z_DIM), jnp.float32),
        # decoder
        wd1=lin(ks[7], Z_DIM, HIDDEN),
        bd1=0.01 * jax.random.normal(ks[8], (1, HIDDEN), jnp.float32),
        wd2=lin(ks[9], HIDDEN, N_DIM),
        bd2=0.01 * jax.random.normal(ks[10], (1, N_DIM), jnp.float32),
    )


if __name__ == "__main__":
    key = jax.random.PRNGKey(0)
    k_par, k_n, k_p = jax.random.split(key, 3)

    params = init_params(k_par)
    n_0 = jax.random.uniform(k_n, (1, N_DIM), jnp.float32)          # abundances
    p = jax.random.uniform(k_p, (1, P_DIM), jnp.float32)            # physical params
    tstep = jnp.linspace(0.0, 1.0, T_STEPS, dtype=jnp.float32)      # t_eval points

    n_s, z_s, status = mace_forward(n_0, p, tstep, params)
    jax.block_until_ready((n_s, z_s, status))

    assert n_s.shape == (1, T_STEPS, N_DIM)
    assert z_s.shape == (T_STEPS, Z_DIM)
    assert status.shape == (1,)
    print("KERNEL_OK")
</pallas_src>

<mosaic_0001>
module attributes {stable_mosaic.version = 11 : i64} {
  func.func @_mace_kernel(%arg0: memref<1x20xf32, #tpu.memory_space<vmem>>, %arg1: memref<8xf32, #tpu.memory_space<smem>>, %arg2: memref<20x32xf32, #tpu.memory_space<vmem>>, %arg3: memref<1x32xf32, #tpu.memory_space<vmem>>, %arg4: memref<32x8xf32, #tpu.memory_space<vmem>>, %arg5: memref<1x8xf32, #tpu.memory_space<vmem>>, %arg6: memref<72x8xf32, #tpu.memory_space<vmem>>, %arg7: memref<1x8xf32, #tpu.memory_space<vmem>>, %arg8: memref<8x32xf32, #tpu.memory_space<vmem>>, %arg9: memref<1x32xf32, #tpu.memory_space<vmem>>, %arg10: memref<32x16xf32, #tpu.memory_space<vmem>>, %arg11: memref<1x16xf32, #tpu.memory_space<vmem>>, %arg12: memref<8x8xf32, #tpu.memory_space<vmem>>, %arg13: memref<8x16xf32, #tpu.memory_space<vmem>>) attributes {dimension_semantics = [], scalar_prefetch = 0 : i64, scratch_operands = 0 : i64, tpu.core_type = #tpu.core_type<tc>} {
    %c0 = arith.constant 0 : index
    %c0_0 = arith.constant 0 : index
    %0 = vector.load %arg2[%c0, %c0_0] : memref<20x32xf32, #tpu.memory_space<vmem>>, vector<20x32xf32>
    %c0_1 = arith.constant 0 : index
    %c0_2 = arith.constant 0 : index
    %1 = vector.load %arg3[%c0_1, %c0_2] : memref<1x32xf32, #tpu.memory_space<vmem>>, vector<1x32xf32>
    %c0_3 = arith.constant 0 : index
    %c0_4 = arith.constant 0 : index
    %2 = vector.load %arg4[%c0_3, %c0_4] : memref<32x8xf32, #tpu.memory_space<vmem>>, vector<32x8xf32>
    %c0_5 = arith.constant 0 : index
    %c0_6 = arith.constant 0 : index
    %3 = vector.load %arg5[%c0_5, %c0_6] : memref<1x8xf32, #tpu.memory_space<vmem>>, vector<1x8xf32>
    %c0_7 = arith.constant 0 : index
    %c0_8 = arith.constant 0 : index
    %4 = vector.load %arg6[%c0_7, %c0_8] : memref<72x8xf32, #tpu.memory_space<vmem>>, vector<72x8xf32>
    %c0_9 = arith.constant 0 : index
    %c0_10 = arith.constant 0 : index
    %5 = vector.load %arg7[%c0_9, %c0_10] : memref<1x8xf32, #tpu.memory_space<vmem>>, vector<1x8xf32>
    %c0_11 = arith.constant 0 : index
    %c0_12 = arith.constant 0 : index
    %6 = vector.load %arg8[%c0_11, %c0_12] : memref<8x32xf32, #tpu.memory_space<vmem>>, vector<8x32xf32>
    %c0_13 = arith.constant 0 : index
    %c0_14 = arith.constant 0 : index
    %7 = vector.load %arg9[%c0_13, %c0_14] : memref<1x32xf32, #tpu.memory_space<vmem>>, vector<1x32xf32>
    %c0_15 = arith.constant 0 : index
    %c0_16 = arith.constant 0 : index
    %8 = vector.load %arg10[%c0_15, %c0_16] : memref<32x16xf32, #tpu.memory_space<vmem>>, vector<32x16xf32>
    %c0_17 = arith.constant 0 : index
    %c0_18 = arith.constant 0 : index
    %9 = vector.load %arg11[%c0_17, %c0_18] : memref<1x16xf32, #tpu.memory_space<vmem>>, vector<1x16xf32>
    %c0_19 = arith.constant 0 : index
    %c0_20 = arith.constant 0 : index
    %10 = vector.load %arg0[%c0_19, %c0_20] : memref<1x20xf32, #tpu.memory_space<vmem>>, vector<1x20xf32>
    %cst = arith.constant dense<0.000000e+00> : vector<1x32xf32>
    %11 = tpu.matmul %10, %0, %cst {dimension_numbers = #tpu.dot_dimension_numbers<[1], [0], [0], [1], [0, 0, 1, 1], [], []>} : vector<1x20xf32>, vector<20x32xf32>, vector<1x32xf32> -> vector<1x32xf32>
    %12 = arith.addf %11, %1 : vector<1x32xf32>
    %13 = math.tanh %12 : vector<1x32xf32>
    %cst_21 = arith.constant dense<0.000000e+00> : vector<1x8xf32>
    %14 = tpu.matmul %13, %2, %cst_21 {dimension_numbers = #tpu.dot_dimension_numbers<[1], [0], [0], [1], [0, 0, 1, 1], [], []>} : vector<1x32xf32>, vector<32x8xf32>, vector<1x8xf32> -> vector<1x8xf32>
    %15 = arith.addf %14, %3 : vector<1x8xf32>
    %16 = math.tanh %15 : vector<1x8xf32>
    %17 = tpu.iota {dimensions = array<i32: 0>} : vector<8x8xi32>
    %18 = vector.shape_cast %16 : vector<1x8xf32> to vector<1x8xf32>
    %19 = vector.broadcast %18 : vector<1x8xf32> to vector<8x8xf32>
    %c1_i32 = arith.constant 1 : i32
    %c7_i32 = arith.constant 7 : i32
    %20 = arith.addi %c1_i32, %c7_i32 : i32
    %c1_i32_22 = arith.constant 1 : i32
    %21:2 = scf.for %arg14 = %c1_i32 to %20 step %c1_i32_22 iter_args(%arg15 = %16, %arg16 = %19) -> (vector<1x8xf32>, vector<8x8xf32>)  : i32 {
      %c1_i32_30 = arith.constant 1 : i32
      %31 = arith.subi %arg14, %c1_i32_30 : i32
      %32 = arith.index_cast %31 : i32 to index
      %33 = memref.load %arg1[%32] : memref<8xf32, #tpu.memory_space<smem>>
      %34 = arith.index_cast %arg14 : i32 to index
      %35 = memref.load %arg1[%34] : memref<8xf32, #tpu.memory_space<smem>>
      %36 = arith.subf %35, %33 : f32
      %cst_31 = arith.constant 4.000000e+00 : f32
      %37 = arith.divf %36, %cst_31 : f32
      %cst_32 = arith.constant 5.000000e-01 : f32
      %38 = arith.mulf %cst_32, %37 : f32
      %cst_33 = arith.constant 6.000000e+00 : f32
      %39 = arith.divf %37, %cst_33 : f32
      %40 = vector.extract_strided_slice %arg15 {offsets = [0, 0], sizes = [1, 1], strides = [1, 1]} : vector<1x8xf32> to vector<1x1xf32>
      %41 = vector.broadcast %40 : vector<1x1xf32> to vector<1x8xf32>
      %42 = arith.mulf %41, %arg15 : vector<1x8xf32>
      %43 = vector.extract_strided_slice %arg15 {offsets = [0, 1], sizes = [1, 1], strides = [1, 1]} : vector<1x8xf32> to vector<1x1xf32>
      %44 = vector.broadcast %43 : vector<1x1xf32> to vector<1x8xf32>
      %45 = arith.mulf %44, %arg15 : vector<1x8xf32>
      %46 = vector.extract_strided_slice %arg15 {offsets = [0, 2], sizes = [1, 1], strides = [1, 1]} : vector<1x8xf32> to vector<1x1xf32>
      %47 = vector.broadcast %46 : vector<1x1xf32> to vector<1x8xf32>
      %48 = arith.mulf %47, %arg15 : vector<1x8xf32>
      %49 = vector.extract_strided_slice %arg15 {offsets = [0, 3], sizes = [1, 1], strides = [1, 1]} : vector<1x8xf32> to vector<1x1xf32>
      %50 = vector.broadcast %49 : vector<1x1xf32> to vector<1x8xf32>
      %51 = arith.mulf %50, %arg15 : vector<1x8xf32>
      %52 = vector.extract_strided_slice %arg15 {offsets = [0, 4], sizes = [1, 1], strides = [1, 1]} : vector<1x8xf32> to vector<1x1xf32>
      %53 = vector.broadcast %52 : vector<1x1xf32> to vector<1x8xf32>
      %54 = arith.mulf %53, %arg15 : vector<1x8xf32>
      %55 = vector.extract_strided_slice %arg15 {offsets = [0, 5], sizes = [1, 1], strides = [1, 1]} : vector<1x8xf32> to vector<1x1xf32>
      %56 = vector.broadcast %55 : vector<1x1xf32> to vector<1x8xf32>
      %57 = arith.mulf %56, %arg15 : vector<1x8xf32>
      %58 = vector.extract_strided_slice %arg15 {offsets = [0, 6], sizes = [1, 1], strides = [1, 1]} : vector<1x8xf32> to vector<1x1xf32>
      %59 = vector.broadcast %58 : vector<1x1xf32> to vector<1x8xf32>
      %60 = arith.mulf %59, %arg15 : vector<1x8xf32>
      %61 = vector.extract_strided_slice %arg15 {offsets = [0, 7], sizes = [1, 1], strides = [1, 1]} : vector<1x8xf32> to vector<1x1xf32>
      %62 = vector.broadcast %61 : vector<1x1xf32> to vector<1x8xf32>
      %63 = arith.mulf %62, %arg15 : vector<1x8xf32>
      %64 = tpu.concatenate %arg15, %42, %45, %48, %51, %54, %57, %60, %63 in 1 : vector<1x8xf32>, vector<1x8xf32>, vector<1x8xf32>, vector<1x8xf32>, vector<1x8xf32>, vector<1x8xf32>, vector<1x8xf32>, vector<1x8xf32>, vector<1x8xf32> -> vector<1x72xf32>
      %cst_34 = arith.constant dense<0.000000e+00> : vector<1x8xf32>
      %65 = tpu.matmul %64, %4, %cst_34 {dimension_numbers = #tpu.dot_dimension_numbers<[1], [0], [0], [1], [0, 0, 1, 1], [], []>} : vector<1x72xf32>, vector<72x8xf32>, vector<1x8xf32> -> vector<1x8xf32>
      %66 = arith.addf %65, %5 : vector<1x8xf32>
      %67 = vector.broadcast %38 : f32 to vector<1x8xf32>
      %68 = arith.mulf %67, %66 : vector<1x8xf32>
      %69 = arith.addf %arg15, %68 : vector<1x8xf32>
      %70 = vector.extract_strided_slice %69 {offsets = [0, 0], sizes = [1, 1], strides = [1, 1]} : vector<1x8xf32> to vector<1x1xf32>
      %71 = vector.broadcast %70 : vector<1x1xf32> to vector<1x8xf32>
      %72 = arith.mulf %71, %69 : vector<1x8xf32>
      %73 = vector.extract_strided_slice %69 {offsets = [0, 1], sizes = [1, 1], strides = [1, 1]} : vector<1x8xf32> to vector<1x1xf32>
      %74 = vector.broadcast %73 : vector<1x1xf32> to vector<1x8xf32>
      %75 = arith.mulf %74, %69 : vector<1x8xf32>
      %76 = vector.extract_strided_slice %69 {offsets = [0, 2], sizes = [1, 1], strides = [1, 1]} : vector<1x8xf32> to vector<1x1xf32>
      %77 = vector.broadcast %76 : vector<1x1xf32> to vector<1x8xf32>
      %78 = arith.mulf %77, %69 : vector<1x8xf32>
      %79 = vector.extract_strided_slice %69 {offsets = [0, 3], sizes = [1, 1], strides = [1, 1]} : vector<1x8xf32> to vector<1x1xf32>
      %80 = vector.broadcast %79 : vector<1x1xf32> to vector<1x8xf32>
      %81 = arith.mulf %80, %69 : vector<1x8xf32>
      %82 = vector.extract_strided_slice %69 {offsets = [0, 4], sizes = [1, 1], strides = [1, 1]} : vector<1x8xf32> to vector<1x1xf32>
      %83 = vector.broadcast %82 : vector<1x1xf32> to vector<1x8xf32>
      %84 = arith.mulf %83, %69 : vector<1x8xf32>
      %85 = vector.extract_strided_slice %69 {offsets = [0, 5], sizes = [1, 1], strides = [1, 1]} : vector<1x8xf32> to vector<1x1xf32>
      %86 = vector.broadcast %85 : vector<1x1xf32> to vector<1x8xf32>
      %87 = arith.mulf %86, %69 : vector<1x8xf32>
      %88 = vector.extract_strided_slice %69 {offsets = [0, 6], sizes = [1, 1], strides = [1, 1]} : vector<1x8xf32> to vector<1x1xf32>
      %89 = vector.broadcast %88 : vector<1x1xf32> to vector<1x8xf32>
      %90 = arith.mulf %89, %69 : vector<1x8xf32>
      %91 = vector.extract_strided_slice %69 {offsets = [0, 7], sizes = [1, 1], strides = [1, 1]} : vector<1x8xf32> to vector<1x1xf32>
      %92 = vector.broadcast %91 : vector<1x1xf32> to vector<1x8xf32>
      %93 = arith.mulf %92, %69 : vector<1x8xf32>
      %94 = tpu.concatenate %69, %72, %75, %78, %81, %84, %87, %90, %93 in 1 : vector<1x8xf32>, vector<1x8xf32>, vector<1x8xf32>, vector<1x8xf32>, vector<1x8xf32>, vector<1x8xf32>, vector<1x8xf32>, vector<1x8xf32>, vector<1x8xf32> -> vector<1x72xf32>
      %cst_35 = arith.constant dense<0.000000e+00> : vector<1x8xf32>
      %95 = tpu.matmul %94, %4, %cst_35 {dimension_numbers = #tpu.dot_dimension_numbers<[1], [0], [0], [1], [0, 0, 1, 1], [], []>} : vector<1x72xf32>, vector<72x8xf32>, vector<1x8xf32> -> vector<1x8xf32>
      %96 = arith.addf %95, %5 : vector<1x8xf32>
      %97 = vector.broadcast %38 : f32 to vector<1x8xf32>
      %98 = arith.mulf %97, %96 : vector<1x8xf32>
      %99 = arith.addf %arg15, %98 : vector<1x8xf32>
      %100 = vector.extract_strided_slice %99 {offsets = [0, 0], sizes = [1, 1], strides = [1, 1]} : vector<1x8xf32> to vector<1x1xf32>
      %101 = vector.broadcast %100 : vector<1x1xf32> to vector<1x8xf32>
      %102 = arith.mulf %101, %99 : vector<1x8xf32>
      %103 = vector.extract_strided_slice %99 {offsets = [0, 1], sizes = [1, 1], strides = [1, 1]} : vector<1x8xf32> to vector<1x1xf32>
      %104 = vector.broadcast %103 : vector<1x1xf32> to vector<1x8xf32>
      %105 = arith.mulf %104, %99 : vector<1x8xf32>
      %106 = vector.extract_strided_slice %99 {offsets = [0, 2], sizes = [1, 1], strides = [1, 1]} : vector<1x8xf32> to vector<1x1xf32>
      %107 = vector.broadcast %106 : vector<1x1xf32> to vector<1x8xf32>
      %108 = arith.mulf %107, %99 : vector<1x8xf32>
      %109 = vector.extract_strided_slice %99 {offsets = [0, 3], sizes = [1, 1], strides = [1, 1]} : vector<1x8xf32> to vector<1x1xf32>
      %110 = vector.broadcast %109 : vector<1x1xf32> to vector<1x8xf32>
      %111 = arith.mulf %110, %99 : vector<1x8xf32>
      %112 = vector.extract_strided_slice %99 {offsets = [0, 4], sizes = [1, 1], strides = [1, 1]} : vector<1x8xf32> to vector<1x1xf32>
      %113 = vector.broadcast %112 : vector<1x1xf32> to vector<1x8xf32>
      %114 = arith.mulf %113, %99 : vector<1x8xf32>
      %115 = vector.extract_strided_slice %99 {offsets = [0, 5], sizes = [1, 1], strides = [1, 1]} : vector<1x8xf32> to vector<1x1xf32>
      %116 = vector.broadcast %115 : vector<1x1xf32> to vector<1x8xf32>
      %117 = arith.mulf %116, %99 : vector<1x8xf32>
      %118 = vector.extract_strided_slice %99 {offsets = [0, 6], sizes = [1, 1], strides = [1, 1]} : vector<1x8xf32> to vector<1x1xf32>
      %119 = vector.broadcast %118 : vector<1x1xf32> to vector<1x8xf32>
      %120 = arith.mulf %119, %99 : vector<1x8xf32>
      %121 = vector.extract_strided_slice %99 {offsets = [0, 7], sizes = [1, 1], strides = [1, 1]} : vector<1x8xf32> to vector<1x1xf32>
      %122 = vector.broadcast %121 : vector<1x1xf32> to vector<1x8xf32>
      %123 = arith.mulf %122, %99 : vector<1x8xf32>
      %124 = tpu.concatenate %99, %102, %105, %108, %111, %114, %117, %120, %123 in 1 : vector<1x8xf32>, vector<1x8xf32>, vector<1x8xf32>, vector<1x8xf32>, vector<1x8xf32>, vector<1x8xf32>, vector<1x8xf32>, vector<1x8xf32>, vector<1x8xf32> -> vector<1x72xf32>
      %cst_36 = arith.constant dense<0.000000e+00> : vector<1x8xf32>
      %125 = tpu.matmul %124, %4, %cst_36 {dimension_numbers = #tpu.dot_dimension_numbers<[1], [0], [0], [1], [0, 0, 1, 1], [], []>} : vector<1x72xf32>, vector<72x8xf32>, vector<1x8xf32> -> vector<1x8xf32>
      %126 = arith.addf %125, %5 : vector<1x8xf32>
      %127 = vector.broadcast %37 : f32 to vector<1x8xf32>
      %128 = arith.mulf %127, %126 : vector<1x8xf32>
      %129 = arith.addf %arg15, %128 : vector<1x8xf32>
      %130 = vector.extract_strided_slice %129 {offsets = [0, 0], sizes = [1, 1], strides = [1, 1]} : vector<1x8xf32> to vector<1x1xf32>
      %131 = vector.broadcast %130 : vector<1x1xf32> to vector<1x8xf32>
      %132 = arith.mulf %131, %129 : vector<1x8xf32>
      %133 = vector.extract_strided_slice %129 {offsets = [0, 1], sizes = [1, 1], strides = [1, 1]} : vector<1x8xf32> to vector<1x1xf32>
      %134 = vector.broadcast %133 : vector<1x1xf32> to vector<1x8xf32>
      %135 = arith.mulf %134, %129 : vector<1x8xf32>
      %136 = vector.extract_strided_slice %129 {offsets = [0, 2], sizes = [1, 1], strides = [1, 1]} : vector<1x8xf32> to vector<1x1xf32>
      %137 = vector.broadcast %136 : vector<1x1xf32> to vector<1x8xf32>
      %138 = arith.mulf %137, %129 : vector<1x8xf32>
      %139 = vector.extract_strided_slice %129 {offsets = [0, 3], sizes = [1, 1], strides = [1, 1]} : vector<1x8xf32> to vector<1x1xf32>
      %140 = vector.broadcast %139 : vector<1x1xf32> to vector<1x8xf32>
      %141 = arith.mulf %140, %129 : vector<1x8xf32>
      %142 = vector.extract_strided_slice %129 {offsets = [0, 4], sizes = [1, 1], strides = [1, 1]} : vector<1x8xf32> to vector<1x1xf32>
      %143 = vector.broadcast %142 : vector<1x1xf32> to vector<1x8xf32>
      %144 = arith.mulf %143, %129 : vector<1x8xf32>
      %145 = vector.extract_strided_slice %129 {offsets = [0, 5], sizes = [1, 1], strides = [1, 1]} : vector<1x8xf32> to vector<1x1xf32>
      %146 = vector.broadcast %145 : vector<1x1xf32> to vector<1x8xf32>
      %147 = arith.mulf %146, %129 : vector<1x8xf32>
      %148 = vector.extract_strided_slice %129 {offsets = [0, 6], sizes = [1, 1], strides = [1, 1]} : vector<1x8xf32> to vector<1x1xf32>
      %149 = vector.broadcast %148 : vector<1x1xf32> to vector<1x8xf32>
      %150 = arith.mulf %149, %129 : vector<1x8xf32>
      %151 = vector.extract_strided_slice %129 {offsets = [0, 7], sizes = [1, 1], strides = [1, 1]} : vector<1x8xf32> to vector<1x1xf32>
      %152 = vector.broadcast %151 : vector<1x1xf32> to vector<1x8xf32>
      %153 = arith.mulf %152, %129 : vector<1x8xf32>
      %154 = tpu.concatenate %129, %132, %135, %138, %141, %144, %147, %150, %153 in 1 : vector<1x8xf32>, vector<1x8xf32>, vector<1x8xf32>, vector<1x8xf32>, vector<1x8xf32>, vector<1x8xf32>, vector<1x8xf32>, vector<1x8xf32>, vector<1x8xf32> -> vector<1x72xf32>
      %cst_37 = arith.constant dense<0.000000e+00> : vector<1x8xf32>
      %155 = tpu.matmul %154, %4, %cst_37 {dimension_numbers = #tpu.dot_dimension_numbers<[1], [0], [0], [1], [0, 0, 1, 1], [], []>} : vector<1x72xf32>, vector<72x8xf32>, vector<1x8xf32> -> vector<1x8xf32>
      %156 = arith.addf %155, %5 : vector<1x8xf32>
      %157 = arith.addf %96, %126 : vector<1x8xf32>
      %cst_38 = arith.constant 2.000000e+00 : f32
      %158 = vector.broadcast %cst_38 : f32 to vector<1x8xf32>
      %159 = arith.mulf %158, %157 : vector<1x8xf32>
      %160 = arith.addf %66, %159 : vector<1x8xf32>
      %161 = arith.addf %160, %156 : vector<1x8xf32>
      %162 = vector.broadcast %39 : f32 to vector<1x8xf32>
      %163 = arith.mulf %162, %161 : vector<1x8xf32>
      %164 = arith.addf %arg15, %163 : vector<1x8xf32>
      %165 = vector.extract_strided_slice %164 {offsets = [0, 0], sizes = [1, 1], strides = [1, 1]} : vector<1x8xf32> to vector<1x1xf32>
      %166 = vector.broadcast %165 : vector<1x1xf32> to vector<1x8xf32>
      %167 = arith.mulf %166, %164 : vector<1x8xf32>
      %168 = vector.extract_strided_slice %164 {offsets = [0, 1], sizes = [1, 1], strides = [1, 1]} : vector<1x8xf32> to vector<1x1xf32>
      %169 = vector.broadcast %168 : vector<1x1xf32> to vector<1x8xf32>
      %170 = arith.mulf %169, %164 : vector<1x8xf32>
      %171 = vector.extract_strided_slice %164 {offsets = [0, 2], sizes = [1, 1], strides = [1, 1]} : vector<1x8xf32> to vector<1x1xf32>
      %172 = vector.broadcast %171 : vector<1x1xf32> to vector<1x8xf32>
      %173 = arith.mulf %172, %164 : vector<1x8xf32>
      %174 = vector.extract_strided_slice %164 {offsets = [0, 3], sizes = [1, 1], strides = [1, 1]} : vector<1x8xf32> to vector<1x1xf32>
      %175 = vector.broadcast %174 : vector<1x1xf32> to vector<1x8xf32>
      %176 = arith.mulf %175, %164 : vector<1x8xf32>
      %177 = vector.extract_strided_slice %164 {offsets = [0, 4], sizes = [1, 1], strides = [1, 1]} : vector<1x8xf32> to vector<1x1xf32>
      %178 = vector.broadcast %177 : vector<1x1xf32> to vector<1x8xf32>
      %179 = arith.mulf %178, %164 : vector<1x8xf32>
      %180 = vector.extract_strided_slice %164 {offsets = [0, 5], sizes = [1, 1], strides = [1, 1]} : vector<1x8xf32> to vector<1x1xf32>
      %181 = vector.broadcast %180 : vector<1x1xf32> to vector<1x8xf32>
      %182 = arith.mulf %181, %164 : vector<1x8xf32>
      %183 = vector.extract_strided_slice %164 {offsets = [0, 6], sizes = [1, 1], strides = [1, 1]} : vector<1x8xf32> to vector<1x1xf32>
      %184 = vector.broadcast %183 : vector<1x1xf32> to vector<1x8xf32>
      %185 = arith.mulf %184, %164 : vector<1x8xf32>
      %186 = vector.extract_strided_slice %164 {offsets = [0, 7], sizes = [1, 1], strides = [1, 1]} : vector<1x8xf32> to vector<1x1xf32>
      %187 = vector.broadcast %186 : vector<1x1xf32> to vector<1x8xf32>
      %188 = arith.mulf %187, %164 : vector<1x8xf32>
      %189 = tpu.concatenate %164, %167, %170, %173, %176, %179, %182, %185, %188 in 1 : vector<1x8xf32>, vector<1x8xf32>, vector<1x8xf32>, vector<1x8xf32>, vector<1x8xf32>, vector<1x8xf32>, vector<1x8xf32>, vector<1x8xf32>, vector<1x8xf32> -> vector<1x72xf32>
      %cst_39 = arith.constant dense<0.000000e+00> : vector<1x8xf32>
      %190 = tpu.matmul %189, %4, %cst_39 {dimension_numbers = #tpu.dot_dimension_numbers<[1], [0], [0], [1], [0, 0, 1, 1], [], []>} : vector<1x72xf32>, vector<72x8xf32>, vector<1x8xf32> -> vector<1x8xf32>
      %191 = arith.addf %190, %5 : vector<1x8xf32>
      %192 = vector.broadcast %38 : f32 to vector<1x8xf32>
      %193 = arith.mulf %192, %191 : vector<1x8xf32>
      %194 = arith.addf %164, %193 : vector<1x8xf32>
      %195 = vector.extract_strided_slice %194 {offsets = [0, 0], sizes = [1, 1], strides = [1, 1]} : vector<1x8xf32> to vector<1x1xf32>
      %196 = vector.broadcast %195 : vector<1x1xf32> to vector<1x8xf32>
      %197 = arith.mulf %196, %194 : vector<1x8xf32>
      %198 = vector.extract_strided_slice %194 {offsets = [0, 1], sizes = [1, 1], strides = [1, 1]} : vector<1x8xf32> to vector<1x1xf32>
      %199 = vector.broadcast %198 : vector<1x1xf32> to vector<1x8xf32>
      %200 = arith.mulf %199, %194 : vector<1x8xf32>
      %201 = vector.extract_strided_slice %194 {offsets = [0, 2], sizes = [1, 1], strides = [1, 1]} : vector<1x8xf32> to vector<1x1xf32>
      %202 = vector.broadcast %201 : vector<1x1xf32> to vector<1x8xf32>
      %203 = arith.mulf %202, %194 : vector<1x8xf32>
      %204 = vector.extract_strided_slice %194 {offsets = [0, 3], sizes = [1, 1], strides = [1, 1]} : vector<1x8xf32> to vector<1x1xf32>
      %205 = vector.broadcast %204 : vector<1x1xf32> to vector<1x8xf32>
      %206 = arith.mulf %205, %194 : vector<1x8xf32>
      %207 = vector.extract_strided_slice %194 {offsets = [0, 4], sizes = [1, 1], strides = [1, 1]} : vector<1x8xf32> to vector<1x1xf32>
      %208 = vector.broadcast %207 : vector<1x1xf32> to vector<1x8xf32>
      %209 = arith.mulf %208, %194 : vector<1x8xf32>
      %210 = vector.extract_strided_slice %194 {offsets = [0, 5], sizes = [1, 1], strides = [1, 1]} : vector<1x8xf32> to vector<1x1xf32>
      %211 = vector.broadcast %210 : vector<1x1xf32> to vector<1x8xf32>
      %212 = arith.mulf %211, %194 : vector<1x8xf32>
      %213 = vector.extract_strided_slice %194 {offsets = [0, 6], sizes = [1, 1], strides = [1, 1]} : vector<1x8xf32> to vector<1x1xf32>
      %214 = vector.broadcast %213 : vector<1x1xf32> to vector<1x8xf32>
      %215 = arith.mulf %214, %194 : vector<1x8xf32>
      %216 = vector.extract_strided_slice %194 {offsets = [0, 7], sizes = [1, 1], strides = [1, 1]} : vector<1x8xf32> to vector<1x1xf32>
      %217 = vector.broadcast %216 : vector<1x1xf32> to vector<1x8xf32>
      %218 = arith.mulf %217, %194 : vector<1x8xf32>
      %219 = tpu.concatenate %194, %197, %200, %203, %206, %209, %212, %215, %218 in 1 : vector<1x8xf32>, vector<1x8xf32>, vector<1x8xf32>, vector<1x8xf32>, vector<1x8xf32>, vector<1x8xf32>, vector<1x8xf32>, vector<1x8xf32>, vector<1x8xf32> -> vector<1x72xf32>
      %cst_40 = arith.constant dense<0.000000e+00> : vector<1x8xf32>
      %220 = tpu.matmul %219, %4, %cst_40 {dimension_numbers = #tpu.dot_dimension_numbers<[1], [0], [0], [1], [0, 0, 1, 1], [], []>} : vector<1x72xf32>, vector<72x8xf32>, vector<1x8xf32> -> vector<1x8xf32>
      %221 = arith.addf %220, %5 : vector<1x8xf32>
      %222 = vector.broadcast %38 : f32 to vector<1x8xf32>
      %223 = arith.mulf %222, %221 : vector<1x8xf32>
      %224 = arith.addf %164, %223 : vector<1x8xf32>
      %225 = vector.extract_strided_slice %224 {offsets = [0, 0], sizes = [1, 1], strides = [1, 1]} : vector<1x8xf32> to vector<1x1xf32>
      %226 = vector.broadcast %225 : vector<1x1xf32> to vector<1x8xf32>
      %227 = arith.mulf %226, %224 : vector<1x8xf32>
      %228 = vector.extract_strided_slice %224 {offsets = [0, 1], sizes = [1, 1], strides = [1, 1]} : vector<1x8xf32> to vector<1x1xf32>
      %229 = vector.broadcast %228 : vector<1x1xf32> to vector<1x8xf32>
      %230 = arith.mulf %229, %224 : vector<1x8xf32>
      %231 = vector.extract_strided_slice %224 {offsets = [0, 2], sizes = [1, 1], strides = [1, 1]} : vector<1x8xf32> to vector<1x1xf32>
      %232 = vector.broadcast %231 : vector<1x1xf32> to vector<1x8xf32>
      %233 = arith.mulf %232, %224 : vector<1x8xf32>
      %234 = vector.extract_strided_slice %224 {offsets = [0, 3], sizes = [1, 1], strides = [1, 1]} : vector<1x8xf32> to vector<1x1xf32>
      %235 = vector.broadcast %234 : vector<1x1xf32> to vector<1x8xf32>
      %236 = arith.mulf %235, %224 : vector<1x8xf32>
      %237 = vector.extract_strided_slice %224 {offsets = [0, 4], sizes = [1, 1], strides = [1, 1]} : vector<1x8xf32> to vector<1x1xf32>
      %238 = vector.broadcast %237 : vector<1x1xf32> to vector<1x8xf32>
      %239 = arith.mulf %238, %224 : vector<1x8xf32>
      %240 = vector.extract_strided_slice %224 {offsets = [0, 5], sizes = [1, 1], strides = [1, 1]} : vector<1x8xf32> to vector<1x1xf32>
      %241 = vector.broadcast %240 : vector<1x1xf32> to vector<1x8xf32>
      %242 = arith.mulf %241, %224 : vector<1x8xf32>
      %243 = vector.extract_strided_slice %224 {offsets = [0, 6], sizes = [1, 1], strides = [1, 1]} : vector<1x8xf32> to vector<1x1xf32>
      %244 = vector.broadcast %243 : vector<1x1xf32> to vector<1x8xf32>
      %245 = arith.mulf %244, %224 : vector<1x8xf32>
      %246 = vector.extract_strided_slice %224 {offsets = [0, 7], sizes = [1, 1], strides = [1, 1]} : vector<1x8xf32> to vector<1x1xf32>
      %247 = vector.broadcast %246 : vector<1x1xf32> to vector<1x8xf32>
      %248 = arith.mulf %247, %224 : vector<1x8xf32>
      %249 = tpu.concatenate %224, %227, %230, %233, %236, %239, %242, %245, %248 in 1 : vector<1x8xf32>, vector<1x8xf32>, vector<1x8xf32>, vector<1x8xf32>, vector<1x8xf32>, vector<1x8xf32>, vector<1x8xf32>, vector<1x8xf32>, vector<1x8xf32> -> vector<1x72xf32>
      %cst_41 = arith.constant dense<0.000000e+00> : vector<1x8xf32>
      %250 = tpu.matmul %249, %4, %cst_41 {dimension_numbers = #tpu.dot_dimension_numbers<[1], [0], [0], [1], [0, 0, 1, 1], [], []>} : vector<1x72xf32>, vector<72x8xf32>, vector<1x8xf32> -> vector<1x8xf32>
      %251 = arith.addf %250, %5 : vector<1x8xf32>
      %252 = vector.broadcast %37 : f32 to vector<1x8xf32>
      %253 = arith.mulf %252, %251 : vector<1x8xf32>
      %254 = arith.addf %164, %253 : vector<1x8xf32>
      %255 = vector.extract_strided_slice %254 {offsets = [0, 0], sizes = [1, 1], strides = [1, 1]} : vector<1x8xf32> to vector<1x1xf32>
      %256 = vector.broadcast %255 : vector<1x1xf32> to vector<1x8xf32>
      %257 = arith.mulf %256, %254 : vector<1x8xf32>
      %258 = vector.extract_strided_slice %254 {offsets = [0, 1], sizes = [1, 1], strides = [1, 1]} : vector<1x8xf32> to vector<1x1xf32>
      %259 = vector.broadcast %258 : vector<1x1xf32> to vector<1x8xf32>
      %260 = arith.mulf %259, %254 : vector<1x8xf32>
      %261 = vector.extract_strided_slice %254 {offsets = [0, 2], sizes = [1, 1], strides = [1, 1]} : vector<1x8xf32> to vector<1x1xf32>
      %262 = vector.broadcast %261 : vector<1x1xf32> to vector<1x8xf32>
      %263 = arith.mulf %262, %254 : vector<1x8xf32>
      %264 = vector.extract_strided_slice %254 {offsets = [0, 3], sizes = [1, 1], strides = [1, 1]} : vector<1x8xf32> to vector<1x1xf32>
      %265 = vector.broadcast %264 : vector<1x1xf32> to vector<1x8xf32>
      %266 = arith.mulf %265, %254 : vector<1x8xf32>
      %267 = vector.extract_strided_slice %254 {offsets = [0, 4], sizes = [1, 1], strides = [1, 1]} : vector<1x8xf32> to vector<1x1xf32>
      %268 = vector.broadcast %267 : vector<1x1xf32> to vector<1x8xf32>
      %269 = arith.mulf %268, %254 : vector<1x8xf32>
      %270 = vector.extract_strided_slice %254 {offsets = [0, 5], sizes = [1, 1], strides = [1, 1]} : vector<1x8xf32> to vector<1x1xf32>
      %271 = vector.broadcast %270 : vector<1x1xf32> to vector<1x8xf32>
      %272 = arith.mulf %271, %254 : vector<1x8xf32>
      %273 = vector.extract_strided_slice %254 {offsets = [0, 6], sizes = [1, 1], strides = [1, 1]} : vector<1x8xf32> to vector<1x1xf32>
      %274 = vector.broadcast %273 : vector<1x1xf32> to vector<1x8xf32>
      %275 = arith.mulf %274, %254 : vector<1x8xf32>
      %276 = vector.extract_strided_slice %254 {offsets = [0, 7], sizes = [1, 1], strides = [1, 1]} : vector<1x8xf32> to vector<1x1xf32>
      %277 = vector.broadcast %276 : vector<1x1xf32> to vector<1x8xf32>
      %278 = arith.mulf %277, %254 : vector<1x8xf32>
      %279 = tpu.concatenate %254, %257, %260, %263, %266, %269, %272, %275, %278 in 1 : vector<1x8xf32>, vector<1x8xf32>, vector<1x8xf32>, vector<1x8xf32>, vector<1x8xf32>, vector<1x8xf32>, vector<1x8xf32>, vector<1x8xf32>, vector<1x8xf32> -> vector<1x72xf32>
      %cst_42 = arith.constant dense<0.000000e+00> : vector<1x8xf32>
      %280 = tpu.matmul %279, %4, %cst_42 {dimension_numbers = #tpu.dot_dimension_numbers<[1], [0], [0], [1], [0, 0, 1, 1], [], []>} : vector<1x72xf32>, vector<72x8xf32>, vector<1x8xf32> -> vector<1x8xf32>
      %281 = arith.addf %280, %5 : vector<1x8xf32>
      %282 = arith.addf %221, %251 : vector<1x8xf32>
      %cst_43 = arith.constant 2.000000e+00 : f32
      %283 = vector.broadcast %cst_43 : f32 to vector<1x8xf32>
      %284 = arith.mulf %283, %282 : vector<1x8xf32>
      %285 = arith.addf %191, %284 : vector<1x8xf32>
      %286 = arith.addf %285, %281 : vector<1x8xf32>
      %287 = vector.broadcast %39 : f32 to vector<1x8xf32>
      %288 = arith.mulf %287, %286 : vector<1x8xf32>
      %289 = arith.addf %164, %288 : vector<1x8xf32>
      %290 = vector.extract_strided_slice %289 {offsets = [0, 0], sizes = [1, 1], strides = [1, 1]} : vector<1x8xf32> to vector<1x1xf32>
      %291 = vector.broadcast %290 : vector<1x1xf32> to vector<1x8xf32>
      %292 = arith.mulf %291, %289 : vector<1x8xf32>
      %293 = vector.extract_strided_slice %289 {offsets = [0, 1], sizes = [1, 1], strides = [1, 1]} : vector<1x8xf32> to vector<1x1xf32>
      %294 = vector.broadcast %293 : vector<1x1xf32> to vector<1x8xf32>
      %295 = arith.mulf %294, %289 : vector<1x8xf32>
      %296 = vector.extract_strided_slice %289 {offsets = [0, 2], sizes = [1, 1], strides = [1, 1]} : vector<1x8xf32> to vector<1x1xf32>
      %297 = vector.broadcast %296 : vector<1x1xf32> to vector<1x8xf32>
      %298 = arith.mulf %297, %289 : vector<1x8xf32>
      %299 = vector.extract_strided_slice %289 {offsets = [0, 3], sizes = [1, 1], strides = [1, 1]} : vector<1x8xf32> to vector<1x1xf32>
      %300 = vector.broadcast %299 : vector<1x1xf32> to vector<1x8xf32>
      %301 = arith.mulf %300, %289 : vector<1x8xf32>
      %302 = vector.extract_strided_slice %289 {offsets = [0, 4], sizes = [1, 1], strides = [1, 1]} : vector<1x8xf32> to vector<1x1xf32>
      %303 = vector.broadcast %302 : vector<1x1xf32> to vector<1x8xf32>
      %304 = arith.mulf %303, %289 : vector<1x8xf32>
      %305 = vector.extract_strided_slice %289 {offsets = [0, 5], sizes = [1, 1], strides = [1, 1]} : vector<1x8xf32> to vector<1x1xf32>
      %306 = vector.broadcast %305 : vector<1x1xf32> to vector<1x8xf32>
      %307 = arith.mulf %306, %289 : vector<1x8xf32>
      %308 = vector.extract_strided_slice %289 {offsets = [0, 6], sizes = [1, 1], strides = [1, 1]} : vector<1x8xf32> to vector<1x1xf32>
      %309 = vector.broadcast %308 : vector<1x1xf32> to vector<1x8xf32>
      %310 = arith.mulf %309, %289 : vector<1x8xf32>
      %311 = vector.extract_strided_slice %289 {offsets = [0, 7], sizes = [1, 1], strides = [1, 1]} : vector<1x8xf32> to vector<1x1xf32>
      %312 = vector.broadcast %311 : vector<1x1xf32> to vector<1x8xf32>
      %313 = arith.mulf %312, %289 : vector<1x8xf32>
      %314 = tpu.concatenate %289, %292, %295, %298, %301, %304, %307, %310, %313 in 1 : vector<1x8xf32>, vector<1x8xf32>, vector<1x8xf32>, vector<1x8xf32>, vector<1x8xf32>, vector<1x8xf32>, vector<1x8xf32>, vector<1x8xf32>, vector<1x8xf32> -> vector<1x72xf32>
      %cst_44 = arith.constant dense<0.000000e+00> : vector<1x8xf32>
      %315 = tpu.matmul %314, %4, %cst_44 {dimension_numbers = #tpu.dot_dimension_numbers<[1], [0], [0], [1], [0, 0, 1, 1], [], []>} : vector<1x72xf32>, vector<72x8xf32>, vector<1x8xf32> -> vector<1x8xf32>
      %316 = arith.addf %315, %5 : vector<1x8xf32>
      %317 = vector.broadcast %38 : f32 to vector<1x8xf32>
      %318 = arith.mulf %317, %316 : vector<1x8xf32>
      %319 = arith.addf %289, %318 : vector<1x8xf32>
      %320 = vector.extract_strided_slice %319 {offsets = [0, 0], sizes = [1, 1], strides = [1, 1]} : vector<1x8xf32> to vector<1x1xf32>
      %321 = vector.broadcast %320 : vector<1x1xf32> to vector<1x8xf32>
      %322 = arith.mulf %321, %319 : vector<1x8xf32>
      %323 = vector.extract_strided_slice %319 {offsets = [0, 1], sizes = [1, 1], strides = [1, 1]} : vector<1x8xf32> to vector<1x1xf32>
      %324 = vector.broadcast %323 : vector<1x1xf32> to vector<1x8xf32>
      %325 = arith.mulf %324, %319 : vector<1x8xf32>
      %326 = vector.extract_strided_slice %319 {offsets = [0, 2], sizes = [1, 1], strides = [1, 1]} : vector<1x8xf32> to vector<1x1xf32>
      %327 = vector.broadcast %326 : vector<1x1xf32> to vector<1x8xf32>
      %328 = arith.mulf %327, %319 : vector<1x8xf32>
      %329 = vector.extract_strided_slice %319 {offsets = [0, 3], sizes = [1, 1], strides = [1, 1]} : vector<1x8xf32> to vector<1x1xf32>
      %330 = vector.broadcast %329 : vector<1x1xf32> to vector<1x8xf32>
      %331 = arith.mulf %330, %319 : vector<1x8xf32>
      %332 = vector.extract_strided_slice %319 {offsets = [0, 4], sizes = [1, 1], strides = [1, 1]} : vector<1x8xf32> to vector<1x1xf32>
      %333 = vector.broadcast %332 : vector<1x1xf32> to vector<1x8xf32>
      %334 = arith.mulf %333, %319 : vector<1x8xf32>
      %335 = vector.extract_strided_slice %319 {offsets = [0, 5], sizes = [1, 1], strides = [1, 1]} : vector<1x8xf32> to vector<1x1xf32>
      %336 = vector.broadcast %335 : vector<1x1xf32> to vector<1x8xf32>
      %337 = arith.mulf %336, %319 : vector<1x8xf32>
      %338 = vector.extract_strided_slice %319 {offsets = [0, 6], sizes = [1, 1], strides = [1, 1]} : vector<1x8xf32> to vector<1x1xf32>
      %339 = vector.broadcast %338 : vector<1x1xf32> to vector<1x8xf32>
      %340 = arith.mulf %339, %319 : vector<1x8xf32>
      %341 = vector.extract_strided_slice %319 {offsets = [0, 7], sizes = [1, 1], strides = [1, 1]} : vector<1x8xf32> to vector<1x1xf32>
      %342 = vector.broadcast %341 : vector<1x1xf32> to vector<1x8xf32>
      %343 = arith.mulf %342, %319 : vector<1x8xf32>
      %344 = tpu.concatenate %319, %322, %325, %328, %331, %334, %337, %340, %343 in 1 : vector<1x8xf32>, vector<1x8xf32>, vector<1x8xf32>, vector<1x8xf32>, vector<1x8xf32>, vector<1x8xf32>, vector<1x8xf32>, vector<1x8xf32>, vector<1x8xf32> -> vector<1x72xf32>
      %cst_45 = arith.constant dense<0.000000e+00> : vector<1x8xf32>
      %345 = tpu.matmul %344, %4, %cst_45 {dimension_numbers = #tpu.dot_dimension_numbers<[1], [0], [0], [1], [0, 0, 1, 1], [], []>} : vector<1x72xf32>, vector<72x8xf32>, vector<1x8xf32> -> vector<1x8xf32>
      %346 = arith.addf %345, %5 : vector<1x8xf32>
      %347 = vector.broadcast %38 : f32 to vector<1x8xf32>
      %348 = arith.mulf %347, %346 : vector<1x8xf32>
      %349 = arith.addf %289, %348 : vector<1x8xf32>
      %350 = vector.extract_strided_slice %349 {offsets = [0, 0], sizes = [1, 1], strides = [1, 1]} : vector<1x8xf32> to vector<1x1xf32>
      %351 = vector.broadcast %350 : vector<1x1xf32> to vector<1x8xf32>
      %352 = arith.mulf %351, %349 : vector<1x8xf32>
      %353 = vector.extract_strided_slice %349 {offsets = [0, 1], sizes = [1, 1], strides = [1, 1]} : vector<1x8xf32> to vector<1x1xf32>
      %354 = vector.broadcast %353 : vector<1x1xf32> to vector<1x8xf32>
      %355 = arith.mulf %354, %349 : vector<1x8xf32>
      %356 = vector.extract_strided_slice %349 {offsets = [0, 2], sizes = [1, 1], strides = [1, 1]} : vector<1x8xf32> to vector<1x1xf32>
      %357 = vector.broadcast %356 : vector<1x1xf32> to vector<1x8xf32>
      %358 = arith.mulf %357, %349 : vector<1x8xf32>
      %359 = vector.extract_strided_slice %349 {offsets = [0, 3], sizes = [1, 1], strides = [1, 1]} : vector<1x8xf32> to vector<1x1xf32>
      %360 = vector.broadcast %359 : vector<1x1xf32> to vector<1x8xf32>
      %361 = arith.mulf %360, %349 : vector<1x8xf32>
      %362 = vector.extract_strided_slice %349 {offsets = [0, 4], sizes = [1, 1], strides = [1, 1]} : vector<1x8xf32> to vector<1x1xf32>
      %363 = vector.broadcast %362 : vector<1x1xf32> to vector<1x8xf32>
      %364 = arith.mulf %363, %349 : vector<1x8xf32>
      %365 = vector.extract_strided_slice %349 {offsets = [0, 5], sizes = [1, 1], strides = [1, 1]} : vector<1x8xf32> to vector<1x1xf32>
      %366 = vector.broadcast %365 : vector<1x1xf32> to vector<1x8xf32>
      %367 = arith.mulf %366, %349 : vector<1x8xf32>
      %368 = vector.extract_strided_slice %349 {offsets = [0, 6], sizes = [1, 1], strides = [1, 1]} : vector<1x8xf32> to vector<1x1xf32>
      %369 = vector.broadcast %368 : vector<1x1xf32> to vector<1x8xf32>
      %370 = arith.mulf %369, %349 : vector<1x8xf32>
      %371 = vector.extract_strided_slice %349 {offsets = [0, 7], sizes = [1, 1], strides = [1, 1]} : vector<1x8xf32> to vector<1x1xf32>
      %372 = vector.broadcast %371 : vector<1x1xf32> to vector<1x8xf32>
      %373 = arith.mulf %372, %349 : vector<1x8xf32>
      %374 = tpu.concatenate %349, %352, %355, %358, %361, %364, %367, %370, %373 in 1 : vector<1x8xf32>, vector<1x8xf32>, vector<1x8xf32>, vector<1x8xf32>, vector<1x8xf32>, vector<1x8xf32>, vector<1x8xf32>, vector<1x8xf32>, vector<1x8xf32> -> vector<1x72xf32>
      %cst_46 = arith.constant dense<0.000000e+00> : vector<1x8xf32>
      %375 = tpu.matmul %374, %4, %cst_46 {dimension_numbers = #tpu.dot_dimension_numbers<[1], [0], [0], [1], [0, 0, 1, 1], [], []>} : vector<1x72xf32>, vector<72x8xf32>, vector<1x8xf32> -> vector<1x8xf32>
      %376 = arith.addf %375, %5 : vector<1x8xf32>
      %377 = vector.broadcast %37 : f32 to vector<1x8xf32>
      %378 = arith.mulf %377, %376 : vector<1x8xf32>
      %379 = arith.addf %289, %378 : vector<1x8xf32>
      %380 = vector.extract_strided_slice %379 {offsets = [0, 0], sizes = [1, 1], strides = [1, 1]} : vector<1x8xf32> to vector<1x1xf32>
      %381 = vector.broadcast %380 : vector<1x1xf32> to vector<1x8xf32>
      %382 = arith.mulf %381, %379 : vector<1x8xf32>
      %383 = vector.extract_strided_slice %379 {offsets = [0, 1], sizes = [1, 1], strides = [1, 1]} : vector<1x8xf32> to vector<1x1xf32>
      %384 = vector.broadcast %383 : vector<1x1xf32> to vector<1x8xf32>
      %385 = arith.mulf %384, %379 : vector<1x8xf32>
      %386 = vector.extract_strided_slice %379 {offsets = [0, 2], sizes = [1, 1], strides = [1, 1]} : vector<1x8xf32> to vector<1x1xf32>
      %387 = vector.broadcast %386 : vector<1x1xf32> to vector<1x8xf32>
      %388 = arith.mulf %387, %379 : vector<1x8xf32>
      %389 = vector.extract_strided_slice %379 {offsets = [0, 3], sizes = [1, 1], strides = [1, 1]} : vector<1x8xf32> to vector<1x1xf32>
      %390 = vector.broadcast %389 : vector<1x1xf32> to vector<1x8xf32>
      %391 = arith.mulf %390, %379 : vector<1x8xf32>
      %392 = vector.extract_strided_slice %379 {offsets = [0, 4], sizes = [1, 1], strides = [1, 1]} : vector<1x8xf32> to vector<1x1xf32>
      %393 = vector.broadcast %392 : vector<1x1xf32> to vector<1x8xf32>
      %394 = arith.mulf %393, %379 : vector<1x8xf32>
      %395 = vector.extract_strided_slice %379 {offsets = [0, 5], sizes = [1, 1], strides = [1, 1]} : vector<1x8xf32> to vector<1x1xf32>
      %396 = vector.broadcast %395 : vector<1x1xf32> to vector<1x8xf32>
      %397 = arith.mulf %396, %379 : vector<1x8xf32>
      %398 = vector.extract_strided_slice %379 {offsets = [0, 6], sizes = [1, 1], strides = [1, 1]} : vector<1x8xf32> to vector<1x1xf32>
      %399 = vector.broadcast %398 : vector<1x1xf32> to vector<1x8xf32>
      %400 = arith.mulf %399, %379 : vector<1x8xf32>
      %401 = vector.extract_strided_slice %379 {offsets = [0, 7], sizes = [1, 1], strides = [1, 1]} : vector<1x8xf32> to vector<1x1xf32>
      %402 = vector.broadcast %401 : vector<1x1xf32> to vector<1x8xf32>
      %403 = arith.mulf %402, %379 : vector<1x8xf32>
      %404 = tpu.concatenate %379, %382, %385, %388, %391, %394, %397, %400, %403 in 1 : vector<1x8xf32>, vector<1x8xf32>, vector<1x8xf32>, vector<1x8xf32>, vector<1x8xf32>, vector<1x8xf32>, vector<1x8xf32>, vector<1x8xf32>, vector<1x8xf32> -> vector<1x72xf32>
      %cst_47 = arith.constant dense<0.000000e+00> : vector<1x8xf32>
      %405 = tpu.matmul %404, %4, %cst_47 {dimension_numbers = #tpu.dot_dimension_numbers<[1], [0], [0], [1], [0, 0, 1, 1], [], []>} : vector<1x72xf32>, vector<72x8xf32>, vector<1x8xf32> -> vector<1x8xf32>
      %406 = arith.addf %405, %5 : vector<1x8xf32>
      %407 = arith.addf %346, %376 : vector<1x8xf32>
      %cst_48 = arith.constant 2.000000e+00 : f32
      %408 = vector.broadcast %cst_48 : f32 to vector<1x8xf32>
      %409 = arith.mulf %408, %407 : vector<1x8xf32>
      %410 = arith.addf %316, %409 : vector<1x8xf32>
      %411 = arith.addf %410, %406 : vector<1x8xf32>
      %412 = vector.broadcast %39 : f32 to vector<1x8xf32>
      %413 = arith.mulf %412, %411 : vector<1x8xf32>
      %414 = arith.addf %289, %413 : vector<1x8xf32>
      %415 = vector.extract_strided_slice %414 {offsets = [0, 0], sizes = [1, 1], strides = [1, 1]} : vector<1x8xf32> to vector<1x1xf32>
      %416 = vector.broadcast %415 : vector<1x1xf32> to vector<1x8xf32>
      %417 = arith.mulf %416, %414 : vector<1x8xf32>
      %418 = vector.extract_strided_slice %414 {offsets = [0, 1], sizes = [1, 1], strides = [1, 1]} : vector<1x8xf32> to vector<1x1xf32>
      %419 = vector.broadcast %418 : vector<1x1xf32> to vector<1x8xf32>
      %420 = arith.mulf %419, %414 : vector<1x8xf32>
      %421 = vector.extract_strided_slice %414 {offsets = [0, 2], sizes = [1, 1], strides = [1, 1]} : vector<1x8xf32> to vector<1x1xf32>
      %422 = vector.broadcast %421 : vector<1x1xf32> to vector<1x8xf32>
      %423 = arith.mulf %422, %414 : vector<1x8xf32>
      %424 = vector.extract_strided_slice %414 {offsets = [0, 3], sizes = [1, 1], strides = [1, 1]} : vector<1x8xf32> to vector<1x1xf32>
      %425 = vector.broadcast %424 : vector<1x1xf32> to vector<1x8xf32>
      %426 = arith.mulf %425, %414 : vector<1x8xf32>
      %427 = vector.extract_strided_slice %414 {offsets = [0, 4], sizes = [1, 1], strides = [1, 1]} : vector<1x8xf32> to vector<1x1xf32>
      %428 = vector.broadcast %427 : vector<1x1xf32> to vector<1x8xf32>
      %429 = arith.mulf %428, %414 : vector<1x8xf32>
      %430 = vector.extract_strided_slice %414 {offsets = [0, 5], sizes = [1, 1], strides = [1, 1]} : vector<1x8xf32> to vector<1x1xf32>
      %431 = vector.broadcast %430 : vector<1x1xf32> to vector<1x8xf32>
      %432 = arith.mulf %431, %414 : vector<1x8xf32>
      %433 = vector.extract_strided_slice %414 {offsets = [0, 6], sizes = [1, 1], strides = [1, 1]} : vector<1x8xf32> to vector<1x1xf32>
      %434 = vector.broadcast %433 : vector<1x1xf32> to vector<1x8xf32>
      %435 = arith.mulf %434, %414 : vector<1x8xf32>
      %436 = vector.extract_strided_slice %414 {offsets = [0, 7], sizes = [1, 1], strides = [1, 1]} : vector<1x8xf32> to vector<1x1xf32>
      %437 = vector.broadcast %436 : vector<1x1xf32> to vector<1x8xf32>
      %438 = arith.mulf %437, %414 : vector<1x8xf32>
      %439 = tpu.concatenate %414, %417, %420, %423, %426, %429, %432, %435, %438 in 1 : vector<1x8xf32>, vector<1x8xf32>, vector<1x8xf32>, vector<1x8xf32>, vector<1x8xf32>, vector<1x8xf32>, vector<1x8xf32>, vector<1x8xf32>, vector<1x8xf32> -> vector<1x72xf32>
      %cst_49 = arith.constant dense<0.000000e+00> : vector<1x8xf32>
      %440 = tpu.matmul %439, %4, %cst_49 {dimension_numbers = #tpu.dot_dimension_numbers<[1], [0], [0], [1], [0, 0, 1, 1], [], []>} : vector<1x72xf32>, vector<72x8xf32>, vector<1x8xf32> -> vector<1x8xf32>
      %441 = arith.addf %440, %5 : vector<1x8xf32>
      %442 = vector.broadcast %38 : f32 to vector<1x8xf32>
      %443 = arith.mulf %442, %441 : vector<1x8xf32>
      %444 = arith.addf %414, %443 : vector<1x8xf32>
      %445 = vector.extract_strided_slice %444 {offsets = [0, 0], sizes = [1, 1], strides = [1, 1]} : vector<1x8xf32> to vector<1x1xf32>
      %446 = vector.broadcast %445 : vector<1x1xf32> to vector<1x8xf32>
      %447 = arith.mulf %446, %444 : vector<1x8xf32>
      %448 = vector.extract_strided_slice %444 {offsets = [0, 1], sizes = [1, 1], strides = [1, 1]} : vector<1x8xf32> to vector<1x1xf32>
      %449 = vector.broadcast %448 : vector<1x1xf32> to vector<1x8xf32>
      %450 = arith.mulf %449, %444 : vector<1x8xf32>
      %451 = vector.extract_strided_slice %444 {offsets = [0, 2], sizes = [1, 1], strides = [1, 1]} : vector<1x8xf32> to vector<1x1xf32>
      %452 = vector.broadcast %451 : vector<1x1xf32> to vector<1x8xf32>
      %453 = arith.mulf %452, %444 : vector<1x8xf32>
      %454 = vector.extract_strided_slice %444 {offsets = [0, 3], sizes = [1, 1], strides = [1, 1]} : vector<1x8xf32> to vector<1x1xf32>
      %455 = vector.broadcast %454 : vector<1x1xf32> to vector<1x8xf32>
      %456 = arith.mulf %455, %444 : vector<1x8xf32>
      %457 = vector.extract_strided_slice %444 {offsets = [0, 4], sizes = [1, 1], strides = [1, 1]} : vector<1x8xf32> to vector<1x1xf32>
      %458 = vector.broadcast %457 : vector<1x1xf32> to vector<1x8xf32>
      %459 = arith.mulf %458, %444 : vector<1x8xf32>
      %460 = vector.extract_strided_slice %444 {offsets = [0, 5], sizes = [1, 1], strides = [1, 1]} : vector<1x8xf32> to vector<1x1xf32>
      %461 = vector.broadcast %460 : vector<1x1xf32> to vector<1x8xf32>
      %462 = arith.mulf %461, %444 : vector<1x8xf32>
      %463 = vector.extract_strided_slice %444 {offsets = [0, 6], sizes = [1, 1], strides = [1, 1]} : vector<1x8xf32> to vector<1x1xf32>
      %464 = vector.broadcast %463 : vector<1x1xf32> to vector<1x8xf32>
      %465 = arith.mulf %464, %444 : vector<1x8xf32>
      %466 = vector.extract_strided_slice %444 {offsets = [0, 7], sizes = [1, 1], strides = [1, 1]} : vector<1x8xf32> to vector<1x1xf32>
      %467 = vector.broadcast %466 : vector<1x1xf32> to vector<1x8xf32>
      %468 = arith.mulf %467, %444 : vector<1x8xf32>
      %469 = tpu.concatenate %444, %447, %450, %453, %456, %459, %462, %465, %468 in 1 : vector<1x8xf32>, vector<1x8xf32>, vector<1x8xf32>, vector<1x8xf32>, vector<1x8xf32>, vector<1x8xf32>, vector<1x8xf32>, vector<1x8xf32>, vector<1x8xf32> -> vector<1x72xf32>
      %cst_50 = arith.constant dense<0.000000e+00> : vector<1x8xf32>
      %470 = tpu.matmul %469, %4, %cst_50 {dimension_numbers = #tpu.dot_dimension_numbers<[1], [0], [0], [1], [0, 0, 1, 1], [], []>} : vector<1x72xf32>, vector<72x8xf32>, vector<1x8xf32> -> vector<1x8xf32>
      %471 = arith.addf %470, %5 : vector<1x8xf32>
      %472 = vector.broadcast %38 : f32 to vector<1x8xf32>
      %473 = arith.mulf %472, %471 : vector<1x8xf32>
      %474 = arith.addf %414, %473 : vector<1x8xf32>
      %475 = vector.extract_strided_slice %474 {offsets = [0, 0], sizes = [1, 1], strides = [1, 1]} : vector<1x8xf32> to vector<1x1xf32>
      %476 = vector.broadcast %475 : vector<1x1xf32> to vector<1x8xf32>
      %477 = arith.mulf %476, %474 : vector<1x8xf32>
      %478 = vector.extract_strided_slice %474 {offsets = [0, 1], sizes = [1, 1], strides = [1, 1]} : vector<1x8xf32> to vector<1x1xf32>
      %479 = vector.broadcast %478 : vector<1x1xf32> to vector<1x8xf32>
      %480 = arith.mulf %479, %474 : vector<1x8xf32>
      %481 = vector.extract_strided_slice %474 {offsets = [0, 2], sizes = [1, 1], strides = [1, 1]} : vector<1x8xf32> to vector<1x1xf32>
      %482 = vector.broadcast %481 : vector<1x1xf32> to vector<1x8xf32>
      %483 = arith.mulf %482, %474 : vector<1x8xf32>
      %484 = vector.extract_strided_slice %474 {offsets = [0, 3], sizes = [1, 1], strides = [1, 1]} : vector<1x8xf32> to vector<1x1xf32>
      %485 = vector.broadcast %484 : vector<1x1xf32> to vector<1x8xf32>
      %486 = arith.mulf %485, %474 : vector<1x8xf32>
      %487 = vector.extract_strided_slice %474 {offsets = [0, 4], sizes = [1, 1], strides = [1, 1]} : vector<1x8xf32> to vector<1x1xf32>
      %488 = vector.broadcast %487 : vector<1x1xf32> to vector<1x8xf32>
      %489 = arith.mulf %488, %474 : vector<1x8xf32>
      %490 = vector.extract_strided_slice %474 {offsets = [0, 5], sizes = [1, 1], strides = [1, 1]} : vector<1x8xf32> to vector<1x1xf32>
      %491 = vector.broadcast %490 : vector<1x1xf32> to vector<1x8xf32>
      %492 = arith.mulf %491, %474 : vector<1x8xf32>
      %493 = vector.extract_strided_slice %474 {offsets = [0, 6], sizes = [1, 1], strides = [1, 1]} : vector<1x8xf32> to vector<1x1xf32>
      %494 = vector.broadcast %493 : vector<1x1xf32> to vector<1x8xf32>
      %495 = arith.mulf %494, %474 : vector<1x8xf32>
      %496 = vector.extract_strided_slice %474 {offsets = [0, 7], sizes = [1, 1], strides = [1, 1]} : vector<1x8xf32> to vector<1x1xf32>
      %497 = vector.broadcast %496 : vector<1x1xf32> to vector<1x8xf32>
      %498 = arith.mulf %497, %474 : vector<1x8xf32>
      %499 = tpu.concatenate %474, %477, %480, %483, %486, %489, %492, %495, %498 in 1 : vector<1x8xf32>, vector<1x8xf32>, vector<1x8xf32>, vector<1x8xf32>, vector<1x8xf32>, vector<1x8xf32>, vector<1x8xf32>, vector<1x8xf32>, vector<1x8xf32> -> vector<1x72xf32>
      %cst_51 = arith.constant dense<0.000000e+00> : vector<1x8xf32>
      %500 = tpu.matmul %499, %4, %cst_51 {dimension_numbers = #tpu.dot_dimension_numbers<[1], [0], [0], [1], [0, 0, 1, 1], [], []>} : vector<1x72xf32>, vector<72x8xf32>, vector<1x8xf32> -> vector<1x8xf32>
      %501 = arith.addf %500, %5 : vector<1x8xf32>
      %502 = vector.broadcast %37 : f32 to vector<1x8xf32>
      %503 = arith.mulf %502, %501 : vector<1x8xf32>
      %504 = arith.addf %414, %503 : vector<1x8xf32>
      %505 = vector.extract_strided_slice %504 {offsets = [0, 0], sizes = [1, 1], strides = [1, 1]} : vector<1x8xf32> to vector<1x1xf32>
      %506 = vector.broadcast %505 : vector<1x1xf32> to vector<1x8xf32>
      %507 = arith.mulf %506, %504 : vector<1x8xf32>
      %508 = vector.extract_strided_slice %504 {offsets = [0, 1], sizes = [1, 1], strides = [1, 1]} : vector<1x8xf32> to vector<1x1xf32>
      %509 = vector.broadcast %508 : vector<1x1xf32> to vector<1x8xf32>
      %510 = arith.mulf %509, %504 : vector<1x8xf32>
      %511 = vector.extract_strided_slice %504 {offsets = [0, 2], sizes = [1, 1], strides = [1, 1]} : vector<1x8xf32> to vector<1x1xf32>
      %512 = vector.broadcast %511 : vector<1x1xf32> to vector<1x8xf32>
      %513 = arith.mulf %512, %504 : vector<1x8xf32>
      %514 = vector.extract_strided_slice %504 {offsets = [0, 3], sizes = [1, 1], strides = [1, 1]} : vector<1x8xf32> to vector<1x1xf32>
      %515 = vector.broadcast %514 : vector<1x1xf32> to vector<1x8xf32>
      %516 = arith.mulf %515, %504 : vector<1x8xf32>
      %517 = vector.extract_strided_slice %504 {offsets = [0, 4], sizes = [1, 1], strides = [1, 1]} : vector<1x8xf32> to vector<1x1xf32>
      %518 = vector.broadcast %517 : vector<1x1xf32> to vector<1x8xf32>
      %519 = arith.mulf %518, %504 : vector<1x8xf32>
      %520 = vector.extract_strided_slice %504 {offsets = [0, 5], sizes = [1, 1], strides = [1, 1]} : vector<1x8xf32> to vector<1x1xf32>
      %521 = vector.broadcast %520 : vector<1x1xf32> to vector<1x8xf32>
      %522 = arith.mulf %521, %504 : vector<1x8xf32>
      %523 = vector.extract_strided_slice %504 {offsets = [0, 6], sizes = [1, 1], strides = [1, 1]} : vector<1x8xf32> to vector<1x1xf32>
      %524 = vector.broadcast %523 : vector<1x1xf32> to vector<1x8xf32>
      %525 = arith.mulf %524, %504 : vector<1x8xf32>
      %526 = vector.extract_strided_slice %504 {offsets = [0, 7], sizes = [1, 1], strides = [1, 1]} : vector<1x8xf32> to vector<1x1xf32>
      %527 = vector.broadcast %526 : vector<1x1xf32> to vector<1x8xf32>
      %528 = arith.mulf %527, %504 : vector<1x8xf32>
      %529 = tpu.concatenate %504, %507, %510, %513, %516, %519, %522, %525, %528 in 1 : vector<1x8xf32>, vector<1x8xf32>, vector<1x8xf32>, vector<1x8xf32>, vector<1x8xf32>, vector<1x8xf32>, vector<1x8xf32>, vector<1x8xf32>, vector<1x8xf32> -> vector<1x72xf32>
      %cst_52 = arith.constant dense<0.000000e+00> : vector<1x8xf32>
      %530 = tpu.matmul %529, %4, %cst_52 {dimension_numbers = #tpu.dot_dimension_numbers<[1], [0], [0], [1], [0, 0, 1, 1], [], []>} : vector<1x72xf32>, vector<72x8xf32>, vector<1x8xf32> -> vector<1x8xf32>
      %531 = arith.addf %530, %5 : vector<1x8xf32>
      %532 = arith.addf %471, %501 : vector<1x8xf32>
      %cst_53 = arith.constant 2.000000e+00 : f32
      %533 = vector.broadcast %cst_53 : f32 to vector<1x8xf32>
      %534 = arith.mulf %533, %532 : vector<1x8xf32>
      %535 = arith.addf %441, %534 : vector<1x8xf32>
      %536 = arith.addf %535, %531 : vector<1x8xf32>
      %537 = vector.broadcast %39 : f32 to vector<1x8xf32>
      %538 = arith.mulf %537, %536 : vector<1x8xf32>
      %539 = arith.addf %414, %538 : vector<1x8xf32>
      %540 = vector.broadcast %arg14 : i32 to vector<8x8xi32>
      %541 = arith.cmpi eq, %17, %540 : vector<8x8xi32>
      %542 = vector.shape_cast %539 : vector<1x8xf32> to vector<1x8xf32>
      %543 = vector.broadcast %542 : vector<1x8xf32> to vector<8x8xf32>
      %544 = arith.select %541, %543, %arg16 : vector<8x8xi1>, vector<8x8xf32>
      scf.yield %539, %544 : vector<1x8xf32>, vector<8x8xf32>
    }
    %c7_i32_23 = arith.constant 7 : i32
    %c0_24 = arith.constant 0 : index
    %c0_25 = arith.constant 0 : index
    %22 = vector.load %arg12[%c0_24, %c0_25] : memref<8x8xf32, #tpu.memory_space<vmem>>, vector<8x8xf32>
    tpu.vector_store %arg12[%c0_24, %c0_25], %21#1 {strides = array<i32>} : memref<8x8xf32, #tpu.memory_space<vmem>>, vector<8x8xf32>,
    %cst_26 = arith.constant dense<0.000000e+00> : vector<8x32xf32>
    %23 = tpu.matmul %21#1, %6, %cst_26 {dimension_numbers = #tpu.dot_dimension_numbers<[1], [0], [0], [1], [0, 0, 1, 1], [], []>} : vector<8x8xf32>, vector<8x32xf32>, vector<8x32xf32> -> vector<8x32xf32>
    %24 = vector.broadcast %7 : vector<1x32xf32> to vector<8x32xf32>
    %25 = arith.addf %23, %24 : vector<8x32xf32>
    %26 = math.tanh %25 : vector<8x32xf32>
    %cst_27 = arith.constant dense<0.000000e+00> : vector<8x16xf32>
    %27 = tpu.matmul %26, %8, %cst_27 {dimension_numbers = #tpu.dot_dimension_numbers<[1], [0], [0], [1], [0, 0, 1, 1], [], []>} : vector<8x32xf32>, vector<32x16xf32>, vector<8x16xf32> -> vector<8x16xf32>
    %28 = vector.broadcast %9 : vector<1x16xf32> to vector<8x16xf32>
    %29 = arith.addf %27, %28 : vector<8x16xf32>
    %c0_28 = arith.constant 0 : index
    %c0_29 = arith.constant 0 : index
    %30 = vector.load %arg13[%c0_28, %c0_29] : memref<8x16xf32, #tpu.memory_space<vmem>>, vector<8x16xf32>
    tpu.vector_store %arg13[%c0_28, %c0_29], %29 {strides = array<i32>} : memref<8x16xf32, #tpu.memory_space<vmem>>, vector<8x16xf32>,
    return
  }
}

</mosaic_0001>

<llo_original>
// kernel: tpu_custom_call.1
$region0: #{tpu_custom_call.1}
  #allocation0 [shape = 'u32[]', space=smem, size = 0x4, offset = 0x4, fixed_abs, tag = 'smem constant byte address 0x4 - core index']
  #allocation1 [shape = 'u32[144,128]{1,0:T(1,128)}', space=vmem, size = 0x12000, scoped, tag = 'internal scratch']
  %s0 = inlined_call_operand.vmem [shape: f32[1,20], index: 0, kind: input, shape index: {}]
  %s1 = inlined_call_operand.vmem [shape: f32[8], index: 1, kind: input, shape index: {}]
  %s2 = inlined_call_operand.vmem [shape: f32[20,32], index: 2, kind: input, shape index: {}]
  %s3 = inlined_call_operand.vmem [shape: f32[1,32], index: 3, kind: input, shape index: {}]
  %s4 = inlined_call_operand.vmem [shape: f32[32,8], index: 4, kind: input, shape index: {}]
  %s5 = inlined_call_operand.vmem [shape: f32[1,8], index: 5, kind: input, shape index: {}]
  %s6 = inlined_call_operand.vmem [shape: f32[72,8], index: 6, kind: input, shape index: {}]
  %s7 = inlined_call_operand.vmem [shape: f32[1,8], index: 7, kind: input, shape index: {}]
  %s8 = inlined_call_operand.vmem [shape: f32[8,32], index: 8, kind: input, shape index: {}]
  %s9 = inlined_call_operand.vmem [shape: f32[1,32], index: 9, kind: input, shape index: {}]
  %s10 = inlined_call_operand.vmem [shape: f32[32,16], index: 10, kind: input, shape index: {}]
  %s11 = inlined_call_operand.vmem [shape: f32[1,16], index: 11, kind: input, shape index: {}]
  %s12 = inlined_call_operand.hbm [shape: f32[8,8], index: 12, kind: output, shape index: {0}]
  %s13 = inlined_call_operand.hbm [shape: f32[8,16], index: 13, kind: output, shape index: {1}]
  %14 = xla_tuple %s12, %s13
  %s15 = sld [smem:[#allocation0]]
  $region77: #{tpu_custom_call.1} parent=0
    _
  %s17 = ssub.s32 1, %s15
  %s18 = scalar_select 0, %s17, %s15
  $region1: #{tpu_custom_call.1} parent=0
    #allocation2 [shape = 'u8[512]{0}', space=smem, size = 0x200, scoped, tag = 'input window, operand 1, single buffered']
    #allocation3 [shape = 's32[1]{0}', space=sflag, size = 0x4, scoped, tag = 'scoped memory for tpu_custom_call.1']
    #allocation4 [shape = 's32[1]{0}', space=sflag, size = 0x4, scoped, tag = 'scoped memory for tpu_custom_call.1']
    #allocation5 [shape = 'u8[4096]{0}', space=vmem, size = 0x1000, scoped, tag = 'output window, operand 0, single buffered']
    #allocation6 [shape = 'u8[4096]{0}', space=vmem, size = 0x1000, scoped, tag = 'output window, operand 1, single buffered']
    #allocation7 [shape = 's32[1]{0}', space=sflag, size = 0x4, scoped, tag = 'scoped memory for tpu_custom_call.1']
    %19 = vsyncpa [#allocation4], 0
    %20 = vsyncpa [#allocation3], 0
    %21 = vsyncpa [#allocation7], 0
    // Predicated region
    $region2: #{tpu_custom_call.1} parent=1 // pred_check
      _
    $region3: #{tpu_custom_call.1} parent=1 // pred_check_branch
      %23 = sbr.rel (0) target = $region5
    $region4: #{tpu_custom_call.1} parent=1 // pred_region
      _
    $region5: #{tpu_custom_call.1} parent=1 // pred_fallthru
      _
    // Predicated region
    $region6: #{tpu_custom_call.1} parent=1 // pred_check
      _
    $region7: #{tpu_custom_call.1} parent=1 // pred_check_branch
      %25 = sbr.rel (0) target = $region9
    $region8: #{tpu_custom_call.1} parent=1 // pred_region
      %s27 = ssub.s32 16, 16
      %28 = vsyncadd [#allocation4], %s27
      %s30 = sshll.u32 %s1, 4
      %s31 = int_to_ptr.vmem [resolvable:$true] %s30
      %33 = dma.vmem_to_smem %s31, 16, [#allocation2], [#allocation4]
    $region9: #{tpu_custom_call.1} parent=1 // pred_fallthru
      _
    // Predicated region
    $region10: #{tpu_custom_call.1} parent=1 // pred_check
      _
    $region11: #{tpu_custom_call.1} parent=1 // pred_check_branch
      %35 = sbr.rel (0) target = $region13
    $region12: #{tpu_custom_call.1} parent=1 // pred_region
      _
    $region13: #{tpu_custom_call.1} parent=1 // pred_fallthru
      _
    // Predicated region
    $region14: #{tpu_custom_call.1} parent=1 // pred_check
      _
    $region15: #{tpu_custom_call.1} parent=1 // pred_check_branch
      %37 = sbr.rel (0) target = $region17
    $region16: #{tpu_custom_call.1} parent=1 // pred_region
      _
    $region17: #{tpu_custom_call.1} parent=1 // pred_fallthru
      _
    // Predicated region
    $region18: #{tpu_custom_call.1} parent=1 // pred_check
      _
    $region19: #{tpu_custom_call.1} parent=1 // pred_check_branch
      %39 = sbr.rel (0) target = $region21
    $region20: #{tpu_custom_call.1} parent=1 // pred_region
      _
    $region21: #{tpu_custom_call.1} parent=1 // pred_fallthru
      _
    // Predicated region
    $region22: #{tpu_custom_call.1} parent=1 // pred_check
      _
    $region23: #{tpu_custom_call.1} parent=1 // pred_check_branch
      %41 = sbr.rel (0) target = $region25
    $region24: #{tpu_custom_call.1} parent=1 // pred_region
      _
    $region25: #{tpu_custom_call.1} parent=1 // pred_fallthru
      _
    // Predicated region
    $region26: #{tpu_custom_call.1} parent=1 // pred_check
      _
    $region27: #{tpu_custom_call.1} parent=1 // pred_check_branch
      %43 = sbr.rel (0) target = $region29
    $region28: #{tpu_custom_call.1} parent=1 // pred_region
      _
    $region29: #{tpu_custom_call.1} parent=1 // pred_fallthru
      _
    // Predicated region
    $region30: #{tpu_custom_call.1} parent=1 // pred_check
      _
    $region31: #{tpu_custom_call.1} parent=1 // pred_check_branch
      %45 = sbr.rel (0) target = $region33
    $region32: #{tpu_custom_call.1} parent=1 // pred_region
      _
    $region33: #{tpu_custom_call.1} parent=1 // pred_fallthru
      _
    // Predicated region
    $region34: #{tpu_custom_call.1} parent=1 // pred_check
      _
    $region35: #{tpu_custom_call.1} parent=1 // pred_check_branch
      %47 = sbr.rel (0) target = $region37
    $region36: #{tpu_custom_call.1} parent=1 // pred_region
      _
    $region37: #{tpu_custom_call.1} parent=1 // pred_fallthru
      _
    // Predicated region
    $region38: #{tpu_custom_call.1} parent=1 // pred_check
      _
    $region39: #{tpu_custom_call.1} parent=1 // pred_check_branch
      %49 = sbr.rel (0) target = $region41
    $region40: #{tpu_custom_call.1} parent=1 // pred_region
      _
    $region41: #{tpu_custom_call.1} parent=1 // pred_fallthru
      _
    // Predicated region
    $region42: #{tpu_custom_call.1} parent=1 // pred_check
      _
    $region43: #{tpu_custom_call.1} parent=1 // pred_check_branch
      %51 = sbr.rel (0) target = $region45
    $region44: #{tpu_custom_call.1} parent=1 // pred_region
      _
    $region45: #{tpu_custom_call.1} parent=1 // pred_fallthru
      _
    // Predicated region
    $region46: #{tpu_custom_call.1} parent=1 // pred_check
      _
    $region47: #{tpu_custom_call.1} parent=1 // pred_check_branch
      %53 = sbr.rel (0) target = $region49
    $region48: #{tpu_custom_call.1} parent=1 // pred_region
      _
    $region49: #{tpu_custom_call.1} parent=1 // pred_fallthru
      _
    // Predicated region
    $region50: #{tpu_custom_call.1} parent=1 // pred_check
      _
    $region51: #{tpu_custom_call.1} parent=1 // pred_check_branch
      %55 = sbr.rel (0) target = $region53
    $region52: #{tpu_custom_call.1} parent=1 // pred_region
      %56 = dma.done [#allocation4], 16
    $region53: #{tpu_custom_call.1} parent=1 // pred_fallthru
      _
    %57 = sfence
    %v58 = vld [vmem:[%s2] sm:$0xff]
    %v59 = vld [vmem:[%s2 + $0x8] sm:$0xff]
    %v60 = vld [vmem:[%s2 + $0x10] sm:$0xf]
    %v61 = vld [vmem:[%s3] sm:$0x1]
    %v62 = vld [vmem:[%s4] sm:$0xff]
    %v63 = vld [vmem:[%s4 + $0x8] sm:$0xff]
    %v64 = vld [vmem:[%s4 + $0x10] sm:$0xff]
    %v65 = vld [vmem:[%s4 + $0x18] sm:$0xff]
    %v66 = vld [vmem:[%s5] sm:$0x1]
    %v67 = vld [vmem:[%s6] sm:$0xff]
    %v68 = vld [vmem:[%s6 + $0x8] sm:$0xff]
    %v69 = vld [vmem:[%s6 + $0x10] sm:$0xff]
    %v70 = vld [vmem:[%s6 + $0x18] sm:$0xff]
    %v71 = vld [vmem:[%s6 + $0x20] sm:$0xff]
    %v72 = vld [vmem:[%s6 + $0x28] sm:$0xff]
    %v73 = vld [vmem:[%s6 + $0x30] sm:$0xff]
    %v74 = vld [vmem:[%s6 + $0x38] sm:$0xff]
    %v75 = vld [vmem:[%s6 + $0x40] sm:$0xff]
    %v76 = vld [vmem:[%s7] sm:$0x1]
    %v77 = vld [vmem:[%s8] sm:$0xff]
    %v78 = vld [vmem:[%s9] sm:$0x1]
    %v79 = vld [vmem:[%s10] sm:$0xff]
    %v80 = vld [vmem:[%s10 + $0x8] sm:$0xff]
    %v81 = vld [vmem:[%s10 + $0x10] sm:$0xff]
    %v82 = vld [vmem:[%s10 + $0x18] sm:$0xff]
    %v83 = vld [vmem:[%s11] sm:$0x1]
    %v84 = vld [vmem:[%s0] sm:$0x1]
    %vm85 = vcmask 162816
    %v87 = vsel %vm85, %v84, 0
    %vm89 = vcmask 1043456
    %v91 = vsel %vm89, %v60, 0
    %93 = vmatprep.subr.mxu0 0.0
    %94 = vmatpush1.msra.mxu0 %v58
    %95 = vmatprep.subr.mxu0 0.0
    %96 = vmatpush1.msra.mxu0 %v59
    %97 = vmatprep.subr.mxu0 0.0
    %98 = vmatpush1.msra.mxu0 %v91
    %99 = vmatprep.subr.mxu0 0.0
    %100 = vmatpush1.msra.mxu0 0.0
    %101 = vmatprep.subr.mxu0 0.0
    %102 = vmatpush1.msra.mxu0 0.0
    %103 = vmatprep.subr.mxu0 0.0
    %104 = vmatpush1.msra.mxu0 0.0
    %105 = vmatprep.subr.mxu0 0.0
    %106 = vmatpush1.msra.mxu0 0.0
    %107 = vmatprep.subr.mxu0 0.0
    %108 = vmatpush1.msra.mxu0 0.0
    %109 = vmatprep.subr.mxu0 0.0
    %110 = vmatpush1.msra.mxu0 0.0
    %111 = vmatprep.subr.mxu0 0.0
    %112 = vmatpush1.msra.mxu0 0.0
    %113 = vmatprep.subr.mxu0 0.0
    %114 = vmatpush1.msra.mxu0 0.0
    %115 = vmatprep.subr.mxu0 0.0
    %116 = vmatpush1.msra.mxu0 0.0
    %117 = vmatprep.subr.mxu0 0.0
    %118 = vmatpush1.msra.mxu0 0.0
    %119 = vmatprep.subr.mxu0 0.0
    %120 = vmatpush1.msra.mxu0 0.0
    %121 = vmatprep.subr.mxu0 0.0
    %122 = vmatpush1.msra.mxu0 0.0
    %123 = vmatprep.subr.mxu0 0.0
    %124 = vmatpush1.msra.mxu0 0.0
    %125 = vmatprep.subr.mxu0 0.0
    %126 = vmatpush1.msra.mxu0 0.0
    %127 = vmatprep.subr.mxu0 0.0
    %128 = vmatpush1.msra.mxu0 0.0
    %129 = vmatprep.subr.mxu0 0.0
    %130 = vmatpush1.msra.mxu0 0.0
    %131 = vmatprep.subr.mxu0 0.0
    %132 = vmatpush1.msra.mxu0 0.0
    %133 = vmatprep.subr.mxu0 0.0
    %134 = vmatpush1.msra.mxu0 0.0
    %135 = vmatprep.subr.mxu0 0.0
    %136 = vmatpush1.msra.mxu0 0.0
    %137 = vmatprep.subr.mxu0 0.0
    %138 = vmatpush1.msra.mxu0 0.0
    %139 = vmatprep.subr.mxu0 0.0
    %140 = vmatpush1.msra.mxu0 0.0
    %141 = vmatprep.subr.mxu0 0.0
    %142 = vmatpush1.msra.mxu0 0.0
    %143 = vmatprep.subr.mxu0 0.0
    %144 = vmatpush1.msra.mxu0 0.0
    %145 = vmatprep.subr.mxu0 0.0
    %146 = vmatpush1.msra.mxu0 0.0
    %147 = vmatprep.subr.mxu0 0.0
    %148 = vmatpush1.msra.mxu0 0.0
    %149 = vmatprep.subr.mxu0 0.0
    %150 = vmatpush1.msra.mxu0 0.0
    %151 = vmatprep.subr.mxu0 0.0
    %152 = vmatpush1.msra.mxu0 0.0
    %153 = vmatprep.subr.mxu0 0.0
    %154 = vmatpush1.msra.mxu0 0.0
    %155 = vmatprep.subr.mxu0 0.0
    %156 = vmatpush1.msra.mxu0 0.0
    %157 = vmatprep.mubr.f32.mxu0 0.0
    %158 = vmatmul.mubr.f32.gmra.mrb[0].mxu0 %v87
    %v159 = vpop.f32.mrb[0].mxu0
    %v160 = vadd.f32 %v61, %v159
    %v161 = vpop.f32.mrb[0].mxu0
    %162 = vdwg.mxu0
    %v163 = vtanh.pop %v160
    %vm164 = vcmask 261120
    %v166 = vsel %vm164, %v163, 0
    %168 = vmatprep.subr.mxu0 0.0
    %169 = vmatpush1.msra.mxu0 %v62
    %170 = vmatprep.subr.mxu0 0.0
    %171 = vmatpush1.msra.mxu0 %v63
    %172 = vmatprep.subr.mxu0 0.0
    %173 = vmatpush1.msra.mxu0 %v64
    %174 = vmatprep.subr.mxu0 0.0
    %175 = vmatpush1.msra.mxu0 %v65
    %176 = vmatprep.subr.mxu0 0.0
    %177 = vmatpush1.msra.mxu0 0.0
    %178 = vmatprep.subr.mxu0 0.0
    %179 = vmatpush1.msra.mxu0 0.0
    %180 = vmatprep.subr.mxu0 0.0
    %181 = vmatpush1.msra.mxu0 0.0
    %182 = vmatprep.subr.mxu0 0.0
    %183 = vmatpush1.msra.mxu0 0.0
    %184 = vmatprep.subr.mxu0 0.0
    %185 = vmatpush1.msra.mxu0 0.0
    %186 = vmatprep.subr.mxu0 0.0
    %187 = vmatpush1.msra.mxu0 0.0
    %188 = vmatprep.subr.mxu0 0.0
    %189 = vmatpush1.msra.mxu0 0.0
    %190 = vmatprep.subr.mxu0 0.0
    %191 = vmatpush1.msra.mxu0 0.0
    %192 = vmatprep.subr.mxu0 0.0
    %193 = vmatpush1.msra.mxu0 0.0
    %194 = vmatprep.subr.mxu0 0.0
    %195 = vmatpush1.msra.mxu0 0.0
    %196 = vmatprep.subr.mxu0 0.0
    %197 = vmatpush1.msra.mxu0 0.0
    %198 = vmatprep.subr.mxu0 0.0
    %199 = vmatpush1.msra.mxu0 0.0
    %200 = vmatprep.subr.mxu0 0.0
    %201 = vmatpush1.msra.mxu0 0.0
    %202 = vmatprep.subr.mxu0 0.0
    %203 = vmatpush1.msra.mxu0 0.0
    %204 = vmatprep.subr.mxu0 0.0
    %205 = vmatpush1.msra.mxu0 0.0
    %206 = vmatprep.subr.mxu0 0.0
    %207 = vmatpush1.msra.mxu0 0.0
    %208 = vmatprep.subr.mxu0 0.0
    %209 = vmatpush1.msra.mxu0 0.0
    %210 = vmatprep.subr.mxu0 0.0
    %211 = vmatpush1.msra.mxu0 0.0
    %212 = vmatprep.subr.mxu0 0.0
    %213 = vmatpush1.msra.mxu0 0.0
    %214 = vmatprep.subr.mxu0 0.0
    %215 = vmatpush1.msra.mxu0 0.0
    %216 = vmatprep.subr.mxu0 0.0
    %217 = vmatpush1.msra.mxu0 0.0
    %218 = vmatprep.subr.mxu0 0.0
    %219 = vmatpush1.msra.mxu0 0.0
    %220 = vmatprep.subr.mxu0 0.0
    %221 = vmatpush1.msra.mxu0 0.0
    %222 = vmatprep.subr.mxu0 0.0
    %223 = vmatpush1.msra.mxu0 0.0
    %224 = vmatprep.subr.mxu0 0.0
    %225 = vmatpush1.msra.mxu0 0.0
    %226 = vmatprep.subr.mxu0 0.0
    %227 = vmatpush1.msra.mxu0 0.0
    %228 = vmatprep.subr.mxu0 0.0
    %229 = vmatpush1.msra.mxu0 0.0
    %230 = vmatprep.subr.mxu0 0.0
    %231 = vmatpush1.msra.mxu0 0.0
    %232 = vmatprep.mubr.f32.mxu0 0.0
    %233 = vmatmul.mubr.f32.gmra.mrb[0].mxu0 %v166
    %v234 = vpop.f32.mrb[0].mxu0
    %v235 = vadd.f32 %v66, %v234
    %v236 = vpop.f32.mrb[0].mxu0
    %237 = vdwg.mxu0
    %v238 = vtanh.pop %v235
    %v239 = vlaneseq
    %v240 = vshrl.u32 %v239, 7
    %v241 = vlaneseq
    %v242 = vshrl.u32 %v241, 7
    %v243 = vsub.s32 0, %v242
    %v244 = vrot.slane %v238, %v243
    loop: start=1, step=1, limit=8
    $region54: #{tpu_custom_call.1} parent=1 // loop_pre_header
      _
    $region55: #{tpu_custom_call.1} parent=1 // loop_header
      %s246 = sphi 1, %s250
      %p247 = scmp.ge.s32.totalorder %s246, 8
      %v251 = vphi %v238, %v2786
      %v252 = vphi %v244, %v2793
    $region56: #{tpu_custom_call.1} parent=1 // loop_header_branch
      %249 = sbr.rel (%p247) target = $region60
    $region57: #{tpu_custom_call.1} parent=1 // loop_body
      %s253 = ssub.s32 %s246, 1
      %s254 = sld [smem:[#allocation2 + %s253]]
      %s255 = sld [smem:[#allocation2 + %s246]]
      %s256 = ssub.f32 %s255, %s254
      %v257 = vrcp.pop 4.0
      %s258 = vtos %v257
      %s259 = smul.f32 %s256, %s258
      %s260 = smul.f32 %s259, 0.5
      %v261 = vrcp.pop 6.0
      %s262 = vtos %v261
      %s263 = smul.f32 %s259, %s262
      %265 = vset.pattern.permute.xlu0 0
      %266 = vperm.xlu0 %265, %v251
      %v267 = vpop.permute.xlu0 %266
      %v269 = vmul.f32 %v267, %v251
      %270 = vset.pattern.permute.xlu0 1
      %271 = vperm.xlu0 %270, %v251
      %v272 = vpop.permute.xlu0 %271
      %v274 = vmul.f32 %v272, %v251
      %275 = vset.pattern.permute.xlu0 2
      %276 = vperm.xlu0 %275, %v251
      %v277 = vpop.permute.xlu0 %276
      %v279 = vmul.f32 %v277, %v251
      %280 = vset.pattern.permute.xlu0 3
      %281 = vperm.xlu0 %280, %v251
      %v282 = vpop.permute.xlu0 %281
      %v284 = vmul.f32 %v282, %v251
      %285 = vset.pattern.permute.xlu0 4
      %286 = vperm.xlu0 %285, %v251
      %v287 = vpop.permute.xlu0 %286
      %v289 = vmul.f32 %v287, %v251
      %290 = vset.pattern.permute.xlu0 5
      %291 = vperm.xlu0 %290, %v251
      %v292 = vpop.permute.xlu0 %291
      %v294 = vmul.f32 %v292, %v251
      %295 = vset.pattern.permute.xlu0 6
      %296 = vperm.xlu0 %295, %v251
      %v297 = vpop.permute.xlu0 %296
      %v299 = vmul.f32 %v297, %v251
      %300 = vset.pattern.permute.xlu0 7
      %301 = vperm.xlu0 %300, %v251
      %v302 = vpop.permute.xlu0 %301
      %v304 = vmul.f32 %v302, %v251
      %306 = vrot.lane.b32.xlu0 %v269, 8
      %v307 = vpop.permute.xlu0 %306
      %310 = vrot.lane.b32.xlu0 %v274, 16
      %v311 = vpop.permute.xlu0 %310
      %314 = vrot.lane.b32.xlu0 %v279, 24
      %v315 = vpop.permute.xlu0 %314
      %318 = vrot.lane.b32.xlu0 %v284, 32
      %v319 = vpop.permute.xlu0 %318
      %322 = vrot.lane.b32.xlu0 %v289, 40
      %v323 = vpop.permute.xlu0 %322
      %326 = vrot.lane.b32.xlu0 %v294, 48
      %v327 = vpop.permute.xlu0 %326
      %330 = vrot.lane.b32.xlu0 %v299, 56
      %v331 = vpop.permute.xlu0 %330
      %334 = vrot.lane.b32.xlu0 %v304, 64
      %v335 = vpop.permute.xlu0 %334
      %vm337 = vcmask 64512
      %v338 = vsel %vm337, %v251, %v307
      %vm339 = vcmask 130048
      %v340 = vsel %vm339, %v338, %v311
      %vm341 = vcmask 195584
      %v342 = vsel %vm341, %v340, %v315
      %v343 = vsel %vm164, %v342, %v319
      %vm344 = vcmask 326656
      %v345 = vsel %vm344, %v343, %v323
      %vm346 = vcmask 392192
      %v347 = vsel %vm346, %v345, %v327
      %vm348 = vcmask 457728
      %v349 = vsel %vm348, %v347, %v331
      %vm350 = vcmask 523264
      %v351 = vsel %vm350, %v349, %v335
      %vm352 = vcmask 588800
      %v354 = vsel %vm352, %v351, 0
      %356 = vmatprep.subr.mxu0 0.0
      %357 = vmatpush1.msra.mxu0 %v67
      %358 = vmatprep.subr.mxu0 0.0
      %359 = vmatpush1.msra.mxu0 %v68
      %360 = vmatprep.subr.mxu0 0.0
      %361 = vmatpush1.msra.mxu0 %v69
      %362 = vmatprep.subr.mxu0 0.0
      %363 = vmatpush1.msra.mxu0 %v70
      %364 = vmatprep.subr.mxu0 0.0
      %365 = vmatpush1.msra.mxu0 %v71
      %366 = vmatprep.subr.mxu0 0.0
      %367 = vmatpush1.msra.mxu0 %v72
      %368 = vmatprep.subr.mxu0 0.0
      %369 = vmatpush1.msra.mxu0 %v73
      %370 = vmatprep.subr.mxu0 0.0
      %371 = vmatpush1.msra.mxu0 %v74
      %372 = vmatprep.subr.mxu0 0.0
      %373 = vmatpush1.msra.mxu0 %v75
      %374 = vmatprep.subr.mxu0 0.0
      %375 = vmatpush1.msra.mxu0 0.0
      %376 = vmatprep.subr.mxu0 0.0
      %377 = vmatpush1.msra.mxu0 0.0
      %378 = vmatprep.subr.mxu0 0.0
      %379 = vmatpush1.msra.mxu0 0.0
      %380 = vmatprep.subr.mxu0 0.0
      %381 = vmatpush1.msra.mxu0 0.0
      %382 = vmatprep.subr.mxu0 0.0
      %383 = vmatpush1.msra.mxu0 0.0
      %384 = vmatprep.subr.mxu0 0.0
      %385 = vmatpush1.msra.mxu0 0.0
      %386 = vmatprep.subr.mxu0 0.0
      %387 = vmatpush1.msra.mxu0 0.0
      %388 = vmatprep.subr.mxu0 0.0
      %389 = vmatpush1.msra.mxu0 0.0
      %390 = vmatprep.subr.mxu0 0.0
      %391 = vmatpush1.msra.mxu0 0.0
      %392 = vmatprep.subr.mxu0 0.0
      %393 = vmatpush1.msra.mxu0 0.0
      %394 = vmatprep.subr.mxu0 0.0
      %395 = vmatpush1.msra.mxu0 0.0
      %396 = vmatprep.subr.mxu0 0.0
      %397 = vmatpush1.msra.mxu0 0.0
      %398 = vmatprep.subr.mxu0 0.0
      %399 = vmatpush1.msra.mxu0 0.0
      %400 = vmatprep.subr.mxu0 0.0
      %401 = vmatpush1.msra.mxu0 0.0
      %402 = vmatprep.subr.mxu0 0.0
      %403 = vmatpush1.msra.mxu0 0.0
      %404 = vmatprep.subr.mxu0 0.0
      %405 = vmatpush1.msra.mxu0 0.0
      %406 = vmatprep.subr.mxu0 0.0
      %407 = vmatpush1.msra.mxu0 0.0
      %408 = vmatprep.subr.mxu0 0.0
      %409 = vmatpush1.msra.mxu0 0.0
      %410 = vmatprep.subr.mxu0 0.0
      %411 = vmatpush1.msra.mxu0 0.0
      %412 = vmatprep.subr.mxu0 0.0
      %413 = vmatpush1.msra.mxu0 0.0
      %414 = vmatprep.subr.mxu0 0.0
      %415 = vmatpush1.msra.mxu0 0.0
      %416 = vmatprep.subr.mxu0 0.0
      %417 = vmatpush1.msra.mxu0 0.0
      %418 = vmatprep.subr.mxu0 0.0
      %419 = vmatpush1.msra.mxu0 0.0
      %420 = vmatprep.mubr.f32.mxu0 0.0
      %421 = vmatmul.mubr.f32.gmra.mrb[0].mxu0 %v354
      %v422 = vpop.f32.mrb[0].mxu0
      %v423 = vadd.f32 %v76, %v422
      %v424 = vpop.f32.mrb[0].mxu0
      %425 = vdwg.mxu0
      %v426 = vstv %s260
      %v427 = vmul.f32 %v426, %v423
      %v428 = vadd.f32 %v251, %v427
      %430 = vset.pattern.permute.xlu0 0
      %431 = vperm.xlu0 %430, %v428
      %v432 = vpop.permute.xlu0 %431
      %v434 = vmul.f32 %v432, %v428
      %435 = vset.pattern.permute.xlu0 1
      %436 = vperm.xlu0 %435, %v428
      %v437 = vpop.permute.xlu0 %436
      %v439 = vmul.f32 %v437, %v428
      %440 = vset.pattern.permute.xlu0 2
      %441 = vperm.xlu0 %440, %v428
      %v442 = vpop.permute.xlu0 %441
      %v444 = vmul.f32 %v442, %v428
      %445 = vset.pattern.permute.xlu0 3
      %446 = vperm.xlu0 %445, %v428
      %v447 = vpop.permute.xlu0 %446
      %v449 = vmul.f32 %v447, %v428
      %450 = vset.pattern.permute.xlu0 4
      %451 = vperm.xlu0 %450, %v428
      %v452 = vpop.permute.xlu0 %451
      %v454 = vmul.f32 %v452, %v428
      %455 = vset.pattern.permute.xlu0 5
      %456 = vperm.xlu0 %455, %v428
      %v457 = vpop.permute.xlu0 %456
      %v459 = vmul.f32 %v457, %v428
      %460 = vset.pattern.permute.xlu0 6
      %461 = vperm.xlu0 %460, %v428
      %v462 = vpop.permute.xlu0 %461
      %v464 = vmul.f32 %v462, %v428
      %465 = vset.pattern.permute.xlu0 7
      %466 = vperm.xlu0 %465, %v428
      %v467 = vpop.permute.xlu0 %466
      %v469 = vmul.f32 %v467, %v428
      %471 = vrot.lane.b32.xlu0 %v434, 8
      %v472 = vpop.permute.xlu0 %471
      %475 = vrot.lane.b32.xlu0 %v439, 16
      %v476 = vpop.permute.xlu0 %475
      %479 = vrot.lane.b32.xlu0 %v444, 24
      %v480 = vpop.permute.xlu0 %479
      %483 = vrot.lane.b32.xlu0 %v449, 32
      %v484 = vpop.permute.xlu0 %483
      %487 = vrot.lane.b32.xlu0 %v454, 40
      %v488 = vpop.permute.xlu0 %487
      %491 = vrot.lane.b32.xlu0 %v459, 48
      %v492 = vpop.permute.xlu0 %491
      %495 = vrot.lane.b32.xlu0 %v464, 56
      %v496 = vpop.permute.xlu0 %495
      %499 = vrot.lane.b32.xlu0 %v469, 64
      %v500 = vpop.permute.xlu0 %499
      %v502 = vsel %vm337, %v428, %v472
      %v503 = vsel %vm339, %v502, %v476
      %v504 = vsel %vm341, %v503, %v480
      %v505 = vsel %vm164, %v504, %v484
      %v506 = vsel %vm344, %v505, %v488
      %v507 = vsel %vm346, %v506, %v492
      %v508 = vsel %vm348, %v507, %v496
      %v509 = vsel %vm350, %v508, %v500
      %v511 = vsel %vm352, %v509, 0
      %513 = vmatprep.subr.mxu0 0.0
      %514 = vmatpush1.msra.mxu0 %v67
      %515 = vmatprep.subr.mxu0 0.0
      %516 = vmatpush1.msra.mxu0 %v68
      %517 = vmatprep.subr.mxu0 0.0
      %518 = vmatpush1.msra.mxu0 %v69
      %519 = vmatprep.subr.mxu0 0.0
      %520 = vmatpush1.msra.mxu0 %v70
      %521 = vmatprep.subr.mxu0 0.0
      %522 = vmatpush1.msra.mxu0 %v71
      %523 = vmatprep.subr.mxu0 0.0
      %524 = vmatpush1.msra.mxu0 %v72
      %525 = vmatprep.subr.mxu0 0.0
      %526 = vmatpush1.msra.mxu0 %v73
      %527 = vmatprep.subr.mxu0 0.0
      %528 = vmatpush1.msra.mxu0 %v74
      %529 = vmatprep.subr.mxu0 0.0
      %530 = vmatpush1.msra.mxu0 %v75
      %531 = vmatprep.subr.mxu0 0.0
      %532 = vmatpush1.msra.mxu0 0.0
      %533 = vmatprep.subr.mxu0 0.0
      %534 = vmatpush1.msra.mxu0 0.0
      %535 = vmatprep.subr.mxu0 0.0
      %536 = vmatpush1.msra.mxu0 0.0
      %537 = vmatprep.subr.mxu0 0.0
      %538 = vmatpush1.msra.mxu0 0.0
      %539 = vmatprep.subr.mxu0 0.0
      %540 = vmatpush1.msra.mxu0 0.0
      %541 = vmatprep.subr.mxu0 0.0
      %542 = vmatpush1.msra.mxu0 0.0
      %543 = vmatprep.subr.mxu0 0.0
      %544 = vmatpush1.msra.mxu0 0.0
      %545 = vmatprep.subr.mxu0 0.0
      %546 = vmatpush1.msra.mxu0 0.0
      %547 = vmatprep.subr.mxu0 0.0
      %548 = vmatpush1.msra.mxu0 0.0
      %549 = vmatprep.subr.mxu0 0.0
      %550 = vmatpush1.msra.mxu0 0.0
      %551 = vmatprep.subr.mxu0 0.0
      %552 = vmatpush1.msra.mxu0 0.0
      %553 = vmatprep.subr.mxu0 0.0
      %554 = vmatpush1.msra.mxu0 0.0
      %555 = vmatprep.subr.mxu0 0.0
      %556 = vmatpush1.msra.mxu0 0.0
      %557 = vmatprep.subr.mxu0 0.0
      %558 = vmatpush1.msra.mxu0 0.0
      %559 = vmatprep.subr.mxu0 0.0
      %560 = vmatpush1.msra.mxu0 0.0
      %561 = vmatprep.subr.mxu0 0.0
      %562 = vmatpush1.msra.mxu0 0.0
      %563 = vmatprep.subr.mxu0 0.0
      %564 = vmatpush1.msra.mxu0 0.0
      %565 = vmatprep.subr.mxu0 0.0
      %566 = vmatpush1.msra.mxu0 0.0
      %567 = vmatprep.subr.mxu0 0.0
      %568 = vmatpush1.msra.mxu0 0.0
      %569 = vmatprep.subr.mxu0 0.0
      %570 = vmatpush1.msra.mxu0 0.0
      %571 = vmatprep.subr.mxu0 0.0
      %572 = vmatpush1.msra.mxu0 0.0
      %573 = vmatprep.subr.mxu0 0.0
      %574 = vmatpush1.msra.mxu0 0.0
      %575 = vmatprep.subr.mxu0 0.0
      %576 = vmatpush1.msra.mxu0 0.0
      %577 = vmatprep.mubr.f32.mxu0 0.0
      %578 = vmatmul.mubr.f32.gmra.mrb[0].mxu0 %v511
      %v579 = vpop.f32.mrb[0].mxu0
      %v580 = vadd.f32 %v76, %v579
      %v581 = vpop.f32.mrb[0].mxu0
      %582 = vdwg.mxu0
      %v583 = vmul.f32 %v426, %v580
      %v584 = vadd.f32 %v251, %v583
      %586 = vset.pattern.permute.xlu0 0
      %587 = vperm.xlu0 %586, %v584
      %v588 = vpop.permute.xlu0 %587
      %v590 = vmul.f32 %v588, %v584
      %591 = vset.pattern.permute.xlu0 1
      %592 = vperm.xlu0 %591, %v584
      %v593 = vpop.permute.xlu0 %592
      %v595 = vmul.f32 %v593, %v584
      %596 = vset.pattern.permute.xlu0 2
      %597 = vperm.xlu0 %596, %v584
      %v598 = vpop.permute.xlu0 %597
      %v600 = vmul.f32 %v598, %v584
      %601 = vset.pattern.permute.xlu0 3
      %602 = vperm.xlu0 %601, %v584
      %v603 = vpop.permute.xlu0 %602
      %v605 = vmul.f32 %v603, %v584
      %606 = vset.pattern.permute.xlu0 4
      %607 = vperm.xlu0 %606, %v584
      %v608 = vpop.permute.xlu0 %607
      %v610 = vmul.f32 %v608, %v584
      %611 = vset.pattern.permute.xlu0 5
      %612 = vperm.xlu0 %611, %v584
      %v613 = vpop.permute.xlu0 %612
      %v615 = vmul.f32 %v613, %v584
      %616 = vset.pattern.permute.xlu0 6
      %617 = vperm.xlu0 %616, %v584
      %v618 = vpop.permute.xlu0 %617
      %v620 = vmul.f32 %v618, %v584
      %621 = vset.pattern.permute.xlu0 7
      %622 = vperm.xlu0 %621, %v584
      %v623 = vpop.permute.xlu0 %622
      %v625 = vmul.f32 %v623, %v584
      %627 = vrot.lane.b32.xlu0 %v590, 8
      %v628 = vpop.permute.xlu0 %627
      %631 = vrot.lane.b32.xlu0 %v595, 16
      %v632 = vpop.permute.xlu0 %631
      %635 = vrot.lane.b32.xlu0 %v600, 24
      %v636 = vpop.permute.xlu0 %635
      %639 = vrot.lane.b32.xlu0 %v605, 32
      %v640 = vpop.permute.xlu0 %639
      %643 = vrot.lane.b32.xlu0 %v610, 40
      %v644 = vpop.permute.xlu0 %643
      %647 = vrot.lane.b32.xlu0 %v615, 48
      %v648 = vpop.permute.xlu0 %647
      %651 = vrot.lane.b32.xlu0 %v620, 56
      %v652 = vpop.permute.xlu0 %651
      %655 = vrot.lane.b32.xlu0 %v625, 64
      %v656 = vpop.permute.xlu0 %655
      %v658 = vsel %vm337, %v584, %v628
      %v659 = vsel %vm339, %v658, %v632
      %v660 = vsel %vm341, %v659, %v636
      %v661 = vsel %vm164, %v660, %v640
      %v662 = vsel %vm344, %v661, %v644
      %v663 = vsel %vm346, %v662, %v648
      %v664 = vsel %vm348, %v663, %v652
      %v665 = vsel %vm350, %v664, %v656
      %v667 = vsel %vm352, %v665, 0
      %669 = vmatprep.subr.mxu0 0.0
      %670 = vmatpush1.msra.mxu0 %v67
      %671 = vmatprep.subr.mxu0 0.0
      %672 = vmatpush1.msra.mxu0 %v68
      %673 = vmatprep.subr.mxu0 0.0
      %674 = vmatpush1.msra.mxu0 %v69
      %675 = vmatprep.subr.mxu0 0.0
      %676 = vmatpush1.msra.mxu0 %v70
      %677 = vmatprep.subr.mxu0 0.0
      %678 = vmatpush1.msra.mxu0 %v71
      %679 = vmatprep.subr.mxu0 0.0
      %680 = vmatpush1.msra.mxu0 %v72
      %681 = vmatprep.subr.mxu0 0.0
      %682 = vmatpush1.msra.mxu0 %v73
      %683 = vmatprep.subr.mxu0 0.0
      %684 = vmatpush1.msra.mxu0 %v74
      %685 = vmatprep.subr.mxu0 0.0
      %686 = vmatpush1.msra.mxu0 %v75
      %687 = vmatprep.subr.mxu0 0.0
      %688 = vmatpush1.msra.mxu0 0.0
      %689 = vmatprep.subr.mxu0 0.0
      %690 = vmatpush1.msra.mxu0 0.0
      %691 = vmatprep.subr.mxu0 0.0
      %692 = vmatpush1.msra.mxu0 0.0
      %693 = vmatprep.subr.mxu0 0.0
      %694 = vmatpush1.msra.mxu0 0.0
      %695 = vmatprep.subr.mxu0 0.0
      %696 = vmatpush1.msra.mxu0 0.0
      %697 = vmatprep.subr.mxu0 0.0
      %698 = vmatpush1.msra.mxu0 0.0
      %699 = vmatprep.subr.mxu0 0.0
      %700 = vmatpush1.msra.mxu0 0.0
      %701 = vmatprep.subr.mxu0 0.0
      %702 = vmatpush1.msra.mxu0 0.0
      %703 = vmatprep.subr.mxu0 0.0
      %704 = vmatpush1.msra.mxu0 0.0
      %705 = vmatprep.subr.mxu0 0.0
      %706 = vmatpush1.msra.mxu0 0.0
      %707 = vmatprep.subr.mxu0 0.0
      %708 = vmatpush1.msra.mxu0 0.0
      %709 = vmatprep.subr.mxu0 0.0
      %710 = vmatpush1.msra.mxu0 0.0
      %711 = vmatprep.subr.mxu0 0.0
      %712 = vmatpush1.msra.mxu0 0.0
      %713 = vmatprep.subr.mxu0 0.0
      %714 = vmatpush1.msra.mxu0 0.0
      %715 = vmatprep.subr.mxu0 0.0
      %716 = vmatpush1.msra.mxu0 0.0
      %717 = vmatprep.subr.mxu0 0.0
      %718 = vmatpush1.msra.mxu0 0.0
      %719 = vmatprep.subr.mxu0 0.0
      %720 = vmatpush1.msra.mxu0 0.0
      %721 = vmatprep.subr.mxu0 0.0
      %722 = vmatpush1.msra.mxu0 0.0
      %723 = vmatprep.subr.mxu0 0.0
      %724 = vmatpush1.msra.mxu0 0.0
      %725 = vmatprep.subr.mxu0 0.0
      %726 = vmatpush1.msra.mxu0 0.0
      %727 = vmatprep.subr.mxu0 0.0
      %728 = vmatpush1.msra.mxu0 0.0
      %729 = vmatprep.subr.mxu0 0.0
      %730 = vmatpush1.msra.mxu0 0.0
      %731 = vmatprep.subr.mxu0 0.0
      %732 = vmatpush1.msra.mxu0 0.0
      %733 = vmatprep.mubr.f32.mxu0 0.0
      %734 = vmatmul.mubr.f32.gmra.mrb[0].mxu0 %v667
      %v735 = vpop.f32.mrb[0].mxu0
      %v736 = vadd.f32 %v76, %v735
      %v737 = vpop.f32.mrb[0].mxu0
      %738 = vdwg.mxu0
      %v739 = vstv %s259
      %v740 = vmul.f32 %v739, %v736
      %v741 = vadd.f32 %v251, %v740
      %743 = vset.pattern.permute.xlu0 0
      %744 = vperm.xlu0 %743, %v741
      %v745 = vpop.permute.xlu0 %744
      %v747 = vmul.f32 %v745, %v741
      %748 = vset.pattern.permute.xlu0 1
      %749 = vperm.xlu0 %748, %v741
      %v750 = vpop.permute.xlu0 %749
      %v752 = vmul.f32 %v750, %v741
      %753 = vset.pattern.permute.xlu0 2
      %754 = vperm.xlu0 %753, %v741
      %v755 = vpop.permute.xlu0 %754
      %v757 = vmul.f32 %v755, %v741
      %758 = vset.pattern.permute.xlu0 3
      %759 = vperm.xlu0 %758, %v741
      %v760 = vpop.permute.xlu0 %759
      %v762 = vmul.f32 %v760, %v741
      %763 = vset.pattern.permute.xlu0 4
      %764 = vperm.xlu0 %763, %v741
      %v765 = vpop.permute.xlu0 %764
      %v767 = vmul.f32 %v765, %v741
      %768 = vset.pattern.permute.xlu0 5
      %769 = vperm.xlu0 %768, %v741
      %v770 = vpop.permute.xlu0 %769
      %v772 = vmul.f32 %v770, %v741
      %773 = vset.pattern.permute.xlu0 6
      %774 = vperm.xlu0 %773, %v741
      %v775 = vpop.permute.xlu0 %774
      %v777 = vmul.f32 %v775, %v741
      %778 = vset.pattern.permute.xlu0 7
      %779 = vperm.xlu0 %778, %v741
      %v780 = vpop.permute.xlu0 %779
      %v782 = vmul.f32 %v780, %v741
      %784 = vrot.lane.b32.xlu0 %v747, 8
      %v785 = vpop.permute.xlu0 %784
      %788 = vrot.lane.b32.xlu0 %v752, 16
      %v789 = vpop.permute.xlu0 %788
      %792 = vrot.lane.b32.xlu0 %v757, 24
      %v793 = vpop.permute.xlu0 %792
      %796 = vrot.lane.b32.xlu0 %v762, 32
      %v797 = vpop.permute.xlu0 %796
      %800 = vrot.lane.b32.xlu0 %v767, 40
      %v801 = vpop.permute.xlu0 %800
      %804 = vrot.lane.b32.xlu0 %v772, 48
      %v805 = vpop.permute.xlu0 %804
      %808 = vrot.lane.b32.xlu0 %v777, 56
      %v809 = vpop.permute.xlu0 %808
      %812 = vrot.lane.b32.xlu0 %v782, 64
      %v813 = vpop.permute.xlu0 %812
      %v815 = vsel %vm337, %v741, %v785
      %v816 = vsel %vm339, %v815, %v789
      %v817 = vsel %vm341, %v816, %v793
      %v818 = vsel %vm164, %v817, %v797
      %v819 = vsel %vm344, %v818, %v801
      %v820 = vsel %vm346, %v819, %v805
      %v821 = vsel %vm348, %v820, %v809
      %v822 = vsel %vm350, %v821, %v813
      %v824 = vsel %vm352, %v822, 0
      %826 = vmatprep.subr.mxu0 0.0
      %827 = vmatpush1.msra.mxu0 %v67
      %828 = vmatprep.subr.mxu0 0.0
      %829 = vmatpush1.msra.mxu0 %v68
      %830 = vmatprep.subr.mxu0 0.0
      %831 = vmatpush1.msra.mxu0 %v69
      %832 = vmatprep.subr.mxu0 0.0
      %833 = vmatpush1.msra.mxu0 %v70
      %834 = vmatprep.subr.mxu0 0.0
      %835 = vmatpush1.msra.mxu0 %v71
      %836 = vmatprep.subr.mxu0 0.0
      %837 = vmatpush1.msra.mxu0 %v72
      %838 = vmatprep.subr.mxu0 0.0
      %839 = vmatpush1.msra.mxu0 %v73
      %840 = vmatprep.subr.mxu0 0.0
      %841 = vmatpush1.msra.mxu0 %v74
      %842 = vmatprep.subr.mxu0 0.0
      %843 = vmatpush1.msra.mxu0 %v75
      %844 = vmatprep.subr.mxu0 0.0
      %845 = vmatpush1.msra.mxu0 0.0
      %846 = vmatprep.subr.mxu0 0.0
      %847 = vmatpush1.msra.mxu0 0.0
      %848 = vmatprep.subr.mxu0 0.0
      %849 = vmatpush1.msra.mxu0 0.0
      %850 = vmatprep.subr.mxu0 0.0
      %851 = vmatpush1.msra.mxu0 0.0
      %852 = vmatprep.subr.mxu0 0.0
      %853 = vmatpush1.msra.mxu0 0.0
      %854 = vmatprep.subr.mxu0 0.0
      %855 = vmatpush1.msra.mxu0 0.0
      %856 = vmatprep.subr.mxu0 0.0
      %857 = vmatpush1.msra.mxu0 0.0
      %858 = vmatprep.subr.mxu0 0.0
      %859 = vmatpush1.msra.mxu0 0.0
      %860 = vmatprep.subr.mxu0 0.0
      %861 = vmatpush1.msra.mxu0 0.0
      %862 = vmatprep.subr.mxu0 0.0
      %863 = vmatpush1.msra.mxu0 0.0
      %864 = vmatprep.subr.mxu0 0.0
      %865 = vmatpush1.msra.mxu0 0.0
      %866 = vmatprep.subr.mxu0 0.0
      %867 = vmatpush1.msra.mxu0 0.0
      %868 = vmatprep.subr.mxu0 0.0
      %869 = vmatpush1.msra.mxu0 0.0
      %870 = vmatprep.subr.mxu0 0.0
      %871 = vmatpush1.msra.mxu0 0.0
      %872 = vmatprep.subr.mxu0 0.0
      %873 = vmatpush1.msra.mxu0 0.0
      %874 = vmatprep.subr.mxu0 0.0
      %875 = vmatpush1.msra.mxu0 0.0
      %876 = vmatprep.subr.mxu0 0.0
      %877 = vmatpush1.msra.mxu0 0.0
      %878 = vmatprep.subr.mxu0 0.0
      %879 = vmatpush1.msra.mxu0 0.0
      %880 = vmatprep.subr.mxu0 0.0
      %881 = vmatpush1.msra.mxu0 0.0
      %882 = vmatprep.subr.mxu0 0.0
      %883 = vmatpush1.msra.mxu0 0.0
      %884 = vmatprep.subr.mxu0 0.0
      %885 = vmatpush1.msra.mxu0 0.0
      %886 = vmatprep.subr.mxu0 0.0
      %887 = vmatpush1.msra.mxu0 0.0
      %888 = vmatprep.subr.mxu0 0.0
      %889 = vmatpush1.msra.mxu0 0.0
      %890 = vmatprep.mubr.f32.mxu0 0.0
      %891 = vmatmul.mubr.f32.gmra.mrb[0].mxu0 %v824
      %v892 = vpop.f32.mrb[0].mxu0
      %v893 = vadd.f32 %v76, %v892
      %v894 = vpop.f32.mrb[0].mxu0
      %895 = vdwg.mxu0
      %v896 = vadd.f32 %v580, %v736
      %v897 = vmul.f32 %v896, 2.0
      %v898 = vadd.f32 %v423, %v897
      %v899 = vadd.f32 %v898, %v893
      %v900 = vstv %s263
      %v901 = vmul.f32 %v900, %v899
      %v902 = vadd.f32 %v251, %v901
      %904 = vset.pattern.permute.xlu0 0
      %905 = vperm.xlu0 %904, %v902
      %v906 = vpop.permute.xlu0 %905
      %v908 = vmul.f32 %v906, %v902
      %909 = vset.pattern.permute.xlu0 1
      %910 = vperm.xlu0 %909, %v902
      %v911 = vpop.permute.xlu0 %910
      %v913 = vmul.f32 %v911, %v902
      %914 = vset.pattern.permute.xlu0 2
      %915 = vperm.xlu0 %914, %v902
      %v916 = vpop.permute.xlu0 %915
      %v918 = vmul.f32 %v916, %v902
      %919 = vset.pattern.permute.xlu0 3
      %920 = vperm.xlu0 %919, %v902
      %v921 = vpop.permute.xlu0 %920
      %v923 = vmul.f32 %v921, %v902
      %924 = vset.pattern.permute.xlu0 4
      %925 = vperm.xlu0 %924, %v902
      %v926 = vpop.permute.xlu0 %925
      %v928 = vmul.f32 %v926, %v902
      %929 = vset.pattern.permute.xlu0 5
      %930 = vperm.xlu0 %929, %v902
      %v931 = vpop.permute.xlu0 %930
      %v933 = vmul.f32 %v931, %v902
      %934 = vset.pattern.permute.xlu0 6
      %935 = vperm.xlu0 %934, %v902
      %v936 = vpop.permute.xlu0 %935
      %v938 = vmul.f32 %v936, %v902
      %939 = vset.pattern.permute.xlu0 7
      %940 = vperm.xlu0 %939, %v902
      %v941 = vpop.permute.xlu0 %940
      %v943 = vmul.f32 %v941, %v902
      %945 = vrot.lane.b32.xlu0 %v908, 8
      %v946 = vpop.permute.xlu0 %945
      %949 = vrot.lane.b32.xlu0 %v913, 16
      %v950 = vpop.permute.xlu0 %949
      %953 = vrot.lane.b32.xlu0 %v918, 24
      %v954 = vpop.permute.xlu0 %953
      %957 = vrot.lane.b32.xlu0 %v923, 32
      %v958 = vpop.permute.xlu0 %957
      %961 = vrot.lane.b32.xlu0 %v928, 40
      %v962 = vpop.permute.xlu0 %961
      %965 = vrot.lane.b32.xlu0 %v933, 48
      %v966 = vpop.permute.xlu0 %965
      %969 = vrot.lane.b32.xlu0 %v938, 56
      %v970 = vpop.permute.xlu0 %969
      %973 = vrot.lane.b32.xlu0 %v943, 64
      %v974 = vpop.permute.xlu0 %973
      %v976 = vsel %vm337, %v902, %v946
      %v977 = vsel %vm339, %v976, %v950
      %v978 = vsel %vm341, %v977, %v954
      %v979 = vsel %vm164, %v978, %v958
      %v980 = vsel %vm344, %v979, %v962
      %v981 = vsel %vm346, %v980, %v966
      %v982 = vsel %vm348, %v981, %v970
      %v983 = vsel %vm350, %v982, %v974
      %v985 = vsel %vm352, %v983, 0
      %987 = vmatprep.subr.mxu0 0.0
      %988 = vmatpush1.msra.mxu0 %v67
      %989 = vmatprep.subr.mxu0 0.0
      %990 = vmatpush1.msra.mxu0 %v68
      %991 = vmatprep.subr.mxu0 0.0
      %992 = vmatpush1.msra.mxu0 %v69
      %993 = vmatprep.subr.mxu0 0.0
      %994 = vmatpush1.msra.mxu0 %v70
      %995 = vmatprep.subr.mxu0 0.0
      %996 = vmatpush1.msra.mxu0 %v71
      %997 = vmatprep.subr.mxu0 0.0
      %998 = vmatpush1.msra.mxu0 %v72
      %999 = vmatprep.subr.mxu0 0.0
      %1000 = vmatpush1.msra.mxu0 %v73
      %1001 = vmatprep.subr.mxu0 0.0
      %1002 = vmatpush1.msra.mxu0 %v74
      %1003 = vmatprep.subr.mxu0 0.0
      %1004 = vmatpush1.msra.mxu0 %v75
      %1005 = vmatprep.subr.mxu0 0.0
      %1006 = vmatpush1.msra.mxu0 0.0
      %1007 = vmatprep.subr.mxu0 0.0
      %1008 = vmatpush1.msra.mxu0 0.0
      %1009 = vmatprep.subr.mxu0 0.0
      %1010 = vmatpush1.msra.mxu0 0.0
      %1011 = vmatprep.subr.mxu0 0.0
      %1012 = vmatpush1.msra.mxu0 0.0
      %1013 = vmatprep.subr.mxu0 0.0
      %1014 = vmatpush1.msra.mxu0 0.0
      %1015 = vmatprep.subr.mxu0 0.0
      %1016 = vmatpush1.msra.mxu0 0.0
      %1017 = vmatprep.subr.mxu0 0.0
      %1018 = vmatpush1.msra.mxu0 0.0
      %1019 = vmatprep.subr.mxu0 0.0
      %1020 = vmatpush1.msra.mxu0 0.0
      %1021 = vmatprep.subr.mxu0 0.0
      %1022 = vmatpush1.msra.mxu0 0.0
      %1023 = vmatprep.subr.mxu0 0.0
      %1024 = vmatpush1.msra.mxu0 0.0
      %1025 = vmatprep.subr.mxu0 0.0
      %1026 = vmatpush1.msra.mxu0 0.0
      %1027 = vmatprep.subr.mxu0 0.0
      %1028 = vmatpush1.msra.mxu0 0.0
      %1029 = vmatprep.subr.mxu0 0.0
      %1030 = vmatpush1.msra.mxu0 0.0
      %1031 = vmatprep.subr.mxu0 0.0
      %1032 = vmatpush1.msra.mxu0 0.0
      %1033 = vmatprep.subr.mxu0 0.0
      %1034 = vmatpush1.msra.mxu0 0.0
      %1035 = vmatprep.subr.mxu0 0.0
      %1036 = vmatpush1.msra.mxu0 0.0
      %1037 = vmatprep.subr.mxu0 0.0
      %1038 = vmatpush1.msra.mxu0 0.0
      %1039 = vmatprep.subr.mxu0 0.0
      %1040 = vmatpush1.msra.mxu0 0.0
      %1041 = vmatprep.subr.mxu0 0.0
      %1042 = vmatpush1.msra.mxu0 0.0
      %1043 = vmatprep.subr.mxu0 0.0
      %1044 = vmatpush1.msra.mxu0 0.0
      %1045 = vmatprep.subr.mxu0 0.0
      %1046 = vmatpush1.msra.mxu0 0.0
      %1047 = vmatprep.subr.mxu0 0.0
      %1048 = vmatpush1.msra.mxu0 0.0
      %1049 = vmatprep.subr.mxu0 0.0
      %1050 = vmatpush1.msra.mxu0 0.0
      %1051 = vmatprep.mubr.f32.mxu0 0.0
      %1052 = vmatmul.mubr.f32.gmra.mrb[0].mxu0 %v985
      %v1053 = vpop.f32.mrb[0].mxu0
      %v1054 = vadd.f32 %v76, %v1053
      %v1055 = vpop.f32.mrb[0].mxu0
      %1056 = vdwg.mxu0
      %v1057 = vmul.f32 %v426, %v1054
      %v1058 = vadd.f32 %v902, %v1057
      %1060 = vset.pattern.permute.xlu0 0
      %1061 = vperm.xlu0 %1060, %v1058
      %v1062 = vpop.permute.xlu0 %1061
      %v1064 = vmul.f32 %v1062, %v1058
      %1065 = vset.pattern.permute.xlu0 1
      %1066 = vperm.xlu0 %1065, %v1058
      %v1067 = vpop.permute.xlu0 %1066
      %v1069 = vmul.f32 %v1067, %v1058
      %1070 = vset.pattern.permute.xlu0 2
      %1071 = vperm.xlu0 %1070, %v1058
      %v1072 = vpop.permute.xlu0 %1071
      %v1074 = vmul.f32 %v1072, %v1058
      %1075 = vset.pattern.permute.xlu0 3
      %1076 = vperm.xlu0 %1075, %v1058
      %v1077 = vpop.permute.xlu0 %1076
      %v1079 = vmul.f32 %v1077, %v1058
      %1080 = vset.pattern.permute.xlu0 4
      %1081 = vperm.xlu0 %1080, %v1058
      %v1082 = vpop.permute.xlu0 %1081
      %v1084 = vmul.f32 %v1082, %v1058
      %1085 = vset.pattern.permute.xlu0 5
      %1086 = vperm.xlu0 %1085, %v1058
      %v1087 = vpop.permute.xlu0 %1086
      %v1089 = vmul.f32 %v1087, %v1058
      %1090 = vset.pattern.permute.xlu0 6
      %1091 = vperm.xlu0 %1090, %v1058
      %v1092 = vpop.permute.xlu0 %1091
      %v1094 = vmul.f32 %v1092, %v1058
      %1095 = vset.pattern.permute.xlu0 7
      %1096 = vperm.xlu0 %1095, %v1058
      %v1097 = vpop.permute.xlu0 %1096
      %v1099 = vmul.f32 %v1097, %v1058
      %1101 = vrot.lane.b32.xlu0 %v1064, 8
      %v1102 = vpop.permute.xlu0 %1101
      %1105 = vrot.lane.b32.xlu0 %v1069, 16
      %v1106 = vpop.permute.xlu0 %1105
      %1109 = vrot.lane.b32.xlu0 %v1074, 24
      %v1110 = vpop.permute.xlu0 %1109
      %1113 = vrot.lane.b32.xlu0 %v1079, 32
      %v1114 = vpop.permute.xlu0 %1113
      %1117 = vrot.lane.b32.xlu0 %v1084, 40
      %v1118 = vpop.permute.xlu0 %1117
      %1121 = vrot.lane.b32.xlu0 %v1089, 48
      %v1122 = vpop.permute.xlu0 %1121
      %1125 = vrot.lane.b32.xlu0 %v1094, 56
      %v1126 = vpop.permute.xlu0 %1125
      %1129 = vrot.lane.b32.xlu0 %v1099, 64
      %v1130 = vpop.permute.xlu0 %1129
      %v1132 = vsel %vm337, %v1058, %v1102
      %v1133 = vsel %vm339, %v1132, %v1106
      %v1134 = vsel %vm341, %v1133, %v1110
      %v1135 = vsel %vm164, %v1134, %v1114
      %v1136 = vsel %vm344, %v1135, %v1118
      %v1137 = vsel %vm346, %v1136, %v1122
      %v1138 = vsel %vm348, %v1137, %v1126
      %v1139 = vsel %vm350, %v1138, %v1130
      %v1141 = vsel %vm352, %v1139, 0
      %1143 = vmatprep.subr.mxu0 0.0
      %1144 = vmatpush1.msra.mxu0 %v67
      %1145 = vmatprep.subr.mxu0 0.0
      %1146 = vmatpush1.msra.mxu0 %v68
      %1147 = vmatprep.subr.mxu0 0.0
      %1148 = vmatpush1.msra.mxu0 %v69
      %1149 = vmatprep.subr.mxu0 0.0
      %1150 = vmatpush1.msra.mxu0 %v70
      %1151 = vmatprep.subr.mxu0 0.0
      %1152 = vmatpush1.msra.mxu0 %v71
      %1153 = vmatprep.subr.mxu0 0.0
      %1154 = vmatpush1.msra.mxu0 %v72
      %1155 = vmatprep.subr.mxu0 0.0
      %1156 = vmatpush1.msra.mxu0 %v73
      %1157 = vmatprep.subr.mxu0 0.0
      %1158 = vmatpush1.msra.mxu0 %v74
      %1159 = vmatprep.subr.mxu0 0.0
      %1160 = vmatpush1.msra.mxu0 %v75
      %1161 = vmatprep.subr.mxu0 0.0
      %1162 = vmatpush1.msra.mxu0 0.0
      %1163 = vmatprep.subr.mxu0 0.0
      %1164 = vmatpush1.msra.mxu0 0.0
      %1165 = vmatprep.subr.mxu0 0.0
      %1166 = vmatpush1.msra.mxu0 0.0
      %1167 = vmatprep.subr.mxu0 0.0
      %1168 = vmatpush1.msra.mxu0 0.0
      %1169 = vmatprep.subr.mxu0 0.0
      %1170 = vmatpush1.msra.mxu0 0.0
      %1171 = vmatprep.subr.mxu0 0.0
      %1172 = vmatpush1.msra.mxu0 0.0
      %1173 = vmatprep.subr.mxu0 0.0
      %1174 = vmatpush1.msra.mxu0 0.0
      %1175 = vmatprep.subr.mxu0 0.0
      %1176 = vmatpush1.msra.mxu0 0.0
      %1177 = vmatprep.subr.mxu0 0.0
      %1178 = vmatpush1.msra.mxu0 0.0
      %1179 = vmatprep.subr.mxu0 0.0
      %1180 = vmatpush1.msra.mxu0 0.0
      %1181 = vmatprep.subr.mxu0 0.0
      %1182 = vmatpush1.msra.mxu0 0.0
      %1183 = vmatprep.subr.mxu0 0.0
      %1184 = vmatpush1.msra.mxu0 0.0
      %1185 = vmatprep.subr.mxu0 0.0
      %1186 = vmatpush1.msra.mxu0 0.0
      %1187 = vmatprep.subr.mxu0 0.0
      %1188 = vmatpush1.msra.mxu0 0.0
      %1189 = vmatprep.subr.mxu0 0.0
      %1190 = vmatpush1.msra.mxu0 0.0
      %1191 = vmatprep.subr.mxu0 0.0
      %1192 = vmatpush1.msra.mxu0 0.0
      %1193 = vmatprep.subr.mxu0 0.0
      %1194 = vmatpush1.msra.mxu0 0.0
      %1195 = vmatprep.subr.mxu0 0.0
      %1196 = vmatpush1.msra.mxu0 0.0
      %1197 = vmatprep.subr.mxu0 0.0
      %1198 = vmatpush1.msra.mxu0 0.0
      %1199 = vmatprep.subr.mxu0 0.0
      %1200 = vmatpush1.msra.mxu0 0.0
      %1201 = vmatprep.subr.mxu0 0.0
      %1202 = vmatpush1.msra.mxu0 0.0
      %1203 = vmatprep.subr.mxu0 0.0
      %1204 = vmatpush1.msra.mxu0 0.0
      %1205 = vmatprep.subr.mxu0 0.0
      %1206 = vmatpush1.msra.mxu0 0.0
      %1207 = vmatprep.mubr.f32.mxu0 0.0
      %1208 = vmatmul.mubr.f32.gmra.mrb[0].mxu0 %v1141
      %v1209 = vpop.f32.mrb[0].mxu0
      %v1210 = vadd.f32 %v76, %v1209
      %v1211 = vpop.f32.mrb[0].mxu0
      %1212 = vdwg.mxu0
      %v1213 = vmul.f32 %v426, %v1210
      %v1214 = vadd.f32 %v902, %v1213
      %1216 = vset.pattern.permute.xlu0 0
      %1217 = vperm.xlu0 %1216, %v1214
      %v1218 = vpop.permute.xlu0 %1217
      %v1220 = vmul.f32 %v1218, %v1214
      %1221 = vset.pattern.permute.xlu0 1
      %1222 = vperm.xlu0 %1221, %v1214
      %v1223 = vpop.permute.xlu0 %1222
      %v1225 = vmul.f32 %v1223, %v1214
      %1226 = vset.pattern.permute.xlu0 2
      %1227 = vperm.xlu0 %1226, %v1214
      %v1228 = vpop.permute.xlu0 %1227
      %v1230 = vmul.f32 %v1228, %v1214
      %1231 = vset.pattern.permute.xlu0 3
      %1232 = vperm.xlu0 %1231, %v1214
      %v1233 = vpop.permute.xlu0 %1232
      %v1235 = vmul.f32 %v1233, %v1214
      %1236 = vset.pattern.permute.xlu0 4
      %1237 = vperm.xlu0 %1236, %v1214
      %v1238 = vpop.permute.xlu0 %1237
      %v1240 = vmul.f32 %v1238, %v1214
      %1241 = vset.pattern.permute.xlu0 5
      %1242 = vperm.xlu0 %1241, %v1214
      %v1243 = vpop.permute.xlu0 %1242
      %v1245 = vmul.f32 %v1243, %v1214
      %1246 = vset.pattern.permute.xlu0 6
      %1247 = vperm.xlu0 %1246, %v1214
      %v1248 = vpop.permute.xlu0 %1247
      %v1250 = vmul.f32 %v1248, %v1214
      %1251 = vset.pattern.permute.xlu0 7
      %1252 = vperm.xlu0 %1251, %v1214
      %v1253 = vpop.permute.xlu0 %1252
      %v1255 = vmul.f32 %v1253, %v1214
      %1257 = vrot.lane.b32.xlu0 %v1220, 8
      %v1258 = vpop.permute.xlu0 %1257
      %1261 = vrot.lane.b32.xlu0 %v1225, 16
      %v1262 = vpop.permute.xlu0 %1261
      %1265 = vrot.lane.b32.xlu0 %v1230, 24
      %v1266 = vpop.permute.xlu0 %1265
      %1269 = vrot.lane.b32.xlu0 %v1235, 32
      %v1270 = vpop.permute.xlu0 %1269
      %1273 = vrot.lane.b32.xlu0 %v1240, 40
      %v1274 = vpop.permute.xlu0 %1273
      %1277 = vrot.lane.b32.xlu0 %v1245, 48
      %v1278 = vpop.permute.xlu0 %1277
      %1281 = vrot.lane.b32.xlu0 %v1250, 56
      %v1282 = vpop.permute.xlu0 %1281
      %1285 = vrot.lane.b32.xlu0 %v1255, 64
      %v1286 = vpop.permute.xlu0 %1285
      %v1288 = vsel %vm337, %v1214, %v1258
      %v1289 = vsel %vm339, %v1288, %v1262
      %v1290 = vsel %vm341, %v1289, %v1266
      %v1291 = vsel %vm164, %v1290, %v1270
      %v1292 = vsel %vm344, %v1291, %v1274
      %v1293 = vsel %vm346, %v1292, %v1278
      %v1294 = vsel %vm348, %v1293, %v1282
      %v1295 = vsel %vm350, %v1294, %v1286
      %v1297 = vsel %vm352, %v1295, 0
      %1299 = vmatprep.subr.mxu0 0.0
      %1300 = vmatpush1.msra.mxu0 %v67
      %1301 = vmatprep.subr.mxu0 0.0
      %1302 = vmatpush1.msra.mxu0 %v68
      %1303 = vmatprep.subr.mxu0 0.0
      %1304 = vmatpush1.msra.mxu0 %v69
      %1305 = vmatprep.subr.mxu0 0.0
      %1306 = vmatpush1.msra.mxu0 %v70
      %1307 = vmatprep.subr.mxu0 0.0
      %1308 = vmatpush1.msra.mxu0 %v71
      %1309 = vmatprep.subr.mxu0 0.0
      %1310 = vmatpush1.msra.mxu0 %v72
      %1311 = vmatprep.subr.mxu0 0.0
      %1312 = vmatpush1.msra.mxu0 %v73
      %1313 = vmatprep.subr.mxu0 0.0
      %1314 = vmatpush1.msra.mxu0 %v74
      %1315 = vmatprep.subr.mxu0 0.0
      %1316 = vmatpush1.msra.mxu0 %v75
      %1317 = vmatprep.subr.mxu0 0.0
      %1318 = vmatpush1.msra.mxu0 0.0
      %1319 = vmatprep.subr.mxu0 0.0
      %1320 = vmatpush1.msra.mxu0 0.0
      %1321 = vmatprep.subr.mxu0 0.0
      %1322 = vmatpush1.msra.mxu0 0.0
      %1323 = vmatprep.subr.mxu0 0.0
      %1324 = vmatpush1.msra.mxu0 0.0
      %1325 = vmatprep.subr.mxu0 0.0
      %1326 = vmatpush1.msra.mxu0 0.0
      %1327 = vmatprep.subr.mxu0 0.0
      %1328 = vmatpush1.msra.mxu0 0.0
      %1329 = vmatprep.subr.mxu0 0.0
      %1330 = vmatpush1.msra.mxu0 0.0
      %1331 = vmatprep.subr.mxu0 0.0
      %1332 = vmatpush1.msra.mxu0 0.0
      %1333 = vmatprep.subr.mxu0 0.0
      %1334 = vmatpush1.msra.mxu0 0.0
      %1335 = vmatprep.subr.mxu0 0.0
      %1336 = vmatpush1.msra.mxu0 0.0
      %1337 = vmatprep.subr.mxu0 0.0
      %1338 = vmatpush1.msra.mxu0 0.0
      %1339 = vmatprep.subr.mxu0 0.0
      %1340 = vmatpush1.msra.mxu0 0.0
      %1341 = vmatprep.subr.mxu0 0.0
      %1342 = vmatpush1.msra.mxu0 0.0
      %1343 = vmatprep.subr.mxu0 0.0
      %1344 = vmatpush1.msra.mxu0 0.0
      %1345 = vmatprep.subr.mxu0 0.0
      %1346 = vmatpush1.msra.mxu0 0.0
      %1347 = vmatprep.subr.mxu0 0.0
      %1348 = vmatpush1.msra.mxu0 0.0
      %1349 = vmatprep.subr.mxu0 0.0
      %1350 = vmatpush1.msra.mxu0 0.0
      %1351 = vmatprep.subr.mxu0 0.0
      %1352 = vmatpush1.msra.mxu0 0.0
      %1353 = vmatprep.subr.mxu0 0.0
      %1354 = vmatpush1.msra.mxu0 0.0
      %1355 = vmatprep.subr.mxu0 0.0
      %1356 = vmatpush1.msra.mxu0 0.0
      %1357 = vmatprep.subr.mxu0 0.0
      %1358 = vmatpush1.msra.mxu0 0.0
      %1359 = vmatprep.subr.mxu0 0.0
      %1360 = vmatpush1.msra.mxu0 0.0
      %1361 = vmatprep.subr.mxu0 0.0
      %1362 = vmatpush1.msra.mxu0 0.0
      %1363 = vmatprep.mubr.f32.mxu0 0.0
      %1364 = vmatmul.mubr.f32.gmra.mrb[0].mxu0 %v1297
      %v1365 = vpop.f32.mrb[0].mxu0
      %v1366 = vadd.f32 %v76, %v1365
      %v1367 = vpop.f32.mrb[0].mxu0
      %1368 = vdwg.mxu0
      %v1369 = vmul.f32 %v739, %v1366
      %v1370 = vadd.f32 %v902, %v1369
      %1372 = vset.pattern.permute.xlu0 0
      %1373 = vperm.xlu0 %1372, %v1370
      %v1374 = vpop.permute.xlu0 %1373
      %v1376 = vmul.f32 %v1374, %v1370
      %1377 = vset.pattern.permute.xlu0 1
      %1378 = vperm.xlu0 %1377, %v1370
      %v1379 = vpop.permute.xlu0 %1378
      %v1381 = vmul.f32 %v1379, %v1370
      %1382 = vset.pattern.permute.xlu0 2
      %1383 = vperm.xlu0 %1382, %v1370
      %v1384 = vpop.permute.xlu0 %1383
      %v1386 = vmul.f32 %v1384, %v1370
      %1387 = vset.pattern.permute.xlu0 3
      %1388 = vperm.xlu0 %1387, %v1370
      %v1389 = vpop.permute.xlu0 %1388
      %v1391 = vmul.f32 %v1389, %v1370
      %1392 = vset.pattern.permute.xlu0 4
      %1393 = vperm.xlu0 %1392, %v1370
      %v1394 = vpop.permute.xlu0 %1393
      %v1396 = vmul.f32 %v1394, %v1370
      %1397 = vset.pattern.permute.xlu0 5
      %1398 = vperm.xlu0 %1397, %v1370
      %v1399 = vpop.permute.xlu0 %1398
      %v1401 = vmul.f32 %v1399, %v1370
      %1402 = vset.pattern.permute.xlu0 6
      %1403 = vperm.xlu0 %1402, %v1370
      %v1404 = vpop.permute.xlu0 %1403
      %v1406 = vmul.f32 %v1404, %v1370
      %1407 = vset.pattern.permute.xlu0 7
      %1408 = vperm.xlu0 %1407, %v1370
      %v1409 = vpop.permute.xlu0 %1408
      %v1411 = vmul.f32 %v1409, %v1370
      %1413 = vrot.lane.b32.xlu0 %v1376, 8
      %v1414 = vpop.permute.xlu0 %1413
      %1417 = vrot.lane.b32.xlu0 %v1381, 16
      %v1418 = vpop.permute.xlu0 %1417
      %1421 = vrot.lane.b32.xlu0 %v1386, 24
      %v1422 = vpop.permute.xlu0 %1421
      %1425 = vrot.lane.b32.xlu0 %v1391, 32
      %v1426 = vpop.permute.xlu0 %1425
      %1429 = vrot.lane.b32.xlu0 %v1396, 40
      %v1430 = vpop.permute.xlu0 %1429
      %1433 = vrot.lane.b32.xlu0 %v1401, 48
      %v1434 = vpop.permute.xlu0 %1433
      %1437 = vrot.lane.b32.xlu0 %v1406, 56
      %v1438 = vpop.permute.xlu0 %1437
      %1441 = vrot.lane.b32.xlu0 %v1411, 64
      %v1442 = vpop.permute.xlu0 %1441
      %v1444 = vsel %vm337, %v1370, %v1414
      %v1445 = vsel %vm339, %v1444, %v1418
      %v1446 = vsel %vm341, %v1445, %v1422
      %v1447 = vsel %vm164, %v1446, %v1426
      %v1448 = vsel %vm344, %v1447, %v1430
      %v1449 = vsel %vm346, %v1448, %v1434
      %v1450 = vsel %vm348, %v1449, %v1438
      %v1451 = vsel %vm350, %v1450, %v1442
      %v1453 = vsel %vm352, %v1451, 0
      %1455 = vmatprep.subr.mxu0 0.0
      %1456 = vmatpush1.msra.mxu0 %v67
      %1457 = vmatprep.subr.mxu0 0.0
      %1458 = vmatpush1.msra.mxu0 %v68
      %1459 = vmatprep.subr.mxu0 0.0
      %1460 = vmatpush1.msra.mxu0 %v69
      %1461 = vmatprep.subr.mxu0 0.0
      %1462 = vmatpush1.msra.mxu0 %v70
      %1463 = vmatprep.subr.mxu0 0.0
      %1464 = vmatpush1.msra.mxu0 %v71
      %1465 = vmatprep.subr.mxu0 0.0
      %1466 = vmatpush1.msra.mxu0 %v72
      %1467 = vmatprep.subr.mxu0 0.0
      %1468 = vmatpush1.msra.mxu0 %v73
      %1469 = vmatprep.subr.mxu0 0.0
      %1470 = vmatpush1.msra.mxu0 %v74
      %1471 = vmatprep.subr.mxu0 0.0
      %1472 = vmatpush1.msra.mxu0 %v75
      %1473 = vmatprep.subr.mxu0 0.0
      %1474 = vmatpush1.msra.mxu0 0.0
      %1475 = vmatprep.subr.mxu0 0.0
      %1476 = vmatpush1.msra.mxu0 0.0
      %1477 = vmatprep.subr.mxu0 0.0
      %1478 = vmatpush1.msra.mxu0 0.0
      %1479 = vmatprep.subr.mxu0 0.0
      %1480 = vmatpush1.msra.mxu0 0.0
      %1481 = vmatprep.subr.mxu0 0.0
      %1482 = vmatpush1.msra.mxu0 0.0
      %1483 = vmatprep.subr.mxu0 0.0
      %1484 = vmatpush1.msra.mxu0 0.0
      %1485 = vmatprep.subr.mxu0 0.0
      %1486 = vmatpush1.msra.mxu0 0.0
      %1487 = vmatprep.subr.mxu0 0.0
      %1488 = vmatpush1.msra.mxu0 0.0
      %1489 = vmatprep.subr.mxu0 0.0
      %1490 = vmatpush1.msra.mxu0 0.0
      %1491 = vmatprep.subr.mxu0 0.0
      %1492 = vmatpush1.msra.mxu0 0.0
      %1493 = vmatprep.subr.mxu0 0.0
      %1494 = vmatpush1.msra.mxu0 0.0
      %1495 = vmatprep.subr.mxu0 0.0
      %1496 = vmatpush1.msra.mxu0 0.0
      %1497 = vmatprep.subr.mxu0 0.0
      %1498 = vmatpush1.msra.mxu0 0.0
      %1499 = vmatprep.subr.mxu0 0.0
      %1500 = vmatpush1.msra.mxu0 0.0
      %1501 = vmatprep.subr.mxu0 0.0
      %1502 = vmatpush1.msra.mxu0 0.0
      %1503 = vmatprep.subr.mxu0 0.0
      %1504 = vmatpush1.msra.mxu0 0.0
      %1505 = vmatprep.subr.mxu0 0.0
      %1506 = vmatpush1.msra.mxu0 0.0
      %1507 = vmatprep.subr.mxu0 0.0
      %1508 = vmatpush1.msra.mxu0 0.0
      %1509 = vmatprep.subr.mxu0 0.0
      %1510 = vmatpush1.msra.mxu0 0.0
      %1511 = vmatprep.subr.mxu0 0.0
      %1512 = vmatpush1.msra.mxu0 0.0
      %1513 = vmatprep.subr.mxu0 0.0
      %1514 = vmatpush1.msra.mxu0 0.0
      %1515 = vmatprep.subr.mxu0 0.0
      %1516 = vmatpush1.msra.mxu0 0.0
      %1517 = vmatprep.subr.mxu0 0.0
      %1518 = vmatpush1.msra.mxu0 0.0
      %1519 = vmatprep.mubr.f32.mxu0 0.0
      %1520 = vmatmul.mubr.f32.gmra.mrb[0].mxu0 %v1453
      %v1521 = vpop.f32.mrb[0].mxu0
      %v1522 = vadd.f32 %v76, %v1521
      %v1523 = vpop.f32.mrb[0].mxu0
      %1524 = vdwg.mxu0
      %v1525 = vadd.f32 %v1210, %v1366
      %v1526 = vmul.f32 %v1525, 2.0
      %v1527 = vadd.f32 %v1054, %v1526
      %v1528 = vadd.f32 %v1527, %v1522
      %v1529 = vmul.f32 %v900, %v1528
      %v1530 = vadd.f32 %v902, %v1529
      %1532 = vset.pattern.permute.xlu0 0
      %1533 = vperm.xlu0 %1532, %v1530
      %v1534 = vpop.permute.xlu0 %1533
      %v1536 = vmul.f32 %v1534, %v1530
      %1537 = vset.pattern.permute.xlu0 1
      %1538 = vperm.xlu0 %1537, %v1530
      %v1539 = vpop.permute.xlu0 %1538
      %v1541 = vmul.f32 %v1539, %v1530
      %1542 = vset.pattern.permute.xlu0 2
      %1543 = vperm.xlu0 %1542, %v1530
      %v1544 = vpop.permute.xlu0 %1543
      %v1546 = vmul.f32 %v1544, %v1530
      %1547 = vset.pattern.permute.xlu0 3
      %1548 = vperm.xlu0 %1547, %v1530
      %v1549 = vpop.permute.xlu0 %1548
      %v1551 = vmul.f32 %v1549, %v1530
      %1552 = vset.pattern.permute.xlu0 4
      %1553 = vperm.xlu0 %1552, %v1530
      %v1554 = vpop.permute.xlu0 %1553
      %v1556 = vmul.f32 %v1554, %v1530
      %1557 = vset.pattern.permute.xlu0 5
      %1558 = vperm.xlu0 %1557, %v1530
      %v1559 = vpop.permute.xlu0 %1558
      %v1561 = vmul.f32 %v1559, %v1530
      %1562 = vset.pattern.permute.xlu0 6
      %1563 = vperm.xlu0 %1562, %v1530
      %v1564 = vpop.permute.xlu0 %1563
      %v1566 = vmul.f32 %v1564, %v1530
      %1567 = vset.pattern.permute.xlu0 7
      %1568 = vperm.xlu0 %1567, %v1530
      %v1569 = vpop.permute.xlu0 %1568
      %v1571 = vmul.f32 %v1569, %v1530
      %1573 = vrot.lane.b32.xlu0 %v1536, 8
      %v1574 = vpop.permute.xlu0 %1573
      %1577 = vrot.lane.b32.xlu0 %v1541, 16
      %v1578 = vpop.permute.xlu0 %1577
      %1581 = vrot.lane.b32.xlu0 %v1546, 24
      %v1582 = vpop.permute.xlu0 %1581
      %1585 = vrot.lane.b32.xlu0 %v1551, 32
      %v1586 = vpop.permute.xlu0 %1585
      %1589 = vrot.lane.b32.xlu0 %v1556, 40
      %v1590 = vpop.permute.xlu0 %1589
      %1593 = vrot.lane.b32.xlu0 %v1561, 48
      %v1594 = vpop.permute.xlu0 %1593
      %1597 = vrot.lane.b32.xlu0 %v1566, 56
      %v1598 = vpop.permute.xlu0 %1597
      %1601 = vrot.lane.b32.xlu0 %v1571, 64
      %v1602 = vpop.permute.xlu0 %1601
      %v1604 = vsel %vm337, %v1530, %v1574
      %v1605 = vsel %vm339, %v1604, %v1578
      %v1606 = vsel %vm341, %v1605, %v1582
      %v1607 = vsel %vm164, %v1606, %v1586
      %v1608 = vsel %vm344, %v1607, %v1590
      %v1609 = vsel %vm346, %v1608, %v1594
      %v1610 = vsel %vm348, %v1609, %v1598
      %v1611 = vsel %vm350, %v1610, %v1602
      %v1613 = vsel %vm352, %v1611, 0
      %1615 = vmatprep.subr.mxu0 0.0
      %1616 = vmatpush1.msra.mxu0 %v67
      %1617 = vmatprep.subr.mxu0 0.0
      %1618 = vmatpush1.msra.mxu0 %v68
      %1619 = vmatprep.subr.mxu0 0.0
      %1620 = vmatpush1.msra.mxu0 %v69
      %1621 = vmatprep.subr.mxu0 0.0
      %1622 = vmatpush1.msra.mxu0 %v70
      %1623 = vmatprep.subr.mxu0 0.0
      %1624 = vmatpush1.msra.mxu0 %v71
      %1625 = vmatprep.subr.mxu0 0.0
      %1626 = vmatpush1.msra.mxu0 %v72
      %1627 = vmatprep.subr.mxu0 0.0
      %1628 = vmatpush1.msra.mxu0 %v73
      %1629 = vmatprep.subr.mxu0 0.0
      %1630 = vmatpush1.msra.mxu0 %v74
      %1631 = vmatprep.subr.mxu0 0.0
      %1632 = vmatpush1.msra.mxu0 %v75
      %1633 = vmatprep.subr.mxu0 0.0
      %1634 = vmatpush1.msra.mxu0 0.0
      %1635 = vmatprep.subr.mxu0 0.0
      %1636 = vmatpush1.msra.mxu0 0.0
      %1637 = vmatprep.subr.mxu0 0.0
      %1638 = vmatpush1.msra.mxu0 0.0
      %1639 = vmatprep.subr.mxu0 0.0
      %1640 = vmatpush1.msra.mxu0 0.0
      %1641 = vmatprep.subr.mxu0 0.0
      %1642 = vmatpush1.msra.mxu0 0.0
      %1643 = vmatprep.subr.mxu0 0.0
      %1644 = vmatpush1.msra.mxu0 0.0
      %1645 = vmatprep.subr.mxu0 0.0
      %1646 = vmatpush1.msra.mxu0 0.0
      %1647 = vmatprep.subr.mxu0 0.0
      %1648 = vmatpush1.msra.mxu0 0.0
      %1649 = vmatprep.subr.mxu0 0.0
      %1650 = vmatpush1.msra.mxu0 0.0
      %1651 = vmatprep.subr.mxu0 0.0
      %1652 = vmatpush1.msra.mxu0 0.0
      %1653 = vmatprep.subr.mxu0 0.0
      %1654 = vmatpush1.msra.mxu0 0.0
      %1655 = vmatprep.subr.mxu0 0.0
      %1656 = vmatpush1.msra.mxu0 0.0
      %1657 = vmatprep.subr.mxu0 0.0
      %1658 = vmatpush1.msra.mxu0 0.0
      %1659 = vmatprep.subr.mxu0 0.0
      %1660 = vmatpush1.msra.mxu0 0.0
      %1661 = vmatprep.subr.mxu0 0.0
      %1662 = vmatpush1.msra.mxu0 0.0
      %1663 = vmatprep.subr.mxu0 0.0
      %1664 = vmatpush1.msra.mxu0 0.0
      %1665 = vmatprep.subr.mxu0 0.0
      %1666 = vmatpush1.msra.mxu0 0.0
      %1667 = vmatprep.subr.mxu0 0.0
      %1668 = vmatpush1.msra.mxu0 0.0
      %1669 = vmatprep.subr.mxu0 0.0
      %1670 = vmatpush1.msra.mxu0 0.0
      %1671 = vmatprep.subr.mxu0 0.0
      %1672 = vmatpush1.msra.mxu0 0.0
      %1673 = vmatprep.subr.mxu0 0.0
      %1674 = vmatpush1.msra.mxu0 0.0
      %1675 = vmatprep.subr.mxu0 0.0
      %1676 = vmatpush1.msra.mxu0 0.0
      %1677 = vmatprep.subr.mxu0 0.0
      %1678 = vmatpush1.msra.mxu0 0.0
      %1679 = vmatprep.mubr.f32.mxu0 0.0
      %1680 = vmatmul.mubr.f32.gmra.mrb[0].mxu0 %v1613
      %v1681 = vpop.f32.mrb[0].mxu0
      %v1682 = vadd.f32 %v76, %v1681
      %v1683 = vpop.f32.mrb[0].mxu0
      %1684 = vdwg.mxu0
      %v1685 = vmul.f32 %v426, %v1682
      %v1686 = vadd.f32 %v1530, %v1685
      %1688 = vset.pattern.permute.xlu0 0
      %1689 = vperm.xlu0 %1688, %v1686
      %v1690 = vpop.permute.xlu0 %1689
      %v1692 = vmul.f32 %v1690, %v1686
      %1693 = vset.pattern.permute.xlu0 1
      %1694 = vperm.xlu0 %1693, %v1686
      %v1695 = vpop.permute.xlu0 %1694
      %v1697 = vmul.f32 %v1695, %v1686
      %1698 = vset.pattern.permute.xlu0 2
      %1699 = vperm.xlu0 %1698, %v1686
      %v1700 = vpop.permute.xlu0 %1699
      %v1702 = vmul.f32 %v1700, %v1686
      %1703 = vset.pattern.permute.xlu0 3
      %1704 = vperm.xlu0 %1703, %v1686
      %v1705 = vpop.permute.xlu0 %1704
      %v1707 = vmul.f32 %v1705, %v1686
      %1708 = vset.pattern.permute.xlu0 4
      %1709 = vperm.xlu0 %1708, %v1686
      %v1710 = vpop.permute.xlu0 %1709
      %v1712 = vmul.f32 %v1710, %v1686
      %1713 = vset.pattern.permute.xlu0 5
      %1714 = vperm.xlu0 %1713, %v1686
      %v1715 = vpop.permute.xlu0 %1714
      %v1717 = vmul.f32 %v1715, %v1686
      %1718 = vset.pattern.permute.xlu0 6
      %1719 = vperm.xlu0 %1718, %v1686
      %v1720 = vpop.permute.xlu0 %1719
      %v1722 = vmul.f32 %v1720, %v1686
      %1723 = vset.pattern.permute.xlu0 7
      %1724 = vperm.xlu0 %1723, %v1686
      %v1725 = vpop.permute.xlu0 %1724
      %v1727 = vmul.f32 %v1725, %v1686
      %1729 = vrot.lane.b32.xlu0 %v1692, 8
      %v1730 = vpop.permute.xlu0 %1729
      %1733 = vrot.lane.b32.xlu0 %v1697, 16
      %v1734 = vpop.permute.xlu0 %1733
      %1737 = vrot.lane.b32.xlu0 %v1702, 24
      %v1738 = vpop.permute.xlu0 %1737
      %1741 = vrot.lane.b32.xlu0 %v1707, 32
      %v1742 = vpop.permute.xlu0 %1741
      %1745 = vrot.lane.b32.xlu0 %v1712, 40
      %v1746 = vpop.permute.xlu0 %1745
      %1749 = vrot.lane.b32.xlu0 %v1717, 48
      %v1750 = vpop.permute.xlu0 %1749
      %1753 = vrot.lane.b32.xlu0 %v1722, 56
      %v1754 = vpop.permute.xlu0 %1753
      %1757 = vrot.lane.b32.xlu0 %v1727, 64
      %v1758 = vpop.permute.xlu0 %1757
      %v1760 = vsel %vm337, %v1686, %v1730
      %v1761 = vsel %vm339, %v1760, %v1734
      %v1762 = vsel %vm341, %v1761, %v1738
      %v1763 = vsel %vm164, %v1762, %v1742
      %v1764 = vsel %vm344, %v1763, %v1746
      %v1765 = vsel %vm346, %v1764, %v1750
      %v1766 = vsel %vm348, %v1765, %v1754
      %v1767 = vsel %vm350, %v1766, %v1758
      %v1769 = vsel %vm352, %v1767, 0
      %1771 = vmatprep.subr.mxu0 0.0
      %1772 = vmatpush1.msra.mxu0 %v67
      %1773 = vmatprep.subr.mxu0 0.0
      %1774 = vmatpush1.msra.mxu0 %v68
      %1775 = vmatprep.subr.mxu0 0.0
      %1776 = vmatpush1.msra.mxu0 %v69
      %1777 = vmatprep.subr.mxu0 0.0
      %1778 = vmatpush1.msra.mxu0 %v70
      %1779 = vmatprep.subr.mxu0 0.0
      %1780 = vmatpush1.msra.mxu0 %v71
      %1781 = vmatprep.subr.mxu0 0.0
      %1782 = vmatpush1.msra.mxu0 %v72
      %1783 = vmatprep.subr.mxu0 0.0
      %1784 = vmatpush1.msra.mxu0 %v73
      %1785 = vmatprep.subr.mxu0 0.0
      %1786 = vmatpush1.msra.mxu0 %v74
      %1787 = vmatprep.subr.mxu0 0.0
      %1788 = vmatpush1.msra.mxu0 %v75
      %1789 = vmatprep.subr.mxu0 0.0
      %1790 = vmatpush1.msra.mxu0 0.0
      %1791 = vmatprep.subr.mxu0 0.0
      %1792 = vmatpush1.msra.mxu0 0.0
      %1793 = vmatprep.subr.mxu0 0.0
      %1794 = vmatpush1.msra.mxu0 0.0
      %1795 = vmatprep.subr.mxu0 0.0
      %1796 = vmatpush1.msra.mxu0 0.0
      %1797 = vmatprep.subr.mxu0 0.0
      %1798 = vmatpush1.msra.mxu0 0.0
      %1799 = vmatprep.subr.mxu0 0.0
      %1800 = vmatpush1.msra.mxu0 0.0
      %1801 = vmatprep.subr.mxu0 0.0
      %1802 = vmatpush1.msra.mxu0 0.0
      %1803 = vmatprep.subr.mxu0 0.0
      %1804 = vmatpush1.msra.mxu0 0.0
      %1805 = vmatprep.subr.mxu0 0.0
      %1806 = vmatpush1.msra.mxu0 0.0
      %1807 = vmatprep.subr.mxu0 0.0
      %1808 = vmatpush1.msra.mxu0 0.0
      %1809 = vmatprep.subr.mxu0 0.0
      %1810 = vmatpush1.msra.mxu0 0.0
      %1811 = vmatprep.subr.mxu0 0.0
      %1812 = vmatpush1.msra.mxu0 0.0
      %1813 = vmatprep.subr.mxu0 0.0
      %1814 = vmatpush1.msra.mxu0 0.0
      %1815 = vmatprep.subr.mxu0 0.0
      %1816 = vmatpush1.msra.mxu0 0.0
      %1817 = vmatprep.subr.mxu0 0.0
      %1818 = vmatpush1.msra.mxu0 0.0
      %1819 = vmatprep.subr.mxu0 0.0
      %1820 = vmatpush1.msra.mxu0 0.0
      %1821 = vmatprep.subr.mxu0 0.0
      %1822 = vmatpush1.msra.mxu0 0.0
      %1823 = vmatprep.subr.mxu0 0.0
      %1824 = vmatpush1.msra.mxu0 0.0
      %1825 = vmatprep.subr.mxu0 0.0
      %1826 = vmatpush1.msra.mxu0 0.0
      %1827 = vmatprep.subr.mxu0 0.0
      %1828 = vmatpush1.msra.mxu0 0.0
      %1829 = vmatprep.subr.mxu0 0.0
      %1830 = vmatpush1.msra.mxu0 0.0
      %1831 = vmatprep.subr.mxu0 0.0
      %1832 = vmatpush1.msra.mxu0 0.0
      %1833 = vmatprep.subr.mxu0 0.0
      %1834 = vmatpush1.msra.mxu0 0.0
      %1835 = vmatprep.mubr.f32.mxu0 0.0
      %1836 = vmatmul.mubr.f32.gmra.mrb[0].mxu0 %v1769
      %v1837 = vpop.f32.mrb[0].mxu0
      %v1838 = vadd.f32 %v76, %v1837
      %v1839 = vpop.f32.mrb[0].mxu0
      %1840 = vdwg.mxu0
      %v1841 = vmul.f32 %v426, %v1838
      %v1842 = vadd.f32 %v1530, %v1841
      %1844 = vset.pattern.permute.xlu0 0
      %1845 = vperm.xlu0 %1844, %v1842
      %v1846 = vpop.permute.xlu0 %1845
      %v1848 = vmul.f32 %v1846, %v1842
      %1849 = vset.pattern.permute.xlu0 1
      %1850 = vperm.xlu0 %1849, %v1842
      %v1851 = vpop.permute.xlu0 %1850
      %v1853 = vmul.f32 %v1851, %v1842
      %1854 = vset.pattern.permute.xlu0 2
      %1855 = vperm.xlu0 %1854, %v1842
      %v1856 = vpop.permute.xlu0 %1855
      %v1858 = vmul.f32 %v1856, %v1842
      %1859 = vset.pattern.permute.xlu0 3
      %1860 = vperm.xlu0 %1859, %v1842
      %v1861 = vpop.permute.xlu0 %1860
      %v1863 = vmul.f32 %v1861, %v1842
      %1864 = vset.pattern.permute.xlu0 4
      %1865 = vperm.xlu0 %1864, %v1842
      %v1866 = vpop.permute.xlu0 %1865
      %v1868 = vmul.f32 %v1866, %v1842
      %1869 = vset.pattern.permute.xlu0 5
      %1870 = vperm.xlu0 %1869, %v1842
      %v1871 = vpop.permute.xlu0 %1870
      %v1873 = vmul.f32 %v1871, %v1842
      %1874 = vset.pattern.permute.xlu0 6
      %1875 = vperm.xlu0 %1874, %v1842
      %v1876 = vpop.permute.xlu0 %1875
      %v1878 = vmul.f32 %v1876, %v1842
      %1879 = vset.pattern.permute.xlu0 7
      %1880 = vperm.xlu0 %1879, %v1842
      %v1881 = vpop.permute.xlu0 %1880
      %v1883 = vmul.f32 %v1881, %v1842
      %1885 = vrot.lane.b32.xlu0 %v1848, 8
      %v1886 = vpop.permute.xlu0 %1885
      %1889 = vrot.lane.b32.xlu0 %v1853, 16
      %v1890 = vpop.permute.xlu0 %1889
      %1893 = vrot.lane.b32.xlu0 %v1858, 24
      %v1894 = vpop.permute.xlu0 %1893
      %1897 = vrot.lane.b32.xlu0 %v1863, 32
      %v1898 = vpop.permute.xlu0 %1897
      %1901 = vrot.lane.b32.xlu0 %v1868, 40
      %v1902 = vpop.permute.xlu0 %1901
      %1905 = vrot.lane.b32.xlu0 %v1873, 48
      %v1906 = vpop.permute.xlu0 %1905
      %1909 = vrot.lane.b32.xlu0 %v1878, 56
      %v1910 = vpop.permute.xlu0 %1909
      %1913 = vrot.lane.b32.xlu0 %v1883, 64
      %v1914 = vpop.permute.xlu0 %1913
      %v1916 = vsel %vm337, %v1842, %v1886
      %v1917 = vsel %vm339, %v1916, %v1890
      %v1918 = vsel %vm341, %v1917, %v1894
      %v1919 = vsel %vm164, %v1918, %v1898
      %v1920 = vsel %vm344, %v1919, %v1902
      %v1921 = vsel %vm346, %v1920, %v1906
      %v1922 = vsel %vm348, %v1921, %v1910
      %v1923 = vsel %vm350, %v1922, %v1914
      %v1925 = vsel %vm352, %v1923, 0
      %1927 = vmatprep.subr.mxu0 0.0
      %1928 = vmatpush1.msra.mxu0 %v67
      %1929 = vmatprep.subr.mxu0 0.0
      %1930 = vmatpush1.msra.mxu0 %v68
      %1931 = vmatprep.subr.mxu0 0.0
      %1932 = vmatpush1.msra.mxu0 %v69
      %1933 = vmatprep.subr.mxu0 0.0
      %1934 = vmatpush1.msra.mxu0 %v70
      %1935 = vmatprep.subr.mxu0 0.0
      %1936 = vmatpush1.msra.mxu0 %v71
      %1937 = vmatprep.subr.mxu0 0.0
      %1938 = vmatpush1.msra.mxu0 %v72
      %1939 = vmatprep.subr.mxu0 0.0
      %1940 = vmatpush1.msra.mxu0 %v73
      %1941 = vmatprep.subr.mxu0 0.0
      %1942 = vmatpush1.msra.mxu0 %v74
      %1943 = vmatprep.subr.mxu0 0.0
      %1944 = vmatpush1.msra.mxu0 %v75
      %1945 = vmatprep.subr.mxu0 0.0
      %1946 = vmatpush1.msra.mxu0 0.0
      %1947 = vmatprep.subr.mxu0 0.0
      %1948 = vmatpush1.msra.mxu0 0.0
      %1949 = vmatprep.subr.mxu0 0.0
      %1950 = vmatpush1.msra.mxu0 0.0
      %1951 = vmatprep.subr.mxu0 0.0
      %1952 = vmatpush1.msra.mxu0 0.0
      %1953 = vmatprep.subr.mxu0 0.0
      %1954 = vmatpush1.msra.mxu0 0.0
      %1955 = vmatprep.subr.mxu0 0.0
      %1956 = vmatpush1.msra.mxu0 0.0
      %1957 = vmatprep.subr.mxu0 0.0
      %1958 = vmatpush1.msra.mxu0 0.0
      %1959 = vmatprep.subr.mxu0 0.0
      %1960 = vmatpush1.msra.mxu0 0.0
      %1961 = vmatprep.subr.mxu0 0.0
      %1962 = vmatpush1.msra.mxu0 0.0
      %1963 = vmatprep.subr.mxu0 0.0
      %1964 = vmatpush1.msra.mxu0 0.0
      %1965 = vmatprep.subr.mxu0 0.0
      %1966 = vmatpush1.msra.mxu0 0.0
      %1967 = vmatprep.subr.mxu0 0.0
      %1968 = vmatpush1.msra.mxu0 0.0
      %1969 = vmatprep.subr.mxu0 0.0
      %1970 = vmatpush1.msra.mxu0 0.0
      %1971 = vmatprep.subr.mxu0 0.0
      %1972 = vmatpush1.msra.mxu0 0.0
      %1973 = vmatprep.subr.mxu0 0.0
      %1974 = vmatpush1.msra.mxu0 0.0
      %1975 = vmatprep.subr.mxu0 0.0
      %1976 = vmatpush1.msra.mxu0 0.0
      %1977 = vmatprep.subr.mxu0 0.0
      %1978 = vmatpush1.msra.mxu0 0.0
      %1979 = vmatprep.subr.mxu0 0.0
      %1980 = vmatpush1.msra.mxu0 0.0
      %1981 = vmatprep.subr.mxu0 0.0
      %1982 = vmatpush1.msra.mxu0 0.0
      %1983 = vmatprep.subr.mxu0 0.0
      %1984 = vmatpush1.msra.mxu0 0.0
      %1985 = vmatprep.subr.mxu0 0.0
      %1986 = vmatpush1.msra.mxu0 0.0
      %1987 = vmatprep.subr.mxu0 0.0
      %1988 = vmatpush1.msra.mxu0 0.0
      %1989 = vmatprep.subr.mxu0 0.0
      %1990 = vmatpush1.msra.mxu0 0.0
      %1991 = vmatprep.mubr.f32.mxu0 0.0
      %1992 = vmatmul.mubr.f32.gmra.mrb[0].mxu0 %v1925
      %v1993 = vpop.f32.mrb[0].mxu0
      %v1994 = vadd.f32 %v76, %v1993
      %v1995 = vpop.f32.mrb[0].mxu0
      %1996 = vdwg.mxu0
      %v1997 = vmul.f32 %v739, %v1994
      %v1998 = vadd.f32 %v1530, %v1997
      %2000 = vset.pattern.permute.xlu0 0
      %2001 = vperm.xlu0 %2000, %v1998
      %v2002 = vpop.permute.xlu0 %2001
      %v2004 = vmul.f32 %v2002, %v1998
      %2005 = vset.pattern.permute.xlu0 1
      %2006 = vperm.xlu0 %2005, %v1998
      %v2007 = vpop.permute.xlu0 %2006
      %v2009 = vmul.f32 %v2007, %v1998
      %2010 = vset.pattern.permute.xlu0 2
      %2011 = vperm.xlu0 %2010, %v1998
      %v2012 = vpop.permute.xlu0 %2011
      %v2014 = vmul.f32 %v2012, %v1998
      %2015 = vset.pattern.permute.xlu0 3
      %2016 = vperm.xlu0 %2015, %v1998
      %v2017 = vpop.permute.xlu0 %2016
      %v2019 = vmul.f32 %v2017, %v1998
      %2020 = vset.pattern.permute.xlu0 4
      %2021 = vperm.xlu0 %2020, %v1998
      %v2022 = vpop.permute.xlu0 %2021
      %v2024 = vmul.f32 %v2022, %v1998
      %2025 = vset.pattern.permute.xlu0 5
      %2026 = vperm.xlu0 %2025, %v1998
      %v2027 = vpop.permute.xlu0 %2026
      %v2029 = vmul.f32 %v2027, %v1998
      %2030 = vset.pattern.permute.xlu0 6
      %2031 = vperm.xlu0 %2030, %v1998
      %v2032 = vpop.permute.xlu0 %2031
      %v2034 = vmul.f32 %v2032, %v1998
      %2035 = vset.pattern.permute.xlu0 7
      %2036 = vperm.xlu0 %2035, %v1998
      %v2037 = vpop.permute.xlu0 %2036
      %v2039 = vmul.f32 %v2037, %v1998
      %2041 = vrot.lane.b32.xlu0 %v2004, 8
      %v2042 = vpop.permute.xlu0 %2041
      %2045 = vrot.lane.b32.xlu0 %v2009, 16
      %v2046 = vpop.permute.xlu0 %2045
      %2049 = vrot.lane.b32.xlu0 %v2014, 24
      %v2050 = vpop.permute.xlu0 %2049
      %2053 = vrot.lane.b32.xlu0 %v2019, 32
      %v2054 = vpop.permute.xlu0 %2053
      %2057 = vrot.lane.b32.xlu0 %v2024, 40
      %v2058 = vpop.permute.xlu0 %2057
      %2061 = vrot.lane.b32.xlu0 %v2029, 48
      %v2062 = vpop.permute.xlu0 %2061
      %2065 = vrot.lane.b32.xlu0 %v2034, 56
      %v2066 = vpop.permute.xlu0 %2065
      %2069 = vrot.lane.b32.xlu0 %v2039, 64
      %v2070 = vpop.permute.xlu0 %2069
      %v2072 = vsel %vm337, %v1998, %v2042
      %v2073 = vsel %vm339, %v2072, %v2046
      %v2074 = vsel %vm341, %v2073, %v2050
      %v2075 = vsel %vm164, %v2074, %v2054
      %v2076 = vsel %vm344, %v2075, %v2058
      %v2077 = vsel %vm346, %v2076, %v2062
      %v2078 = vsel %vm348, %v2077, %v2066
      %v2079 = vsel %vm350, %v2078, %v2070
      %v2081 = vsel %vm352, %v2079, 0
      %2083 = vmatprep.subr.mxu0 0.0
      %2084 = vmatpush1.msra.mxu0 %v67
      %2085 = vmatprep.subr.mxu0 0.0
      %2086 = vmatpush1.msra.mxu0 %v68
      %2087 = vmatprep.subr.mxu0 0.0
      %2088 = vmatpush1.msra.mxu0 %v69
      %2089 = vmatprep.subr.mxu0 0.0
      %2090 = vmatpush1.msra.mxu0 %v70
      %2091 = vmatprep.subr.mxu0 0.0
      %2092 = vmatpush1.msra.mxu0 %v71
      %2093 = vmatprep.subr.mxu0 0.0
      %2094 = vmatpush1.msra.mxu0 %v72
      %2095 = vmatprep.subr.mxu0 0.0
      %2096 = vmatpush1.msra.mxu0 %v73
      %2097 = vmatprep.subr.mxu0 0.0
      %2098 = vmatpush1.msra.mxu0 %v74
      %2099 = vmatprep.subr.mxu0 0.0
      %2100 = vmatpush1.msra.mxu0 %v75
      %2101 = vmatprep.subr.mxu0 0.0
      %2102 = vmatpush1.msra.mxu0 0.0
      %2103 = vmatprep.subr.mxu0 0.0
      %2104 = vmatpush1.msra.mxu0 0.0
      %2105 = vmatprep.subr.mxu0 0.0
      %2106 = vmatpush1.msra.mxu0 0.0
      %2107 = vmatprep.subr.mxu0 0.0
      %2108 = vmatpush1.msra.mxu0 0.0
      %2109 = vmatprep.subr.mxu0 0.0
      %2110 = vmatpush1.msra.mxu0 0.0
      %2111 = vmatprep.subr.mxu0 0.0
      %2112 = vmatpush1.msra.mxu0 0.0
      %2113 = vmatprep.subr.mxu0 0.0
      %2114 = vmatpush1.msra.mxu0 0.0
      %2115 = vmatprep.subr.mxu0 0.0
      %2116 = vmatpush1.msra.mxu0 0.0
      %2117 = vmatprep.subr.mxu0 0.0
      %2118 = vmatpush1.msra.mxu0 0.0
      %2119 = vmatprep.subr.mxu0 0.0
      %2120 = vmatpush1.msra.mxu0 0.0
      %2121 = vmatprep.subr.mxu0 0.0
      %2122 = vmatpush1.msra.mxu0 0.0
      %2123 = vmatprep.subr.mxu0 0.0
      %2124 = vmatpush1.msra.mxu0 0.0
      %2125 = vmatprep.subr.mxu0 0.0
      %2126 = vmatpush1.msra.mxu0 0.0
      %2127 = vmatprep.subr.mxu0 0.0
      %2128 = vmatpush1.msra.mxu0 0.0
      %2129 = vmatprep.subr.mxu0 0.0
      %2130 = vmatpush1.msra.mxu0 0.0
      %2131 = vmatprep.subr.mxu0 0.0
      %2132 = vmatpush1.msra.mxu0 0.0
      %2133 = vmatprep.subr.mxu0 0.0
      %2134 = vmatpush1.msra.mxu0 0.0
      %2135 = vmatprep.subr.mxu0 0.0
      %2136 = vmatpush1.msra.mxu0 0.0
      %2137 = vmatprep.subr.mxu0 0.0
      %2138 = vmatpush1.msra.mxu0 0.0
      %2139 = vmatprep.subr.mxu0 0.0
      %2140 = vmatpush1.msra.mxu0 0.0
      %2141 = vmatprep.subr.mxu0 0.0
      %2142 = vmatpush1.msra.mxu0 0.0
      %2143 = vmatprep.subr.mxu0 0.0
      %2144 = vmatpush1.msra.mxu0 0.0
      %2145 = vmatprep.subr.mxu0 0.0
      %2146 = vmatpush1.msra.mxu0 0.0
      %2147 = vmatprep.mubr.f32.mxu0 0.0
      %2148 = vmatmul.mubr.f32.gmra.mrb[0].mxu0 %v2081
      %v2149 = vpop.f32.mrb[0].mxu0
      %v2150 = vadd.f32 %v76, %v2149
      %v2151 = vpop.f32.mrb[0].mxu0
      %2152 = vdwg.mxu0
      %v2153 = vadd.f32 %v1838, %v1994
      %v2154 = vmul.f32 %v2153, 2.0
      %v2155 = vadd.f32 %v1682, %v2154
      %v2156 = vadd.f32 %v2155, %v2150
      %v2157 = vmul.f32 %v900, %v2156
      %v2158 = vadd.f32 %v1530, %v2157
      %2160 = vset.pattern.permute.xlu0 0
      %2161 = vperm.xlu0 %2160, %v2158
      %v2162 = vpop.permute.xlu0 %2161
      %v2164 = vmul.f32 %v2162, %v2158
      %2165 = vset.pattern.permute.xlu0 1
      %2166 = vperm.xlu0 %2165, %v2158
      %v2167 = vpop.permute.xlu0 %2166
      %v2169 = vmul.f32 %v2167, %v2158
      %2170 = vset.pattern.permute.xlu0 2
      %2171 = vperm.xlu0 %2170, %v2158
      %v2172 = vpop.permute.xlu0 %2171
      %v2174 = vmul.f32 %v2172, %v2158
      %2175 = vset.pattern.permute.xlu0 3
      %2176 = vperm.xlu0 %2175, %v2158
      %v2177 = vpop.permute.xlu0 %2176
      %v2179 = vmul.f32 %v2177, %v2158
      %2180 = vset.pattern.permute.xlu0 4
      %2181 = vperm.xlu0 %2180, %v2158
      %v2182 = vpop.permute.xlu0 %2181
      %v2184 = vmul.f32 %v2182, %v2158
      %2185 = vset.pattern.permute.xlu0 5
      %2186 = vperm.xlu0 %2185, %v2158
      %v2187 = vpop.permute.xlu0 %2186
      %v2189 = vmul.f32 %v2187, %v2158
      %2190 = vset.pattern.permute.xlu0 6
      %2191 = vperm.xlu0 %2190, %v2158
      %v2192 = vpop.permute.xlu0 %2191
      %v2194 = vmul.f32 %v2192, %v2158
      %2195 = vset.pattern.permute.xlu0 7
      %2196 = vperm.xlu0 %2195, %v2158
      %v2197 = vpop.permute.xlu0 %2196
      %v2199 = vmul.f32 %v2197, %v2158
      %2201 = vrot.lane.b32.xlu0 %v2164, 8
      %v2202 = vpop.permute.xlu0 %2201
      %2205 = vrot.lane.b32.xlu0 %v2169, 16
      %v2206 = vpop.permute.xlu0 %2205
      %2209 = vrot.lane.b32.xlu0 %v2174, 24
      %v2210 = vpop.permute.xlu0 %2209
      %2213 = vrot.lane.b32.xlu0 %v2179, 32
      %v2214 = vpop.permute.xlu0 %2213
      %2217 = vrot.lane.b32.xlu0 %v2184, 40
      %v2218 = vpop.permute.xlu0 %2217
      %2221 = vrot.lane.b32.xlu0 %v2189, 48
      %v2222 = vpop.permute.xlu0 %2221
      %2225 = vrot.lane.b32.xlu0 %v2194, 56
      %v2226 = vpop.permute.xlu0 %2225
      %2229 = vrot.lane.b32.xlu0 %v2199, 64
      %v2230 = vpop.permute.xlu0 %2229
      %v2232 = vsel %vm337, %v2158, %v2202
      %v2233 = vsel %vm339, %v2232, %v2206
      %v2234 = vsel %vm341, %v2233, %v2210
      %v2235 = vsel %vm164, %v2234, %v2214
      %v2236 = vsel %vm344, %v2235, %v2218
      %v2237 = vsel %vm346, %v2236, %v2222
      %v2238 = vsel %vm348, %v2237, %v2226
      %v2239 = vsel %vm350, %v2238, %v2230
      %v2241 = vsel %vm352, %v2239, 0
      %2243 = vmatprep.subr.mxu0 0.0
      %2244 = vmatpush1.msra.mxu0 %v67
      %2245 = vmatprep.subr.mxu0 0.0
      %2246 = vmatpush1.msra.mxu0 %v68
      %2247 = vmatprep.subr.mxu0 0.0
      %2248 = vmatpush1.msra.mxu0 %v69
      %2249 = vmatprep.subr.mxu0 0.0
      %2250 = vmatpush1.msra.mxu0 %v70
      %2251 = vmatprep.subr.mxu0 0.0
      %2252 = vmatpush1.msra.mxu0 %v71
      %2253 = vmatprep.subr.mxu0 0.0
      %2254 = vmatpush1.msra.mxu0 %v72
      %2255 = vmatprep.subr.mxu0 0.0
      %2256 = vmatpush1.msra.mxu0 %v73
      %2257 = vmatprep.subr.mxu0 0.0
      %2258 = vmatpush1.msra.mxu0 %v74
      %2259 = vmatprep.subr.mxu0 0.0
      %2260 = vmatpush1.msra.mxu0 %v75
      %2261 = vmatprep.subr.mxu0 0.0
      %2262 = vmatpush1.msra.mxu0 0.0
      %2263 = vmatprep.subr.mxu0 0.0
      %2264 = vmatpush1.msra.mxu0 0.0
      %2265 = vmatprep.subr.mxu0 0.0
      %2266 = vmatpush1.msra.mxu0 0.0
      %2267 = vmatprep.subr.mxu0 0.0
      %2268 = vmatpush1.msra.mxu0 0.0
      %2269 = vmatprep.subr.mxu0 0.0
      %2270 = vmatpush1.msra.mxu0 0.0
      %2271 = vmatprep.subr.mxu0 0.0
      %2272 = vmatpush1.msra.mxu0 0.0
      %2273 = vmatprep.subr.mxu0 0.0
      %2274 = vmatpush1.msra.mxu0 0.0
      %2275 = vmatprep.subr.mxu0 0.0
      %2276 = vmatpush1.msra.mxu0 0.0
      %2277 = vmatprep.subr.mxu0 0.0
      %2278 = vmatpush1.msra.mxu0 0.0
      %2279 = vmatprep.subr.mxu0 0.0
      %2280 = vmatpush1.msra.mxu0 0.0
      %2281 = vmatprep.subr.mxu0 0.0
      %2282 = vmatpush1.msra.mxu0 0.0
      %2283 = vmatprep.subr.mxu0 0.0
      %2284 = vmatpush1.msra.mxu0 0.0
      %2285 = vmatprep.subr.mxu0 0.0
      %2286 = vmatpush1.msra.mxu0 0.0
      %2287 = vmatprep.subr.mxu0 0.0
      %2288 = vmatpush1.msra.mxu0 0.0
      %2289 = vmatprep.subr.mxu0 0.0
      %2290 = vmatpush1.msra.mxu0 0.0
      %2291 = vmatprep.subr.mxu0 0.0
      %2292 = vmatpush1.msra.mxu0 0.0
      %2293 = vmatprep.subr.mxu0 0.0
      %2294 = vmatpush1.msra.mxu0 0.0
      %2295 = vmatprep.subr.mxu0 0.0
      %2296 = vmatpush1.msra.mxu0 0.0
      %2297 = vmatprep.subr.mxu0 0.0
      %2298 = vmatpush1.msra.mxu0 0.0
      %2299 = vmatprep.subr.mxu0 0.0
      %2300 = vmatpush1.msra.mxu0 0.0
      %2301 = vmatprep.subr.mxu0 0.0
      %2302 = vmatpush1.msra.mxu0 0.0
      %2303 = vmatprep.subr.mxu0 0.0
      %2304 = vmatpush1.msra.mxu0 0.0
      %2305 = vmatprep.subr.mxu0 0.0
      %2306 = vmatpush1.msra.mxu0 0.0
      %2307 = vmatprep.mubr.f32.mxu0 0.0
      %2308 = vmatmul.mubr.f32.gmra.mrb[0].mxu0 %v2241
      %v2309 = vpop.f32.mrb[0].mxu0
      %v2310 = vadd.f32 %v76, %v2309
      %v2311 = vpop.f32.mrb[0].mxu0
      %2312 = vdwg.mxu0
      %v2313 = vmul.f32 %v426, %v2310
      %v2314 = vadd.f32 %v2158, %v2313
      %2316 = vset.pattern.permute.xlu0 0
      %2317 = vperm.xlu0 %2316, %v2314
      %v2318 = vpop.permute.xlu0 %2317
      %v2320 = vmul.f32 %v2318, %v2314
      %2321 = vset.pattern.permute.xlu0 1
      %2322 = vperm.xlu0 %2321, %v2314
      %v2323 = vpop.permute.xlu0 %2322
      %v2325 = vmul.f32 %v2323, %v2314
      %2326 = vset.pattern.permute.xlu0 2
      %2327 = vperm.xlu0 %2326, %v2314
      %v2328 = vpop.permute.xlu0 %2327
      %v2330 = vmul.f32 %v2328, %v2314
      %2331 = vset.pattern.permute.xlu0 3
      %2332 = vperm.xlu0 %2331, %v2314
      %v2333 = vpop.permute.xlu0 %2332
      %v2335 = vmul.f32 %v2333, %v2314
      %2336 = vset.pattern.permute.xlu0 4
      %2337 = vperm.xlu0 %2336, %v2314
      %v2338 = vpop.permute.xlu0 %2337
      %v2340 = vmul.f32 %v2338, %v2314
      %2341 = vset.pattern.permute.xlu0 5
      %2342 = vperm.xlu0 %2341, %v2314
      %v2343 = vpop.permute.xlu0 %2342
      %v2345 = vmul.f32 %v2343, %v2314
      %2346 = vset.pattern.permute.xlu0 6
      %2347 = vperm.xlu0 %2346, %v2314
      %v2348 = vpop.permute.xlu0 %2347
      %v2350 = vmul.f32 %v2348, %v2314
      %2351 = vset.pattern.permute.xlu0 7
      %2352 = vperm.xlu0 %2351, %v2314
      %v2353 = vpop.permute.xlu0 %2352
      %v2355 = vmul.f32 %v2353, %v2314
      %2357 = vrot.lane.b32.xlu0 %v2320, 8
      %v2358 = vpop.permute.xlu0 %2357
      %2361 = vrot.lane.b32.xlu0 %v2325, 16
      %v2362 = vpop.permute.xlu0 %2361
      %2365 = vrot.lane.b32.xlu0 %v2330, 24
      %v2366 = vpop.permute.xlu0 %2365
      %2369 = vrot.lane.b32.xlu0 %v2335, 32
      %v2370 = vpop.permute.xlu0 %2369
      %2373 = vrot.lane.b32.xlu0 %v2340, 40
      %v2374 = vpop.permute.xlu0 %2373
      %2377 = vrot.lane.b32.xlu0 %v2345, 48
      %v2378 = vpop.permute.xlu0 %2377
      %2381 = vrot.lane.b32.xlu0 %v2350, 56
      %v2382 = vpop.permute.xlu0 %2381
      %2385 = vrot.lane.b32.xlu0 %v2355, 64
      %v2386 = vpop.permute.xlu0 %2385
      %v2388 = vsel %vm337, %v2314, %v2358
      %v2389 = vsel %vm339, %v2388, %v2362
      %v2390 = vsel %vm341, %v2389, %v2366
      %v2391 = vsel %vm164, %v2390, %v2370
      %v2392 = vsel %vm344, %v2391, %v2374
      %v2393 = vsel %vm346, %v2392, %v2378
      %v2394 = vsel %vm348, %v2393, %v2382
      %v2395 = vsel %vm350, %v2394, %v2386
      %v2397 = vsel %vm352, %v2395, 0
      %2399 = vmatprep.subr.mxu0 0.0
      %2400 = vmatpush1.msra.mxu0 %v67
      %2401 = vmatprep.subr.mxu0 0.0
      %2402 = vmatpush1.msra.mxu0 %v68
      %2403 = vmatprep.subr.mxu0 0.0
      %2404 = vmatpush1.msra.mxu0 %v69
      %2405 = vmatprep.subr.mxu0 0.0
      %2406 = vmatpush1.msra.mxu0 %v70
      %2407 = vmatprep.subr.mxu0 0.0
      %2408 = vmatpush1.msra.mxu0 %v71
      %2409 = vmatprep.subr.mxu0 0.0
      %2410 = vmatpush1.msra.mxu0 %v72
      %2411 = vmatprep.subr.mxu0 0.0
      %2412 = vmatpush1.msra.mxu0 %v73
      %2413 = vmatprep.subr.mxu0 0.0
      %2414 = vmatpush1.msra.mxu0 %v74
      %2415 = vmatprep.subr.mxu0 0.0
      %2416 = vmatpush1.msra.mxu0 %v75
      %2417 = vmatprep.subr.mxu0 0.0
      %2418 = vmatpush1.msra.mxu0 0.0
      %2419 = vmatprep.subr.mxu0 0.0
      %2420 = vmatpush1.msra.mxu0 0.0
      %2421 = vmatprep.subr.mxu0 0.0
      %2422 = vmatpush1.msra.mxu0 0.0
      %2423 = vmatprep.subr.mxu0 0.0
      %2424 = vmatpush1.msra.mxu0 0.0
      %2425 = vmatprep.subr.mxu0 0.0
      %2426 = vmatpush1.msra.mxu0 0.0
      %2427 = vmatprep.subr.mxu0 0.0
      %2428 = vmatpush1.msra.mxu0 0.0
      %2429 = vmatprep.subr.mxu0 0.0
      %2430 = vmatpush1.msra.mxu0 0.0
      %2431 = vmatprep.subr.mxu0 0.0
      %2432 = vmatpush1.msra.mxu0 0.0
      %2433 = vmatprep.subr.mxu0 0.0
      %2434 = vmatpush1.msra.mxu0 0.0
      %2435 = vmatprep.subr.mxu0 0.0
      %2436 = vmatpush1.msra.mxu0 0.0
      %2437 = vmatprep.subr.mxu0 0.0
      %2438 = vmatpush1.msra.mxu0 0.0
      %2439 = vmatprep.subr.mxu0 0.0
      %2440 = vmatpush1.msra.mxu0 0.0
      %2441 = vmatprep.subr.mxu0 0.0
      %2442 = vmatpush1.msra.mxu0 0.0
      %2443 = vmatprep.subr.mxu0 0.0
      %2444 = vmatpush1.msra.mxu0 0.0
      %2445 = vmatprep.subr.mxu0 0.0
      %2446 = vmatpush1.msra.mxu0 0.0
      %2447 = vmatprep.subr.mxu0 0.0
      %2448 = vmatpush1.msra.mxu0 0.0
      %2449 = vmatprep.subr.mxu0 0.0
      %2450 = vmatpush1.msra.mxu0 0.0
      %2451 = vmatprep.subr.mxu0 0.0
      %2452 = vmatpush1.msra.mxu0 0.0
      %2453 = vmatprep.subr.mxu0 0.0
      %2454 = vmatpush1.msra.mxu0 0.0
      %2455 = vmatprep.subr.mxu0 0.0
      %2456 = vmatpush1.msra.mxu0 0.0
      %2457 = vmatprep.subr.mxu0 0.0
      %2458 = vmatpush1.msra.mxu0 0.0
      %2459 = vmatprep.subr.mxu0 0.0
      %2460 = vmatpush1.msra.mxu0 0.0
      %2461 = vmatprep.subr.mxu0 0.0
      %2462 = vmatpush1.msra.mxu0 0.0
      %2463 = vmatprep.mubr.f32.mxu0 0.0
      %2464 = vmatmul.mubr.f32.gmra.mrb[0].mxu0 %v2397
      %v2465 = vpop.f32.mrb[0].mxu0
      %v2466 = vadd.f32 %v76, %v2465
      %v2467 = vpop.f32.mrb[0].mxu0
      %2468 = vdwg.mxu0
      %v2469 = vmul.f32 %v426, %v2466
      %v2470 = vadd.f32 %v2158, %v2469
      %2472 = vset.pattern.permute.xlu0 0
      %2473 = vperm.xlu0 %2472, %v2470
      %v2474 = vpop.permute.xlu0 %2473
      %v2476 = vmul.f32 %v2474, %v2470
      %2477 = vset.pattern.permute.xlu0 1
      %2478 = vperm.xlu0 %2477, %v2470
      %v2479 = vpop.permute.xlu0 %2478
      %v2481 = vmul.f32 %v2479, %v2470
      %2482 = vset.pattern.permute.xlu0 2
      %2483 = vperm.xlu0 %2482, %v2470
      %v2484 = vpop.permute.xlu0 %2483
      %v2486 = vmul.f32 %v2484, %v2470
      %2487 = vset.pattern.permute.xlu0 3
      %2488 = vperm.xlu0 %2487, %v2470
      %v2489 = vpop.permute.xlu0 %2488
      %v2491 = vmul.f32 %v2489, %v2470
      %2492 = vset.pattern.permute.xlu0 4
      %2493 = vperm.xlu0 %2492, %v2470
      %v2494 = vpop.permute.xlu0 %2493
      %v2496 = vmul.f32 %v2494, %v2470
      %2497 = vset.pattern.permute.xlu0 5
      %2498 = vperm.xlu0 %2497, %v2470
      %v2499 = vpop.permute.xlu0 %2498
      %v2501 = vmul.f32 %v2499, %v2470
      %2502 = vset.pattern.permute.xlu0 6
      %2503 = vperm.xlu0 %2502, %v2470
      %v2504 = vpop.permute.xlu0 %2503
      %v2506 = vmul.f32 %v2504, %v2470
      %2507 = vset.pattern.permute.xlu0 7
      %2508 = vperm.xlu0 %2507, %v2470
      %v2509 = vpop.permute.xlu0 %2508
      %v2511 = vmul.f32 %v2509, %v2470
      %2513 = vrot.lane.b32.xlu0 %v2476, 8
      %v2514 = vpop.permute.xlu0 %2513
      %2517 = vrot.lane.b32.xlu0 %v2481, 16
      %v2518 = vpop.permute.xlu0 %2517
      %2521 = vrot.lane.b32.xlu0 %v2486, 24
      %v2522 = vpop.permute.xlu0 %2521
      %2525 = vrot.lane.b32.xlu0 %v2491, 32
      %v2526 = vpop.permute.xlu0 %2525
      %2529 = vrot.lane.b32.xlu0 %v2496, 40
      %v2530 = vpop.permute.xlu0 %2529
      %2533 = vrot.lane.b32.xlu0 %v2501, 48
      %v2534 = vpop.permute.xlu0 %2533
      %2537 = vrot.lane.b32.xlu0 %v2506, 56
      %v2538 = vpop.permute.xlu0 %2537
      %2541 = vrot.lane.b32.xlu0 %v2511, 64
      %v2542 = vpop.permute.xlu0 %2541
      %v2544 = vsel %vm337, %v2470, %v2514
      %v2545 = vsel %vm339, %v2544, %v2518
      %v2546 = vsel %vm341, %v2545, %v2522
      %v2547 = vsel %vm164, %v2546, %v2526
      %v2548 = vsel %vm344, %v2547, %v2530
      %v2549 = vsel %vm346, %v2548, %v2534
      %v2550 = vsel %vm348, %v2549, %v2538
      %v2551 = vsel %vm350, %v2550, %v2542
      %v2553 = vsel %vm352, %v2551, 0
      %2555 = vmatprep.subr.mxu0 0.0
      %2556 = vmatpush1.msra.mxu0 %v67
      %2557 = vmatprep.subr.mxu0 0.0
      %2558 = vmatpush1.msra.mxu0 %v68
      %2559 = vmatprep.subr.mxu0 0.0
      %2560 = vmatpush1.msra.mxu0 %v69
      %2561 = vmatprep.subr.mxu0 0.0
      %2562 = vmatpush1.msra.mxu0 %v70
      %2563 = vmatprep.subr.mxu0 0.0
      %2564 = vmatpush1.msra.mxu0 %v71
      %2565 = vmatprep.subr.mxu0 0.0
      %2566 = vmatpush1.msra.mxu0 %v72
      %2567 = vmatprep.subr.mxu0 0.0
      %2568 = vmatpush1.msra.mxu0 %v73
      %2569 = vmatprep.subr.mxu0 0.0
      %2570 = vmatpush1.msra.mxu0 %v74
      %2571 = vmatprep.subr.mxu0 0.0
      %2572 = vmatpush1.msra.mxu0 %v75
      %2573 = vmatprep.subr.mxu0 0.0
      %2574 = vmatpush1.msra.mxu0 0.0
      %2575 = vmatprep.subr.mxu0 0.0
      %2576 = vmatpush1.msra.mxu0 0.0
      %2577 = vmatprep.subr.mxu0 0.0
      %2578 = vmatpush1.msra.mxu0 0.0
      %2579 = vmatprep.subr.mxu0 0.0
      %2580 = vmatpush1.msra.mxu0 0.0
      %2581 = vmatprep.subr.mxu0 0.0
      %2582 = vmatpush1.msra.mxu0 0.0
      %2583 = vmatprep.subr.mxu0 0.0
      %2584 = vmatpush1.msra.mxu0 0.0
      %2585 = vmatprep.subr.mxu0 0.0
      %2586 = vmatpush1.msra.mxu0 0.0
      %2587 = vmatprep.subr.mxu0 0.0
      %2588 = vmatpush1.msra.mxu0 0.0
      %2589 = vmatprep.subr.mxu0 0.0
      %2590 = vmatpush1.msra.mxu0 0.0
      %2591 = vmatprep.subr.mxu0 0.0
      %2592 = vmatpush1.msra.mxu0 0.0
      %2593 = vmatprep.subr.mxu0 0.0
      %2594 = vmatpush1.msra.mxu0 0.0
      %2595 = vmatprep.subr.mxu0 0.0
      %2596 = vmatpush1.msra.mxu0 0.0
      %2597 = vmatprep.subr.mxu0 0.0
      %2598 = vmatpush1.msra.mxu0 0.0
      %2599 = vmatprep.subr.mxu0 0.0
      %2600 = vmatpush1.msra.mxu0 0.0
      %2601 = vmatprep.subr.mxu0 0.0
      %2602 = vmatpush1.msra.mxu0 0.0
      %2603 = vmatprep.subr.mxu0 0.0
      %2604 = vmatpush1.msra.mxu0 0.0
      %2605 = vmatprep.subr.mxu0 0.0
      %2606 = vmatpush1.msra.mxu0 0.0
      %2607 = vmatprep.subr.mxu0 0.0
      %2608 = vmatpush1.msra.mxu0 0.0
      %2609 = vmatprep.subr.mxu0 0.0
      %2610 = vmatpush1.msra.mxu0 0.0
      %2611 = vmatprep.subr.mxu0 0.0
      %2612 = vmatpush1.msra.mxu0 0.0
      %2613 = vmatprep.subr.mxu0 0.0
      %2614 = vmatpush1.msra.mxu0 0.0
      %2615 = vmatprep.subr.mxu0 0.0
      %2616 = vmatpush1.msra.mxu0 0.0
      %2617 = vmatprep.subr.mxu0 0.0
      %2618 = vmatpush1.msra.mxu0 0.0
      %2619 = vmatprep.mubr.f32.mxu0 0.0
      %2620 = vmatmul.mubr.f32.gmra.mrb[0].mxu0 %v2553
      %v2621 = vpop.f32.mrb[0].mxu0
      %v2622 = vadd.f32 %v76, %v2621
      %v2623 = vpop.f32.mrb[0].mxu0
      %2624 = vdwg.mxu0
      %v2625 = vmul.f32 %v739, %v2622
      %v2626 = vadd.f32 %v2158, %v2625
      %2628 = vset.pattern.permute.xlu0 0
      %2629 = vperm.xlu0 %2628, %v2626
      %v2630 = vpop.permute.xlu0 %2629
      %v2632 = vmul.f32 %v2630, %v2626
      %2633 = vset.pattern.permute.xlu0 1
      %2634 = vperm.xlu0 %2633, %v2626
      %v2635 = vpop.permute.xlu0 %2634
      %v2637 = vmul.f32 %v2635, %v2626
      %2638 = vset.pattern.permute.xlu0 2
      %2639 = vperm.xlu0 %2638, %v2626
      %v2640 = vpop.permute.xlu0 %2639
      %v2642 = vmul.f32 %v2640, %v2626
      %2643 = vset.pattern.permute.xlu0 3
      %2644 = vperm.xlu0 %2643, %v2626
      %v2645 = vpop.permute.xlu0 %2644
      %v2647 = vmul.f32 %v2645, %v2626
      %2648 = vset.pattern.permute.xlu0 4
      %2649 = vperm.xlu0 %2648, %v2626
      %v2650 = vpop.permute.xlu0 %2649
      %v2652 = vmul.f32 %v2650, %v2626
      %2653 = vset.pattern.permute.xlu0 5
      %2654 = vperm.xlu0 %2653, %v2626
      %v2655 = vpop.permute.xlu0 %2654
      %v2657 = vmul.f32 %v2655, %v2626
      %2658 = vset.pattern.permute.xlu0 6
      %2659 = vperm.xlu0 %2658, %v2626
      %v2660 = vpop.permute.xlu0 %2659
      %v2662 = vmul.f32 %v2660, %v2626
      %2663 = vset.pattern.permute.xlu0 7
      %2664 = vperm.xlu0 %2663, %v2626
      %v2665 = vpop.permute.xlu0 %2664
      %v2667 = vmul.f32 %v2665, %v2626
      %2669 = vrot.lane.b32.xlu0 %v2632, 8
      %v2670 = vpop.permute.xlu0 %2669
      %2673 = vrot.lane.b32.xlu0 %v2637, 16
      %v2674 = vpop.permute.xlu0 %2673
      %2677 = vrot.lane.b32.xlu0 %v2642, 24
      %v2678 = vpop.permute.xlu0 %2677
      %2681 = vrot.lane.b32.xlu0 %v2647, 32
      %v2682 = vpop.permute.xlu0 %2681
      %2685 = vrot.lane.b32.xlu0 %v2652, 40
      %v2686 = vpop.permute.xlu0 %2685
      %2689 = vrot.lane.b32.xlu0 %v2657, 48
      %v2690 = vpop.permute.xlu0 %2689
      %2693 = vrot.lane.b32.xlu0 %v2662, 56
      %v2694 = vpop.permute.xlu0 %2693
      %2697 = vrot.lane.b32.xlu0 %v2667, 64
      %v2698 = vpop.permute.xlu0 %2697
      %v2700 = vsel %vm337, %v2626, %v2670
      %v2701 = vsel %vm339, %v2700, %v2674
      %v2702 = vsel %vm341, %v2701, %v2678
      %v2703 = vsel %vm164, %v2702, %v2682
      %v2704 = vsel %vm344, %v2703, %v2686
      %v2705 = vsel %vm346, %v2704, %v2690
      %v2706 = vsel %vm348, %v2705, %v2694
      %v2707 = vsel %vm350, %v2706, %v2698
      %v2709 = vsel %vm352, %v2707, 0
      %2711 = vmatprep.subr.mxu0 0.0
      %2712 = vmatpush1.msra.mxu0 %v67
      %2713 = vmatprep.subr.mxu0 0.0
      %2714 = vmatpush1.msra.mxu0 %v68
      %2715 = vmatprep.subr.mxu0 0.0
      %2716 = vmatpush1.msra.mxu0 %v69
      %2717 = vmatprep.subr.mxu0 0.0
      %2718 = vmatpush1.msra.mxu0 %v70
      %2719 = vmatprep.subr.mxu0 0.0
      %2720 = vmatpush1.msra.mxu0 %v71
      %2721 = vmatprep.subr.mxu0 0.0
      %2722 = vmatpush1.msra.mxu0 %v72
      %2723 = vmatprep.subr.mxu0 0.0
      %2724 = vmatpush1.msra.mxu0 %v73
      %2725 = vmatprep.subr.mxu0 0.0
      %2726 = vmatpush1.msra.mxu0 %v74
      %2727 = vmatprep.subr.mxu0 0.0
      %2728 = vmatpush1.msra.mxu0 %v75
      %2729 = vmatprep.subr.mxu0 0.0
      %2730 = vmatpush1.msra.mxu0 0.0
      %2731 = vmatprep.subr.mxu0 0.0
      %2732 = vmatpush1.msra.mxu0 0.0
      %2733 = vmatprep.subr.mxu0 0.0
      %2734 = vmatpush1.msra.mxu0 0.0
      %2735 = vmatprep.subr.mxu0 0.0
      %2736 = vmatpush1.msra.mxu0 0.0
      %2737 = vmatprep.subr.mxu0 0.0
      %2738 = vmatpush1.msra.mxu0 0.0
      %2739 = vmatprep.subr.mxu0 0.0
      %2740 = vmatpush1.msra.mxu0 0.0
      %2741 = vmatprep.subr.mxu0 0.0
      %2742 = vmatpush1.msra.mxu0 0.0
      %2743 = vmatprep.subr.mxu0 0.0
      %2744 = vmatpush1.msra.mxu0 0.0
      %2745 = vmatprep.subr.mxu0 0.0
      %2746 = vmatpush1.msra.mxu0 0.0
      %2747 = vmatprep.subr.mxu0 0.0
      %2748 = vmatpush1.msra.mxu0 0.0
      %2749 = vmatprep.subr.mxu0 0.0
      %2750 = vmatpush1.msra.mxu0 0.0
      %2751 = vmatprep.subr.mxu0 0.0
      %2752 = vmatpush1.msra.mxu0 0.0
      %2753 = vmatprep.subr.mxu0 0.0
      %2754 = vmatpush1.msra.mxu0 0.0
      %2755 = vmatprep.subr.mxu0 0.0
      %2756 = vmatpush1.msra.mxu0 0.0
      %2757 = vmatprep.subr.mxu0 0.0
      %2758 = vmatpush1.msra.mxu0 0.0
      %2759 = vmatprep.subr.mxu0 0.0
      %2760 = vmatpush1.msra.mxu0 0.0
      %2761 = vmatprep.subr.mxu0 0.0
      %2762 = vmatpush1.msra.mxu0 0.0
      %2763 = vmatprep.subr.mxu0 0.0
      %2764 = vmatpush1.msra.mxu0 0.0
      %2765 = vmatprep.subr.mxu0 0.0
      %2766 = vmatpush1.msra.mxu0 0.0
      %2767 = vmatprep.subr.mxu0 0.0
      %2768 = vmatpush1.msra.mxu0 0.0
      %2769 = vmatprep.subr.mxu0 0.0
      %2770 = vmatpush1.msra.mxu0 0.0
      %2771 = vmatprep.subr.mxu0 0.0
      %2772 = vmatpush1.msra.mxu0 0.0
      %2773 = vmatprep.subr.mxu0 0.0
      %2774 = vmatpush1.msra.mxu0 0.0
      %2775 = vmatprep.mubr.f32.mxu0 0.0
      %2776 = vmatmul.mubr.f32.gmra.mrb[0].mxu0 %v2709
      %v2777 = vpop.f32.mrb[0].mxu0
      %v2778 = vadd.f32 %v76, %v2777
      %v2779 = vpop.f32.mrb[0].mxu0
      %2780 = vdwg.mxu0
      %v2781 = vadd.f32 %v2466, %v2622
      %v2782 = vmul.f32 %v2781, 2.0
      %v2783 = vadd.f32 %v2310, %v2782
      %v2784 = vadd.f32 %v2783, %v2778
      %v2785 = vmul.f32 %v900, %v2784
      %v2786 = vadd.f32 %v2158, %v2785
      %v2787 = vstv %s246
      %vm2788 = vcmp.eq.s32.totalorder %v240, %v2787
      %v2789 = vlaneseq
      %v2790 = vshrl.u32 %v2789, 7
      %v2791 = vsub.s32 0, %v2790
      %v2792 = vrot.slane %v2786, %v2791
      %v2793 = vsel %vm2788, %v2792, %v252
    $region58: #{tpu_custom_call.1} parent=1 // loop_footer
      %s250 = sadd.s32 1, %s246
    $region59: #{tpu_custom_call.1} parent=1 // loop_footer_branch
      %245 = sbr.rel target = $region55
    $region60: #{tpu_custom_call.1} parent=1 // loop_exit
      _
    %vm2794 = vcmask 64512
    %2795 = vst.msk [vmem:[#allocation5] sm:$0xff] %vm2794, %v252
    %v2797 = vlaneseq
    %v2798 = vshrl.u32 %v2797, 7
    %v2799 = vsub.s32 0, %v2798
    %v2800 = vrot.slane %v78, %v2799
    %v2803 = vsel %vm2794, %v252, 0
    %2805 = vmatprep.subr.mxu0 0.0
    %2806 = vmatpush1.msra.mxu0 %v77
    %2807 = vmatprep.subr.mxu0 0.0
    %2808 = vmatpush1.msra.mxu0 0.0
    %2809 = vmatprep.subr.mxu0 0.0
    %2810 = vmatpush1.msra.mxu0 0.0
    %2811 = vmatprep.subr.mxu0 0.0
    %2812 = vmatpush1.msra.mxu0 0.0
    %2813 = vmatprep.subr.mxu0 0.0
    %2814 = vmatpush1.msra.mxu0 0.0
    %2815 = vmatprep.subr.mxu0 0.0
    %2816 = vmatpush1.msra.mxu0 0.0
    %2817 = vmatprep.subr.mxu0 0.0
    %2818 = vmatpush1.msra.mxu0 0.0
    %2819 = vmatprep.subr.mxu0 0.0
    %2820 = vmatpush1.msra.mxu0 0.0
    %2821 = vmatprep.subr.mxu0 0.0
    %2822 = vmatpush1.msra.mxu0 0.0
    %2823 = vmatprep.subr.mxu0 0.0
    %2824 = vmatpush1.msra.mxu0 0.0
    %2825 = vmatprep.subr.mxu0 0.0
    %2826 = vmatpush1.msra.mxu0 0.0
    %2827 = vmatprep.subr.mxu0 0.0
    %2828 = vmatpush1.msra.mxu0 0.0
    %2829 = vmatprep.subr.mxu0 0.0
    %2830 = vmatpush1.msra.mxu0 0.0
    %2831 = vmatprep.subr.mxu0 0.0
    %2832 = vmatpush1.msra.mxu0 0.0
    %2833 = vmatprep.subr.mxu0 0.0
    %2834 = vmatpush1.msra.mxu0 0.0
    %2835 = vmatprep.subr.mxu0 0.0
    %2836 = vmatpush1.msra.mxu0 0.0
    %2837 = vmatprep.subr.mxu0 0.0
    %2838 = vmatpush1.msra.mxu0 0.0
    %2839 = vmatprep.subr.mxu0 0.0
    %2840 = vmatpush1.msra.mxu0 0.0
    %2841 = vmatprep.subr.mxu0 0.0
    %2842 = vmatpush1.msra.mxu0 0.0
    %2843 = vmatprep.subr.mxu0 0.0
    %2844 = vmatpush1.msra.mxu0 0.0
    %2845 = vmatprep.subr.mxu0 0.0
    %2846 = vmatpush1.msra.mxu0 0.0
    %2847 = vmatprep.subr.mxu0 0.0
    %2848 = vmatpush1.msra.mxu0 0.0
    %2849 = vmatprep.subr.mxu0 0.0
    %2850 = vmatpush1.msra.mxu0 0.0
    %2851 = vmatprep.subr.mxu0 0.0
    %2852 = vmatpush1.msra.mxu0 0.0
    %2853 = vmatprep.subr.mxu0 0.0
    %2854 = vmatpush1.msra.mxu0 0.0
    %2855 = vmatprep.subr.mxu0 0.0
    %2856 = vmatpush1.msra.mxu0 0.0
    %2857 = vmatprep.subr.mxu0 0.0
    %2858 = vmatpush1.msra.mxu0 0.0
    %2859 = vmatprep.subr.mxu0 0.0
    %2860 = vmatpush1.msra.mxu0 0.0
    %2861 = vmatprep.subr.mxu0 0.0
    %2862 = vmatpush1.msra.mxu0 0.0
    %2863 = vmatprep.subr.mxu0 0.0
    %2864 = vmatpush1.msra.mxu0 0.0
    %2865 = vmatprep.subr.mxu0 0.0
    %2866 = vmatpush1.msra.mxu0 0.0
    %2867 = vmatprep.subr.mxu0 0.0
    %2868 = vmatpush1.msra.mxu0 0.0
    %2869 = vmatprep.mubr.f32.mxu0 0.0
    %2870 = vmatmul.mubr.f32.gmra.mrb[0].mxu0 %v2803
    %v2871 = vpop.f32.mrb[0].mxu0
    %v2872 = vadd.f32 %v2800, %v2871
    %v2873 = vpop.f32.mrb[0].mxu0
    %2874 = vdwg.mxu0
    %v2875 = vtanh.pop %v2872
    %v2877 = vlaneseq
    %v2878 = vshrl.u32 %v2877, 7
    %v2879 = vsub.s32 0, %v2878
    %v2880 = vrot.slane %v83, %v2879
    %v2883 = vsel %vm164, %v2875, 0
    %2885 = vmatprep.subr.mxu0 0.0
    %2886 = vmatpush1.msra.mxu0 %v79
    %2887 = vmatprep.subr.mxu0 0.0
    %2888 = vmatpush1.msra.mxu0 %v80
    %2889 = vmatprep.subr.mxu0 0.0
    %2890 = vmatpush1.msra.mxu0 %v81
    %2891 = vmatprep.subr.mxu0 0.0
    %2892 = vmatpush1.msra.mxu0 %v82
    %2893 = vmatprep.subr.mxu0 0.0
    %2894 = vmatpush1.msra.mxu0 0.0
    %2895 = vmatprep.subr.mxu0 0.0
    %2896 = vmatpush1.msra.mxu0 0.0
    %2897 = vmatprep.subr.mxu0 0.0
    %2898 = vmatpush1.msra.mxu0 0.0
    %2899 = vmatprep.subr.mxu0 0.0
    %2900 = vmatpush1.msra.mxu0 0.0
    %2901 = vmatprep.subr.mxu0 0.0
    %2902 = vmatpush1.msra.mxu0 0.0
    %2903 = vmatprep.subr.mxu0 0.0
    %2904 = vmatpush1.msra.mxu0 0.0
    %2905 = vmatprep.subr.mxu0 0.0
    %2906 = vmatpush1.msra.mxu0 0.0
    %2907 = vmatprep.subr.mxu0 0.0
    %2908 = vmatpush1.msra.mxu0 0.0
    %2909 = vmatprep.subr.mxu0 0.0
    %2910 = vmatpush1.msra.mxu0 0.0
    %2911 = vmatprep.subr.mxu0 0.0
    %2912 = vmatpush1.msra.mxu0 0.0
    %2913 = vmatprep.subr.mxu0 0.0
    %2914 = vmatpush1.msra.mxu0 0.0
    %2915 = vmatprep.subr.mxu0 0.0
    %2916 = vmatpush1.msra.mxu0 0.0
    %2917 = vmatprep.subr.mxu0 0.0
    %2918 = vmatpush1.msra.mxu0 0.0
    %2919 = vmatprep.subr.mxu0 0.0
    %2920 = vmatpush1.msra.mxu0 0.0
    %2921 = vmatprep.subr.mxu0 0.0
    %2922 = vmatpush1.msra.mxu0 0.0
    %2923 = vmatprep.subr.mxu0 0.0
    %2924 = vmatpush1.msra.mxu0 0.0
    %2925 = vmatprep.subr.mxu0 0.0
    %2926 = vmatpush1.msra.mxu0 0.0
    %2927 = vmatprep.subr.mxu0 0.0
    %2928 = vmatpush1.msra.mxu0 0.0
    %2929 = vmatprep.subr.mxu0 0.0
    %2930 = vmatpush1.msra.mxu0 0.0
    %2931 = vmatprep.subr.mxu0 0.0
    %2932 = vmatpush1.msra.mxu0 0.0
    %2933 = vmatprep.subr.mxu0 0.0
    %2934 = vmatpush1.msra.mxu0 0.0
    %2935 = vmatprep.subr.mxu0 0.0
    %2936 = vmatpush1.msra.mxu0 0.0
    %2937 = vmatprep.subr.mxu0 0.0
    %2938 = vmatpush1.msra.mxu0 0.0
    %2939 = vmatprep.subr.mxu0 0.0
    %2940 = vmatpush1.msra.mxu0 0.0
    %2941 = vmatprep.subr.mxu0 0.0
    %2942 = vmatpush1.msra.mxu0 0.0
    %2943 = vmatprep.subr.mxu0 0.0
    %2944 = vmatpush1.msra.mxu0 0.0
    %2945 = vmatprep.subr.mxu0 0.0
    %2946 = vmatpush1.msra.mxu0 0.0
    %2947 = vmatprep.subr.mxu0 0.0
    %2948 = vmatpush1.msra.mxu0 0.0
    %2949 = vmatprep.mubr.f32.mxu0 0.0
    %2950 = vmatmul.mubr.f32.gmra.mrb[0].mxu0 %v2883
    %v2951 = vpop.f32.mrb[0].mxu0
    %v2952 = vadd.f32 %v2880, %v2951
    %v2953 = vpop.f32.mrb[0].mxu0
    %2954 = vdwg.mxu0
    %vm2955 = vcmask 130048
    %2956 = vst.msk [vmem:[#allocation6] sm:$0xff] %vm2955, %v2952
    // Predicated region
    $region61: #{tpu_custom_call.1} parent=1 // pred_check
      _
    $region62: #{tpu_custom_call.1} parent=1 // pred_check_branch
      %2958 = sbr.rel (0) target = $region64
    $region63: #{tpu_custom_call.1} parent=1 // pred_region
      %s2960 = ssub.s32 128, 128
      %2961 = vsyncadd [#allocation3], %s2960
      %s2963 = sshll.u32 [#allocation5], 4
      %s2964 = int_to_ptr.vmem [resolvable:$true] %s2963
      %2966 = dma.vmem_to_hbm [thread:$0]  %s2964, 128, %s12, [#allocation3]
    $region64: #{tpu_custom_call.1} parent=1 // pred_fallthru
      _
    // Predicated region
    $region65: #{tpu_custom_call.1} parent=1 // pred_check
      _
    $region66: #{tpu_custom_call.1} parent=1 // pred_check_branch
      %2968 = sbr.rel (0) target = $region68
    $region67: #{tpu_custom_call.1} parent=1 // pred_region
      %s2970 = ssub.s32 128, 128
      %2971 = vsyncadd [#allocation7], %s2970
      %s2973 = sshll.u32 [#allocation6], 4
      %s2974 = int_to_ptr.vmem [resolvable:$true] %s2973
      %2976 = dma.vmem_to_hbm [thread:$0]  %s2974, 128, %s13, [#allocation7]
    $region68: #{tpu_custom_call.1} parent=1 // pred_fallthru
      _
    // Predicated region
    $region69: #{tpu_custom_call.1} parent=1 // pred_check
      _
    $region70: #{tpu_custom_call.1} parent=1 // pred_check_branch
      %2978 = sbr.rel (0) target = $region72
    $region71: #{tpu_custom_call.1} parent=1 // pred_region
      %2979 = dma.done [#allocation3], 128
    $region72: #{tpu_custom_call.1} parent=1 // pred_fallthru
      _
    // Predicated region
    $region73: #{tpu_custom_call.1} parent=1 // pred_check
      _
    $region74: #{tpu_custom_call.1} parent=1 // pred_check_branch
      %2981 = sbr.rel (0) target = $region76
    $region75: #{tpu_custom_call.1} parent=1 // pred_region
      %2982 = dma.done [#allocation7], 128
    $region76: #{tpu_custom_call.1} parent=1 // pred_fallthru
      _
    %2983 = vsyncpa [#allocation3], 1
    %2984 = vsyncpa [#allocation7], 1
    %2985 = vsyncpa [#allocation4], 1

</llo_original>
